<compile_context>
chip_gen: v7x
topology: tpu7x:2x2x1
jax: 0.10.0
libtpu: 0.0.40
codegen_flags: <defaults>
</compile_context>

<pallas_src>
import jax
import jax.numpy as jnp
import numpy as np
from jax.experimental import pallas as pl
from jax.experimental.pallas import tpu as pltpu

_LANE = 128  # lane width / class-axis padding


def _decoder_kernel(v_ref, g_ref, gt_ref, w1_ref, b1_ref, w2_ref, b2_ref,
                    w3_ref, b3_ref, out_ref):
    v = v_ref[...]  # [TB, fin] f32

    # Per-capsule squared norms via the block-diagonal grouping matmul.
    # sqrt + softmax of the reference are monotone and never output, so the
    # max over squared norms selects the same class as the reference argmax.
    norms_sq = jnp.dot(v * v, g_ref[...],
                       preferred_element_type=jnp.float32)          # [TB, 128]

    # Lane-dense one-hot of the winning class, expanded back to the flat
    # capsule axis on the MXU (no iota//cap_dim, no 1-D idx relayout).
    # Exact ties (measure-zero for float norms) keep all tied classes instead
    # of argmax's first; all-zero (padded) rows mask to zero either way.
    rowmax = jnp.max(norms_sq, axis=1, keepdims=True)
    onehot = jnp.where(norms_sq == rowmax, 1.0, 0.0)                 # [TB, 128]
    mask = jnp.dot(onehot, gt_ref[...],
                   preferred_element_type=jnp.float32)               # [TB, fin]
    vm = (v * mask).astype(jnp.bfloat16)

    # 3-layer MLP: bf16 operands on the MXU, f32 accumulation, f32 bias/act.
    h1 = jnp.maximum(
        jnp.dot(vm, w1_ref[...], preferred_element_type=jnp.float32)
        + b1_ref[...], 0.0)
    h2 = jnp.maximum(
        jnp.dot(h1.astype(jnp.bfloat16), w2_ref[...],
                preferred_element_type=jnp.float32) + b2_ref[...], 0.0)
    logits = jnp.dot(h2.astype(jnp.bfloat16), w3_ref[...],
                     preferred_element_type=jnp.float32) + b3_ref[...]
    out_ref[...] = jax.nn.sigmoid(logits).astype(out_ref.dtype)


def caps_decoder_forward(v, params, *, n_class, in_img_c, in_img_h, in_img_w,
                         cap_dim=16):
    """v: [B, n_class, cap_dim] -> reconstructed image [B, C, H, W] (NCHW)."""
    B = v.shape[0]
    fin = n_class * cap_dim
    fout = in_img_c * in_img_h * in_img_w
    w1, b1, w2, b2, w3, b3 = params

    # 128-lane-padded block-diagonal grouping matrix and its transpose:
    # g[j, c] = 1 iff flat feature j belongs to capsule c.  Keeps the per-class
    # norm result lane-dense and runs the one-hot -> flat-mask expansion on the
    # MXU instead of iota/compare relayout work.
    ncp = max(_LANE, ((n_class + _LANE - 1) // _LANE) * _LANE)
    g_np = np.zeros((fin, ncp), np.float32)
    g_np[np.arange(fin), np.arange(fin) // cap_dim] = 1.0
    g = jnp.asarray(g_np)
    gt = jnp.asarray(np.ascontiguousarray(g_np.T))

    # bf16 weight transport (kernel is weight-DMA bound); f32 accumulation in
    # the kernel via preferred_element_type. Biases stay f32 (tiny).
    w1b, w2b, w3b = (w.astype(jnp.bfloat16) for w in (w1, w2, w3))

    # Batch tiling: rows multiple of 8; >=2 grid steps whenever B > 8 so the
    # batch axis pipelines and (on v7x) shards across both TensorCores.
    if B >= 256:
        tb = 128
    else:
        tb = max(8, ((pl.cdiv(B, 2) + 7) // 8) * 8)
    b_pad = pl.cdiv(B, tb) * tb

    v_flat = v.reshape(B, fin).astype(jnp.float32)
    if b_pad != B:
        v_flat = jnp.pad(v_flat, ((0, b_pad - B), (0, 0)))

    grid = (b_pad // tb,)

    # NOTE: weights are ~1.75 MB in bf16, so default double-buffering of the
    # constant-index specs is comfortably within VMEM on all generations.
    # For scaled-up decoders (fout >~ 2K lanes / v7x 64 MiB VMEM), single-buffer
    # the weight specs (pipeline_mode=pl.Buffered(1)) and tile w3/out over fout.
    out_flat = pl.pallas_call(
        _decoder_kernel,
        out_shape=jax.ShapeDtypeStruct((b_pad, fout), jnp.float32),
        grid_spec=pltpu.PrefetchScalarGridSpec(
            num_scalar_prefetch=0,
            grid=grid,
            in_specs=[
                pl.BlockSpec((tb, fin), lambda i: (i, 0)),     # v (per-tile)
                pl.BlockSpec((fin, ncp), lambda i: (0, 0)),    # g
                pl.BlockSpec((ncp, fin), lambda i: (0, 0)),    # g^T
                pl.BlockSpec((fin, 512), lambda i: (0, 0)),    # w1 (bf16)
                pl.BlockSpec((1, 512), lambda i: (0, 0)),      # b1
                pl.BlockSpec((512, 1024), lambda i: (0, 0)),   # w2 (bf16)
                pl.BlockSpec((1, 1024), lambda i: (0, 0)),     # b2
                pl.BlockSpec((1024, fout), lambda i: (0, 0)),  # w3 (bf16)
                pl.BlockSpec((1, fout), lambda i: (0, 0)),     # b3
            ],
            out_specs=pl.BlockSpec((tb, fout), lambda i: (i, 0)),
        ),
        compiler_params=pltpu.CompilerParams(
            dimension_semantics=("parallel",)),
    )(v_flat, g, gt, w1b, b1, w2b, b2, w3b, b3)

    if b_pad != B:
        out_flat = out_flat[:B]
    return out_flat.reshape(B, in_img_c, in_img_h, in_img_w)


def init_params(key, n_class, in_img_c, in_img_h, in_img_w, cap_dim=16):
    """Deterministic PyTorch-Linear-style init. Weights stored as [in, out]."""
    fin = n_class * cap_dim
    fout = in_img_c * in_img_h * in_img_w
    dims = [(fin, 512), (512, 1024), (1024, fout)]
    params = []
    for i, (din, dout) in enumerate(dims):
        kw, kb = jax.random.split(jax.random.fold_in(key, i))
        bound = 1.0 / np.sqrt(din)
        w = jax.random.uniform(kw, (din, dout), jnp.float32, -bound, bound)
        b = jax.random.uniform(kb, (1, dout), jnp.float32, -bound, bound)
        params += [w, b]
    return tuple(params)


def _reference_forward(v, params, *, n_class, in_img_c, in_img_h, in_img_w,
                       cap_dim=16):
    """Pure-JAX (f32) replica of the PyTorch forward for validation."""
    w1, b1, w2, b2, w3, b3 = params
    B = v.shape[0]
    norms = jnp.linalg.norm(v, axis=-1)                      # [B, n_class]
    probs = jax.nn.softmax(norms, axis=1)
    idx = jnp.argmax(probs, axis=1)
    mask = jnp.eye(n_class, dtype=v.dtype)[idx]              # [B, n_class]
    vm = (v * mask[:, :, None]).reshape(B, -1)
    h1 = jax.nn.relu(vm @ w1 + b1)
    h2 = jax.nn.relu(h1 @ w2 + b2)
    out = jax.nn.sigmoid(h2 @ w3 + b3)
    return out.reshape(B, in_img_c, in_img_h, in_img_w)


if __name__ == "__main__":
    n_class, cap_dim = 10, 16
    in_img_c, in_img_h, in_img_w = 1, 16, 16
    B = 24  # exercises the 2-step parallel grid and the batch-padding path

    key = jax.random.PRNGKey(0)
    k_v, k_p = jax.random.split(key)
    v = jax.random.normal(k_v, (B, n_class, cap_dim), jnp.float32)
    params = init_params(k_p, n_class, in_img_c, in_img_h, in_img_w, cap_dim)

    out = caps_decoder_forward(v, params, n_class=n_class, in_img_c=in_img_c,
                               in_img_h=in_img_h, in_img_w=in_img_w,
                               cap_dim=cap_dim)
    out = jax.block_until_ready(out)

    ref = _reference_forward(v, params, n_class=n_class, in_img_c=in_img_c,
                             in_img_h=in_img_h, in_img_w=in_img_w,
                             cap_dim=cap_dim)
    # Tolerance loosened vs. f32 reference because weights/activations travel
    # through the MLP as bf16 (f32 accumulation); observed error is ~1e-3.
    np.testing.assert_allclose(np.asarray(out), np.asarray(ref),
                               rtol=1e-2, atol=1e-2)
    assert out.shape == (B, in_img_c, in_img_h, in_img_w)
    print("KERNEL_OK")
</pallas_src>

<mosaic_0001>
module attributes {stable_mosaic.version = 11 : i64} {
  func.func @_decoder_kernel(%arg0: i32, %arg1: memref<16x160xf32, #tpu.memory_space<vmem>>, %arg2: memref<160x128xf32, #tpu.memory_space<vmem>>, %arg3: memref<128x160xf32, #tpu.memory_space<vmem>>, %arg4: memref<160x512xbf16, #tpu.memory_space<vmem>>, %arg5: memref<1x512xf32, #tpu.memory_space<vmem>>, %arg6: memref<512x1024xbf16, #tpu.memory_space<vmem>>, %arg7: memref<1x1024xf32, #tpu.memory_space<vmem>>, %arg8: memref<1024x256xbf16, #tpu.memory_space<vmem>>, %arg9: memref<1x256xf32, #tpu.memory_space<vmem>>, %arg10: memref<16x256xf32, #tpu.memory_space<vmem>>) attributes {dimension_semantics = [#tpu.dimension_semantics<parallel>], iteration_bounds = array<i64: 2>, scalar_prefetch = 0 : i64, scratch_operands = 0 : i64, tpu.core_type = #tpu.core_type<tc>, window_params = [{transform_indices = @transform_0, window_bounds = array<i64: 16, 160>}, {pipeline_mode = #tpu.pipeline_mode<synchronous>, transform_indices = @transform_1, window_bounds = array<i64: 160, 128>}, {pipeline_mode = #tpu.pipeline_mode<synchronous>, transform_indices = @transform_2, window_bounds = array<i64: 128, 160>}, {pipeline_mode = #tpu.pipeline_mode<synchronous>, transform_indices = @transform_3, window_bounds = array<i64: 160, 512>}, {pipeline_mode = #tpu.pipeline_mode<synchronous>, transform_indices = @transform_4, window_bounds = array<i64: 1, 512>}, {pipeline_mode = #tpu.pipeline_mode<synchronous>, transform_indices = @transform_5, window_bounds = array<i64: 512, 1024>}, {pipeline_mode = #tpu.pipeline_mode<synchronous>, transform_indices = @transform_6, window_bounds = array<i64: 1, 1024>}, {pipeline_mode = #tpu.pipeline_mode<synchronous>, transform_indices = @transform_7, window_bounds = array<i64: 1024, 256>}, {pipeline_mode = #tpu.pipeline_mode<synchronous>, transform_indices = @transform_8, window_bounds = array<i64: 1, 256>}, {transform_indices = @transform_9, window_bounds = array<i64: 16, 256>}]} {
    %c0 = arith.constant 0 : index
    %c0_0 = arith.constant 0 : index
    %0 = vector.load %arg1[%c0, %c0_0] : memref<16x160xf32, #tpu.memory_space<vmem>>, vector<16x160xf32>
    %1 = arith.mulf %0, %0 : vector<16x160xf32>
    %c0_1 = arith.constant 0 : index
    %c0_2 = arith.constant 0 : index
    %2 = vector.load %arg2[%c0_1, %c0_2] : memref<160x128xf32, #tpu.memory_space<vmem>>, vector<160x128xf32>
    %cst = arith.constant dense<0.000000e+00> : vector<16x128xf32>
    %3 = tpu.matmul %1, %2, %cst {dimension_numbers = #tpu.dot_dimension_numbers<[1], [0], [0], [1], [0, 0, 1, 1], [], []>} : vector<16x160xf32>, vector<160x128xf32>, vector<16x128xf32> -> vector<16x128xf32>
    %cst_3 = arith.constant dense<0xFF800000> : vector<16xf32>
    %4 = vector.multi_reduction <maximumf>, %3, %cst_3 [1] : vector<16x128xf32> to vector<16xf32>
    %5 = vector.shape_cast %4 : vector<16xf32> to vector<16x1xf32>
    %6 = vector.broadcast %5 : vector<16x1xf32> to vector<16x128xf32>
    %7 = arith.cmpf oeq, %3, %6 : vector<16x128xf32>
    %cst_4 = arith.constant 1.000000e+00 : f32
    %cst_5 = arith.constant 0.000000e+00 : f32
    %8 = vector.broadcast %cst_4 : f32 to vector<16x128xf32>
    %9 = vector.broadcast %cst_5 : f32 to vector<16x128xf32>
    %10 = arith.select %7, %8, %9 : vector<16x128xi1>, vector<16x128xf32>
    %c0_6 = arith.constant 0 : index
    %c0_7 = arith.constant 0 : index
    %11 = vector.load %arg3[%c0_6, %c0_7] : memref<128x160xf32, #tpu.memory_space<vmem>>, vector<128x160xf32>
    %cst_8 = arith.constant dense<0.000000e+00> : vector<16x160xf32>
    %12 = tpu.matmul %10, %11, %cst_8 {dimension_numbers = #tpu.dot_dimension_numbers<[1], [0], [0], [1], [0, 0, 1, 1], [], []>} : vector<16x128xf32>, vector<128x160xf32>, vector<16x160xf32> -> vector<16x160xf32>
    %13 = arith.mulf %0, %12 : vector<16x160xf32>
    %14 = arith.truncf %13 : vector<16x160xf32> to vector<16x160xbf16>
    %c0_9 = arith.constant 0 : index
    %c0_10 = arith.constant 0 : index
    %15 = vector.load %arg4[%c0_9, %c0_10] : memref<160x512xbf16, #tpu.memory_space<vmem>>, vector<160x512xbf16>
    %cst_11 = arith.constant dense<0.000000e+00> : vector<16x512xf32>
    %16 = tpu.matmul %14, %15, %cst_11 {dimension_numbers = #tpu.dot_dimension_numbers<[1], [0], [0], [1], [0, 0, 1, 1], [], []>} : vector<16x160xbf16>, vector<160x512xbf16>, vector<16x512xf32> -> vector<16x512xf32>
    %c0_12 = arith.constant 0 : index
    %c0_13 = arith.constant 0 : index
    %17 = vector.load %arg5[%c0_12, %c0_13] : memref<1x512xf32, #tpu.memory_space<vmem>>, vector<1x512xf32>
    %18 = vector.broadcast %17 : vector<1x512xf32> to vector<16x512xf32>
    %19 = arith.addf %16, %18 : vector<16x512xf32>
    %cst_14 = arith.constant 0.000000e+00 : f32
    %20 = vector.broadcast %cst_14 : f32 to vector<16x512xf32>
    %21 = arith.maximumf %19, %20 : vector<16x512xf32>
    %22 = arith.truncf %21 : vector<16x512xf32> to vector<16x512xbf16>
    %c0_15 = arith.constant 0 : index
    %c0_16 = arith.constant 0 : index
    %23 = vector.load %arg6[%c0_15, %c0_16] : memref<512x1024xbf16, #tpu.memory_space<vmem>>, vector<512x1024xbf16>
    %cst_17 = arith.constant dense<0.000000e+00> : vector<16x1024xf32>
    %24 = tpu.matmul %22, %23, %cst_17 {dimension_numbers = #tpu.dot_dimension_numbers<[1], [0], [0], [1], [0, 0, 1, 1], [], []>} : vector<16x512xbf16>, vector<512x1024xbf16>, vector<16x1024xf32> -> vector<16x1024xf32>
    %c0_18 = arith.constant 0 : index
    %c0_19 = arith.constant 0 : index
    %25 = vector.load %arg7[%c0_18, %c0_19] : memref<1x1024xf32, #tpu.memory_space<vmem>>, vector<1x1024xf32>
    %26 = vector.broadcast %25 : vector<1x1024xf32> to vector<16x1024xf32>
    %27 = arith.addf %24, %26 : vector<16x1024xf32>
    %cst_20 = arith.constant 0.000000e+00 : f32
    %28 = vector.broadcast %cst_20 : f32 to vector<16x1024xf32>
    %29 = arith.maximumf %27, %28 : vector<16x1024xf32>
    %30 = arith.truncf %29 : vector<16x1024xf32> to vector<16x1024xbf16>
    %c0_21 = arith.constant 0 : index
    %c0_22 = arith.constant 0 : index
    %31 = vector.load %arg8[%c0_21, %c0_22] : memref<1024x256xbf16, #tpu.memory_space<vmem>>, vector<1024x256xbf16>
    %cst_23 = arith.constant dense<0.000000e+00> : vector<16x256xf32>
    %32 = tpu.matmul %30, %31, %cst_23 {dimension_numbers = #tpu.dot_dimension_numbers<[1], [0], [0], [1], [0, 0, 1, 1], [], []>} : vector<16x1024xbf16>, vector<1024x256xbf16>, vector<16x256xf32> -> vector<16x256xf32>
    %c0_24 = arith.constant 0 : index
    %c0_25 = arith.constant 0 : index
    %33 = vector.load %arg9[%c0_24, %c0_25] : memref<1x256xf32, #tpu.memory_space<vmem>>, vector<1x256xf32>
    %34 = vector.broadcast %33 : vector<1x256xf32> to vector<16x256xf32>
    %35 = arith.addf %32, %34 : vector<16x256xf32>
    %36 = arith.negf %35 : vector<16x256xf32>
    %37 = math.exp %36 : vector<16x256xf32>
    %cst_26 = arith.constant 1.000000e+00 : f32
    %38 = vector.broadcast %cst_26 : f32 to vector<16x256xf32>
    %39 = arith.addf %38, %37 : vector<16x256xf32>
    %40 = arith.divf %38, %39 : vector<16x256xf32>
    %c0_27 = arith.constant 0 : index
    %c0_28 = arith.constant 0 : index
    %41 = vector.load %arg10[%c0_27, %c0_28] : memref<16x256xf32, #tpu.memory_space<vmem>>, vector<16x256xf32>
    tpu.vector_store %arg10[%c0_27, %c0_28], %40 {strides = array<i32>} : memref<16x256xf32, #tpu.memory_space<vmem>>, vector<16x256xf32>,
    return
  }
  func.func @transform_0(%arg0: i32) -> (i32, i32) {
    %c0_i32 = arith.constant 0 : i32
    %c0_i32_0 = arith.constant 0 : i32
    return %arg0, %c0_i32 : i32, i32
  }
  func.func @transform_1(%arg0: i32) -> (i32, i32) {
    %c0_i32 = arith.constant 0 : i32
    %c0_i32_0 = arith.constant 0 : i32
    %c0_i32_1 = arith.constant 0 : i32
    return %c0_i32, %c0_i32_0 : i32, i32
  }
  func.func @transform_2(%arg0: i32) -> (i32, i32) {
    %c0_i32 = arith.constant 0 : i32
    %c0_i32_0 = arith.constant 0 : i32
    %c0_i32_1 = arith.constant 0 : i32
    return %c0_i32, %c0_i32_0 : i32, i32
  }
  func.func @transform_3(%arg0: i32) -> (i32, i32) {
    %c0_i32 = arith.constant 0 : i32
    %c0_i32_0 = arith.constant 0 : i32
    %c0_i32_1 = arith.constant 0 : i32
    return %c0_i32, %c0_i32_0 : i32, i32
  }
  func.func @transform_4(%arg0: i32) -> (i32, i32) {
    %c0_i32 = arith.constant 0 : i32
    %c0_i32_0 = arith.constant 0 : i32
    %c0_i32_1 = arith.constant 0 : i32
    return %c0_i32, %c0_i32_0 : i32, i32
  }
  func.func @transform_5(%arg0: i32) -> (i32, i32) {
    %c0_i32 = arith.constant 0 : i32
    %c0_i32_0 = arith.constant 0 : i32
    %c0_i32_1 = arith.constant 0 : i32
    return %c0_i32, %c0_i32_0 : i32, i32
  }
  func.func @transform_6(%arg0: i32) -> (i32, i32) {
    %c0_i32 = arith.constant 0 : i32
    %c0_i32_0 = arith.constant 0 : i32
    %c0_i32_1 = arith.constant 0 : i32
    return %c0_i32, %c0_i32_0 : i32, i32
  }
  func.func @transform_7(%arg0: i32) -> (i32, i32) {
    %c0_i32 = arith.constant 0 : i32
    %c0_i32_0 = arith.constant 0 : i32
    %c0_i32_1 = arith.constant 0 : i32
    return %c0_i32, %c0_i32_0 : i32, i32
  }
  func.func @transform_8(%arg0: i32) -> (i32, i32) {
    %c0_i32 = arith.constant 0 : i32
    %c0_i32_0 = arith.constant 0 : i32
    %c0_i32_1 = arith.constant 0 : i32
    return %c0_i32, %c0_i32_0 : i32, i32
  }
  func.func @transform_9(%arg0: i32) -> (i32, i32) {
    %c0_i32 = arith.constant 0 : i32
    %c0_i32_0 = arith.constant 0 : i32
    return %arg0, %c0_i32 : i32, i32
  }
}

</mosaic_0001>

<llo_original>
// kernel: tpu_custom_call.1
$region0: #{tpu_custom_call.1}
  #allocation0 [shape = 'u32[]', space=smem, size = 0x4, offset = 0x4, fixed_abs, tag = 'smem constant byte address 0x4 - core index']
  #allocation1 [shape = 'u32[144,128]{1,0:T(1,128)}', space=vmem, size = 0x12000, scoped, tag = 'internal scratch']
  %s0 = inlined_call_operand.vmem [shape: f32[32,160], index: 0, kind: input, shape index: {}]
  %s1 = inlined_call_operand.hbm [shape: f32[160,128], index: 1, kind: input, shape index: {}]
  %s2 = inlined_call_operand.vmem [shape: f32[128,160], index: 2, kind: input, shape index: {}]
  %s3 = inlined_call_operand.vmem [shape: bf16[160,512], index: 3, kind: input, shape index: {}]
  %s4 = inlined_call_operand.vmem [shape: f32[1,512], index: 4, kind: input, shape index: {}]
  %s5 = inlined_call_operand.hbm [shape: bf16[512,1024], index: 5, kind: input, shape index: {}]
  %s6 = inlined_call_operand.vmem [shape: f32[1,1024], index: 6, kind: input, shape index: {}]
  %s7 = inlined_call_operand.hbm [shape: bf16[1024,256], index: 7, kind: input, shape index: {}]
  %s8 = inlined_call_operand.vmem [shape: f32[1,256], index: 8, kind: input, shape index: {}]
  %s9 = inlined_call_operand.hbm [shape: f32[32,256], index: 9, kind: output, shape index: {}]
  %s10 = sld [smem:[#allocation0]]
  $region81: #{tpu_custom_call.1} parent=0
    _
  %s12 = ssub.s32 1, %s10
  %s13 = scalar_select 0, %s12, %s10
  $region1: #{tpu_custom_call.1} parent=0
    #allocation2 [shape = 'u8[81920]{0}', space=vmem, size = 0x14000, scoped, tag = 'input window, operand 1, single buffered']
    #allocation3 [shape = 's32[2]{0}', space=sflag, size = 0x8, scoped, tag = 'scoped memory for tpu_custom_call.1']
    #allocation4 [shape = 's32[2]{0}', space=sflag, size = 0x8, scoped, tag = 'scoped memory for tpu_custom_call.1']
    #allocation5 [shape = 'u8[1048576]{0}', space=vmem, size = 0x100000, scoped, tag = 'input window, operand 5, single buffered']
    #allocation6 [shape = 's32[1]{0}', space=sflag, size = 0x4, scoped, tag = 'scoped memory for tpu_custom_call.1']
    #allocation7 [shape = 'u8[524288]{0}', space=vmem, size = 0x80000, scoped, tag = 'input window, operand 7, single buffered']
    #allocation8 [shape = 'u8[32768]{0}', space=vmem, size = 0x8000, scoped, tag = 'output window, operand 0']
    %14 = vsyncpa [#allocation3], 0
    %15 = vsyncpa [#allocation6], 0
    %16 = vsyncpa [#allocation4], 0
    %s17 = scalar_lea.sflag [#allocation4], 1
    %18 = vsyncpa %s17, 0
    loop: start=0, step=1, limit=4
    $region2: #{tpu_custom_call.1} parent=1 // loop_pre_header
      _
    $region3: #{tpu_custom_call.1} parent=1 // loop_header
      %s20 = sphi 0, %s24
      %p21 = scmp.ge.s32.totalorder %s20, 4
      %s30 = sphi 0, %s32
      %s33 = sphi 0, %s30
      %s34 = sphi 0, %s33
      %s50 = sphi 0, %s34
      %s54 = sphi 0, %s54
      %s56 = sphi 0, %s54
      %s57 = sphi 0, %s56
      %s71 = sphi 0, %s57
      %s75 = sphi 0, %s75
      %s77 = sphi 0, %s75
      %s78 = sphi 0, %s77
      %s92 = sphi 0, %s78
      %s96 = sphi 0, %s96
      %s98 = sphi 0, %s96
      %s99 = sphi 0, %s98
      %s113 = sphi 0, %s99
      %s117 = sphi 0, %s117
      %s119 = sphi 0, %s117
      %s120 = sphi 0, %s119
      %s134 = sphi 0, %s120
      %s138 = sphi 0, %s138
      %s140 = sphi 0, %s138
      %s141 = sphi 0, %s140
      %s155 = sphi 0, %s141
      %s159 = sphi 0, %s159
      %s161 = sphi 0, %s159
      %s162 = sphi 0, %s161
      %s176 = sphi 0, %s162
      %s180 = sphi 0, %s180
      %s182 = sphi 0, %s180
      %s183 = sphi 0, %s182
      %s197 = sphi 0, %s183
      %s201 = sphi 0, %s201
      %s203 = sphi 0, %s201
      %s204 = sphi 0, %s203
      %s218 = sphi 0, %s204
      %s224 = sphi 0, %s226
      %s227 = sphi 0, %s224
      %s228 = sphi 0, %s227
      %s244 = sphi 0, %s228
    $region4: #{tpu_custom_call.1} parent=1 // loop_header_branch
      %23 = sbr.rel (%p21) target = $region8
    $region5: #{tpu_custom_call.1} parent=1 // loop_body
      %s25 = ssub.s32 %s20, 1
      %s26 = ssub.s32 %s20, 2
      %s27 = sadd.s32 %s20, 1
      %s28 = ssub.s32 %s20, %s27
      %p29 = scmp.eq.s32.totalorder %s28, 0
      %s31 = sadd.s32 %s30, 1
      %s32 = scalar_select %p29, %s30, %s31
      %p35 = pneg %p29
      %p36 = scmp.eq.s32.totalorder %s20, 1
      %p37 = por %p35, %p36
      %p38 = scmp.ne.s32.totalorder %s30, %s33
      %p39 = scmp.eq.s32.totalorder %s20, 0
      %p40 = por %p38, %p39
      %p41 = scmp.ne.s32.totalorder %s30, %s33
      %p42 = scmp.eq.s32.totalorder %s25, 1
      %p43 = por %p41, %p42
      %p44 = scmp.ne.s32.totalorder %s33, %s34
      %p45 = scmp.eq.s32.totalorder %s25, 0
      %p46 = por %p44, %p45
      %p47 = scmp.ne.s32.totalorder %s33, %s34
      %p48 = scmp.eq.s32.totalorder %s26, 1
      %p49 = por %p47, %p48
      %p51 = scmp.ne.s32.totalorder %s34, %s50
      %p52 = scmp.eq.s32.totalorder %s26, 0
      %p53 = por %p51, %p52
      %s55 = sadd.s32 %s54, 1
      %p58 = scmp.eq.s32.totalorder %s20, 1
      %p59 = scmp.ne.s32.totalorder %s54, %s56
      %p60 = scmp.eq.s32.totalorder %s20, 0
      %p61 = por %p59, %p60
      %p62 = scmp.ne.s32.totalorder %s54, %s56
      %p63 = scmp.eq.s32.totalorder %s25, 1
      %p64 = por %p62, %p63
      %p65 = scmp.ne.s32.totalorder %s56, %s57
      %p66 = scmp.eq.s32.totalorder %s25, 0
      %p67 = por %p65, %p66
      %p68 = scmp.ne.s32.totalorder %s56, %s57
      %p69 = scmp.eq.s32.totalorder %s26, 1
      %p70 = por %p68, %p69
      %p72 = scmp.ne.s32.totalorder %s57, %s71
      %p73 = scmp.eq.s32.totalorder %s26, 0
      %p74 = por %p72, %p73
      %s76 = sadd.s32 %s75, 1
      %p79 = scmp.eq.s32.totalorder %s20, 1
      %p80 = scmp.ne.s32.totalorder %s75, %s77
      %p81 = scmp.eq.s32.totalorder %s20, 0
      %p82 = por %p80, %p81
      %p83 = scmp.ne.s32.totalorder %s75, %s77
      %p84 = scmp.eq.s32.totalorder %s25, 1
      %p85 = por %p83, %p84
      %p86 = scmp.ne.s32.totalorder %s77, %s78
      %p87 = scmp.eq.s32.totalorder %s25, 0
      %p88 = por %p86, %p87
      %p89 = scmp.ne.s32.totalorder %s77, %s78
      %p90 = scmp.eq.s32.totalorder %s26, 1
      %p91 = por %p89, %p90
      %p93 = scmp.ne.s32.totalorder %s78, %s92
      %p94 = scmp.eq.s32.totalorder %s26, 0
      %p95 = por %p93, %p94
      %s97 = sadd.s32 %s96, 1
      %p100 = scmp.eq.s32.totalorder %s20, 1
      %p101 = scmp.ne.s32.totalorder %s96, %s98
      %p102 = scmp.eq.s32.totalorder %s20, 0
      %p103 = por %p101, %p102
      %p104 = scmp.ne.s32.totalorder %s96, %s98
      %p105 = scmp.eq.s32.totalorder %s25, 1
      %p106 = por %p104, %p105
      %p107 = scmp.ne.s32.totalorder %s98, %s99
      %p108 = scmp.eq.s32.totalorder %s25, 0
      %p109 = por %p107, %p108
      %p110 = scmp.ne.s32.totalorder %s98, %s99
      %p111 = scmp.eq.s32.totalorder %s26, 1
      %p112 = por %p110, %p111
      %p114 = scmp.ne.s32.totalorder %s99, %s113
      %p115 = scmp.eq.s32.totalorder %s26, 0
      %p116 = por %p114, %p115
      %s118 = sadd.s32 %s117, 1
      %p121 = scmp.eq.s32.totalorder %s20, 1
      %p122 = scmp.ne.s32.totalorder %s117, %s119
      %p123 = scmp.eq.s32.totalorder %s20, 0
      %p124 = por %p122, %p123
      %p125 = scmp.ne.s32.totalorder %s117, %s119
      %p126 = scmp.eq.s32.totalorder %s25, 1
      %p127 = por %p125, %p126
      %p128 = scmp.ne.s32.totalorder %s119, %s120
      %p129 = scmp.eq.s32.totalorder %s25, 0
      %p130 = por %p128, %p129
      %p131 = scmp.ne.s32.totalorder %s119, %s120
      %p132 = scmp.eq.s32.totalorder %s26, 1
      %p133 = por %p131, %p132
      %p135 = scmp.ne.s32.totalorder %s120, %s134
      %p136 = scmp.eq.s32.totalorder %s26, 0
      %p137 = por %p135, %p136
      %s139 = sadd.s32 %s138, 1
      %p142 = scmp.eq.s32.totalorder %s20, 1
      %p143 = scmp.ne.s32.totalorder %s138, %s140
      %p144 = scmp.eq.s32.totalorder %s20, 0
      %p145 = por %p143, %p144
      %p146 = scmp.ne.s32.totalorder %s138, %s140
      %p147 = scmp.eq.s32.totalorder %s25, 1
      %p148 = por %p146, %p147
      %p149 = scmp.ne.s32.totalorder %s140, %s141
      %p150 = scmp.eq.s32.totalorder %s25, 0
      %p151 = por %p149, %p150
      %p152 = scmp.ne.s32.totalorder %s140, %s141
      %p153 = scmp.eq.s32.totalorder %s26, 1
      %p154 = por %p152, %p153
      %p156 = scmp.ne.s32.totalorder %s141, %s155
      %p157 = scmp.eq.s32.totalorder %s26, 0
      %p158 = por %p156, %p157
      %s160 = sadd.s32 %s159, 1
      %p163 = scmp.eq.s32.totalorder %s20, 1
      %p164 = scmp.ne.s32.totalorder %s159, %s161
      %p165 = scmp.eq.s32.totalorder %s20, 0
      %p166 = por %p164, %p165
      %p167 = scmp.ne.s32.totalorder %s159, %s161
      %p168 = scmp.eq.s32.totalorder %s25, 1
      %p169 = por %p167, %p168
      %p170 = scmp.ne.s32.totalorder %s161, %s162
      %p171 = scmp.eq.s32.totalorder %s25, 0
      %p172 = por %p170, %p171
      %p173 = scmp.ne.s32.totalorder %s161, %s162
      %p174 = scmp.eq.s32.totalorder %s26, 1
      %p175 = por %p173, %p174
      %p177 = scmp.ne.s32.totalorder %s162, %s176
      %p178 = scmp.eq.s32.totalorder %s26, 0
      %p179 = por %p177, %p178
      %s181 = sadd.s32 %s180, 1
      %p184 = scmp.eq.s32.totalorder %s20, 1
      %p185 = scmp.ne.s32.totalorder %s180, %s182
      %p186 = scmp.eq.s32.totalorder %s20, 0
      %p187 = por %p185, %p186
      %p188 = scmp.ne.s32.totalorder %s180, %s182
      %p189 = scmp.eq.s32.totalorder %s25, 1
      %p190 = por %p188, %p189
      %p191 = scmp.ne.s32.totalorder %s182, %s183
      %p192 = scmp.eq.s32.totalorder %s25, 0
      %p193 = por %p191, %p192
      %p194 = scmp.ne.s32.totalorder %s182, %s183
      %p195 = scmp.eq.s32.totalorder %s26, 1
      %p196 = por %p194, %p195
      %p198 = scmp.ne.s32.totalorder %s183, %s197
      %p199 = scmp.eq.s32.totalorder %s26, 0
      %p200 = por %p198, %p199
      %s202 = sadd.s32 %s201, 1
      %p205 = scmp.eq.s32.totalorder %s20, 1
      %p206 = scmp.ne.s32.totalorder %s201, %s203
      %p207 = scmp.eq.s32.totalorder %s20, 0
      %p208 = por %p206, %p207
      %p209 = scmp.ne.s32.totalorder %s201, %s203
      %p210 = scmp.eq.s32.totalorder %s25, 1
      %p211 = por %p209, %p210
      %p212 = scmp.ne.s32.totalorder %s203, %s204
      %p213 = scmp.eq.s32.totalorder %s25, 0
      %p214 = por %p212, %p213
      %p215 = scmp.ne.s32.totalorder %s203, %s204
      %p216 = scmp.eq.s32.totalorder %s26, 1
      %p217 = por %p215, %p216
      %p219 = scmp.ne.s32.totalorder %s204, %s218
      %p220 = scmp.eq.s32.totalorder %s26, 0
      %p221 = por %p219, %p220
      %s222 = ssub.s32 %s20, %s27
      %p223 = scmp.eq.s32.totalorder %s222, 0
      %s225 = sadd.s32 %s224, 1
      %s226 = scalar_select %p223, %s224, %s225
      %p229 = pneg %p223
      %p230 = scmp.eq.s32.totalorder %s20, 1
      %p231 = por %p229, %p230
      %p232 = scmp.ne.s32.totalorder %s224, %s227
      %p233 = scmp.eq.s32.totalorder %s20, 0
      %p234 = por %p232, %p233
      %p235 = scmp.ne.s32.totalorder %s224, %s227
      %p236 = scmp.eq.s32.totalorder %s25, 1
      %p237 = por %p235, %p236
      %p238 = scmp.ne.s32.totalorder %s227, %s228
      %p239 = scmp.eq.s32.totalorder %s25, 0
      %p240 = por %p238, %p239
      %p241 = scmp.ne.s32.totalorder %s227, %s228
      %p242 = scmp.eq.s32.totalorder %s26, 1
      %p243 = por %p241, %p242
      %p245 = scmp.ne.s32.totalorder %s228, %s244
      %p246 = scmp.eq.s32.totalorder %s26, 0
      %p247 = por %p245, %p246
      %p248 = scmp.le.s32.totalorder 1, %s20
      %p249 = scmp.lt.s32.totalorder %s20, 3
      %p250 = pnand %p248, %p249
      %p251 = pneg %p250
      // Predicated region
      $region9: #{tpu_custom_call.1} parent=5 // pred_check
        _
      $region10: #{tpu_custom_call.1} parent=5 // pred_check_branch
        %253 = sbr.rel (%p250) target = $region12
      $region11: #{tpu_custom_call.1} parent=5 // pred_region
        %s254 = ssub.s32 %s20, 1
        // Predicated region
        $region13: #{tpu_custom_call.1} parent=11 // pred_check
          %p255 = pneg %p67
        $region14: #{tpu_custom_call.1} parent=11 // pred_check_branch
          %257 = sbr.rel (%p255) target = $region16
        $region15: #{tpu_custom_call.1} parent=11 // pred_region
          %s259 = ssub.s32 2560, 2560
          %260 = vsyncadd [#allocation3], %s259
          %s261 = sshll.u32 [#allocation2], 4
          %s262 = int_to_ptr.vmem [resolvable:$true] %s261
          %267 = dma.hbm_to_vmem [thread:$0]  %s1, 2560, %s262, [#allocation3], 128, 128, 8
        $region16: #{tpu_custom_call.1} parent=11 // pred_fallthru
          _
        // Predicated region
        $region17: #{tpu_custom_call.1} parent=11 // pred_check
          %p268 = pneg %p88
        $region18: #{tpu_custom_call.1} parent=11 // pred_check_branch
          %270 = sbr.rel (%p268) target = $region20
        $region19: #{tpu_custom_call.1} parent=11 // pred_region
          _
        $region20: #{tpu_custom_call.1} parent=11 // pred_fallthru
          _
        // Predicated region
        $region21: #{tpu_custom_call.1} parent=11 // pred_check
          %p271 = pneg %p109
        $region22: #{tpu_custom_call.1} parent=11 // pred_check_branch
          %273 = sbr.rel (%p271) target = $region24
        $region23: #{tpu_custom_call.1} parent=11 // pred_region
          _
        $region24: #{tpu_custom_call.1} parent=11 // pred_fallthru
          _
        // Predicated region
        $region25: #{tpu_custom_call.1} parent=11 // pred_check
          %p274 = pneg %p130
        $region26: #{tpu_custom_call.1} parent=11 // pred_check_branch
          %276 = sbr.rel (%p274) target = $region28
        $region27: #{tpu_custom_call.1} parent=11 // pred_region
          _
        $region28: #{tpu_custom_call.1} parent=11 // pred_fallthru
          _
        // Predicated region
        $region29: #{tpu_custom_call.1} parent=11 // pred_check
          %p277 = pneg %p151
        $region30: #{tpu_custom_call.1} parent=11 // pred_check_branch
          %279 = sbr.rel (%p277) target = $region32
        $region31: #{tpu_custom_call.1} parent=11 // pred_region
          %s281 = ssub.s32 32768, 32768
          %282 = vsyncadd [#allocation6], %s281
          %s283 = sshll.u32 [#allocation5], 4
          %s284 = int_to_ptr.vmem [resolvable:$true] %s283
          %289 = dma.hbm_to_vmem [thread:$0]  %s5, 32768, %s284, [#allocation6], 512, 512, 32
        $region32: #{tpu_custom_call.1} parent=11 // pred_fallthru
          _
        // Predicated region
        $region33: #{tpu_custom_call.1} parent=11 // pred_check
          %p290 = pneg %p172
        $region34: #{tpu_custom_call.1} parent=11 // pred_check_branch
          %292 = sbr.rel (%p290) target = $region36
        $region35: #{tpu_custom_call.1} parent=11 // pred_region
          _
        $region36: #{tpu_custom_call.1} parent=11 // pred_fallthru
          _
        // Predicated region
        $region37: #{tpu_custom_call.1} parent=11 // pred_check
          %p293 = pneg %p193
        $region38: #{tpu_custom_call.1} parent=11 // pred_check_branch
          %295 = sbr.rel (%p293) target = $region40
        $region39: #{tpu_custom_call.1} parent=11 // pred_region
          %s297 = ssub.s32 16384, 16384
          %298 = vsyncadd [#allocation6], %s297
          %s299 = sshll.u32 [#allocation7], 4
          %s300 = int_to_ptr.vmem [resolvable:$true] %s299
          %305 = dma.hbm_to_vmem [thread:$0]  %s7, 16384, %s300, [#allocation6], 128, 128, 8
        $region40: #{tpu_custom_call.1} parent=11 // pred_fallthru
          _
        // Predicated region
        $region41: #{tpu_custom_call.1} parent=11 // pred_check
          %p306 = pneg %p214
        $region42: #{tpu_custom_call.1} parent=11 // pred_check_branch
          %308 = sbr.rel (%p306) target = $region44
        $region43: #{tpu_custom_call.1} parent=11 // pred_region
          _
        $region44: #{tpu_custom_call.1} parent=11 // pred_fallthru
          _
      $region12: #{tpu_custom_call.1} parent=5 // pred_fallthru
        _
      %p309 = scmp.lt.s32.totalorder %s20, 2
      // Predicated region
      $region45: #{tpu_custom_call.1} parent=5 // pred_check
        %p310 = pneg %p309
      $region46: #{tpu_custom_call.1} parent=5 // pred_check_branch
        %312 = sbr.rel (%p310) target = $region48
      $region47: #{tpu_custom_call.1} parent=5 // pred_region
        // Predicated region
        $region49: #{tpu_custom_call.1} parent=47 // pred_check
          %p313 = pneg %p40
        $region50: #{tpu_custom_call.1} parent=47 // pred_check_branch
          %315 = sbr.rel (%p313) target = $region52
        $region51: #{tpu_custom_call.1} parent=47 // pred_region
          %s316 = smul.u32 2, %s20
          %p317 = scmp.lt.s32.totalorder %s316, 3
          %s318 = scalar_select %p317, %s316, 3
          %s319 = smul.addr %s318, 2
          %s320 = smul.addr %s319, 8
          %s321 = scalar_lea.vmem %s0, %s320
          %s322 = smul.u32 2, %s20
        $region52: #{tpu_custom_call.1} parent=47 // pred_fallthru
          _
      $region48: #{tpu_custom_call.1} parent=5 // pred_fallthru
        _
      %p323 = scmp.le.s32.totalorder 1, %s20
      %p324 = scmp.lt.s32.totalorder %s20, 3
      %p325 = pnand %p323, %p324
      %p326 = pneg %p325
      // Predicated region
      $region53: #{tpu_custom_call.1} parent=5 // pred_check
        _
      $region54: #{tpu_custom_call.1} parent=5 // pred_check_branch
        %328 = sbr.rel (%p325) target = $region56
      $region55: #{tpu_custom_call.1} parent=5 // pred_region
        %s329 = ssub.s32 %s20, 1
        // Predicated region
        $region57: #{tpu_custom_call.1} parent=55 // pred_check
          %p330 = pneg %p67
        $region58: #{tpu_custom_call.1} parent=55 // pred_check_branch
          %332 = sbr.rel (%p330) target = $region60
        $region59: #{tpu_custom_call.1} parent=55 // pred_region
          %333 = dma.done [#allocation3], 2560
        $region60: #{tpu_custom_call.1} parent=55 // pred_fallthru
          _
        // Predicated region
        $region61: #{tpu_custom_call.1} parent=55 // pred_check
          %p334 = pneg %p151
        $region62: #{tpu_custom_call.1} parent=55 // pred_check_branch
          %336 = sbr.rel (%p334) target = $region64
        $region63: #{tpu_custom_call.1} parent=55 // pred_region
          %337 = dma.done [#allocation6], 32768
        $region64: #{tpu_custom_call.1} parent=55 // pred_fallthru
          _
        // Predicated region
        $region65: #{tpu_custom_call.1} parent=55 // pred_check
          %p338 = pneg %p193
        $region66: #{tpu_custom_call.1} parent=55 // pred_check_branch
          %340 = sbr.rel (%p338) target = $region68
        $region67: #{tpu_custom_call.1} parent=55 // pred_region
          %341 = dma.done [#allocation6], 16384
        $region68: #{tpu_custom_call.1} parent=55 // pred_fallthru
          _
        %s342 = smul.u32 2, %s25
        %p343 = scmp.lt.s32.totalorder %s342, 3
        %s344 = scalar_select %p343, %s342, 3
        %s345 = smul.addr %s344, 2
        %s346 = smul.addr %s345, 8
        %s347 = scalar_lea.vmem %s0, %s346
        %p348 = pneg %p46
        %p349 = pneg %p43
        %p350 = pneg %p67
        %p351 = pneg %p64
        %p352 = pneg %p88
        %p353 = pneg %p85
        %p354 = pneg %p109
        %p355 = pneg %p106
        %p356 = pneg %p130
        %p357 = pneg %p127
        %p358 = pneg %p151
        %p359 = pneg %p148
        %p360 = pneg %p172
        %p361 = pneg %p169
        %p362 = pneg %p193
        %p363 = pneg %p190
        %p364 = pneg %p214
        %p365 = pneg %p211
        %p366 = pneg %p240
        %p367 = pneg %p237
        %s368 = sand.u32 %s227, 1
        %s369 = scalar_lea.sflag [#allocation4], %s368
        %s370 = sand.u32 %s227, 1
        %s371 = smul.addr %s370, 32
        %s372 = scalar_lea.vmem [#allocation8], %s371
        %s373 = smul.u32 2, %s25
        %p374 = scmp.lt.s32.totalorder %s373, 3
        %s375 = scalar_select %p374, %s373, 3
        %s376 = smul.addr %s375, 2
        %s377 = smul.addr %s376, 8
        %s378 = scalar_lea.vmem %s0, %s377
        %s379 = smul.u32 2, %s25
        %s380 = smul.u32 2, %s25
        %v382 = vld [vmem:[%s378] sm:$0xff]
        %v383 = vld [vmem:[%s378 + $0x8] sm:$0xff]
        %v384 = vld [vmem:[%s378 + $0x10] sm:$0xff]
        %v385 = vld [vmem:[%s378 + $0x18] sm:$0xff]
        %v386 = vmul.f32 %v382, %v382
        %v387 = vmul.f32 %v383, %v383
        %v388 = vmul.f32 %v384, %v384
        %v389 = vmul.f32 %v385, %v385
        %v390 = vld [vmem:[#allocation2] sm:$0xff]
        %v391 = vld [vmem:[#allocation2 + $0x8] sm:$0xff]
        %v392 = vld [vmem:[#allocation2 + $0x10] sm:$0xff]
        %v393 = vld [vmem:[#allocation2 + $0x18] sm:$0xff]
        %v394 = vld [vmem:[#allocation2 + $0x20] sm:$0xff]
        %v395 = vld [vmem:[#allocation2 + $0x28] sm:$0xff]
        %v396 = vld [vmem:[#allocation2 + $0x30] sm:$0xff]
        %v397 = vld [vmem:[#allocation2 + $0x38] sm:$0xff]
        %v398 = vld [vmem:[#allocation2 + $0x40] sm:$0xff]
        %v399 = vld [vmem:[#allocation2 + $0x48] sm:$0xff]
        %v400 = vld [vmem:[#allocation2 + $0x50] sm:$0xff]
        %v401 = vld [vmem:[#allocation2 + $0x58] sm:$0xff]
        %v402 = vld [vmem:[#allocation2 + $0x60] sm:$0xff]
        %v403 = vld [vmem:[#allocation2 + $0x68] sm:$0xff]
        %v404 = vld [vmem:[#allocation2 + $0x70] sm:$0xff]
        %v405 = vld [vmem:[#allocation2 + $0x78] sm:$0xff]
        %v406 = vld [vmem:[#allocation2 + $0x80] sm:$0xff]
        %v407 = vld [vmem:[#allocation2 + $0x88] sm:$0xff]
        %v408 = vld [vmem:[#allocation2 + $0x90] sm:$0xff]
        %v409 = vld [vmem:[#allocation2 + $0x98] sm:$0xff]
        %vm410 = vcmask 261120
        %v412 = vsel %vm410, %v387, 0
        %v415 = vsel %vm410, %v389, 0
        %417 = vmatprep.subr.mxu0 0.0
        %418 = vmatpush1.msra.mxu0 %v390
        %419 = vmatprep.subr.mxu0 0.0
        %420 = vmatpush1.msra.mxu0 %v391
        %421 = vmatprep.subr.mxu0 0.0
        %422 = vmatpush1.msra.mxu0 %v392
        %423 = vmatprep.subr.mxu0 0.0
        %424 = vmatpush1.msra.mxu0 %v393
        %425 = vmatprep.subr.mxu0 0.0
        %426 = vmatpush1.msra.mxu0 %v394
        %427 = vmatprep.subr.mxu0 0.0
        %428 = vmatpush1.msra.mxu0 %v395
        %429 = vmatprep.subr.mxu0 0.0
        %430 = vmatpush1.msra.mxu0 %v396
        %431 = vmatprep.subr.mxu0 0.0
        %432 = vmatpush1.msra.mxu0 %v397
        %433 = vmatprep.subr.mxu0 0.0
        %434 = vmatpush1.msra.mxu0 %v398
        %435 = vmatprep.subr.mxu0 0.0
        %436 = vmatpush1.msra.mxu0 %v399
        %437 = vmatprep.subr.mxu0 0.0
        %438 = vmatpush1.msra.mxu0 %v400
        %439 = vmatprep.subr.mxu0 0.0
        %440 = vmatpush1.msra.mxu0 %v401
        %441 = vmatprep.subr.mxu0 0.0
        %442 = vmatpush1.msra.mxu0 %v402
        %443 = vmatprep.subr.mxu0 0.0
        %444 = vmatpush1.msra.mxu0 %v403
        %445 = vmatprep.subr.mxu0 0.0
        %446 = vmatpush1.msra.mxu0 %v404
        %447 = vmatprep.subr.mxu0 0.0
        %448 = vmatpush1.msra.mxu0 %v405
        %449 = vmatprep.subr.mxu0 0.0
        %450 = vmatpush1.msra.mxu0 %v406
        %451 = vmatprep.subr.mxu0 0.0
        %452 = vmatpush1.msra.mxu0 %v407
        %453 = vmatprep.subr.mxu0 0.0
        %454 = vmatpush1.msra.mxu0 %v408
        %455 = vmatprep.subr.mxu0 0.0
        %456 = vmatpush1.msra.mxu0 %v409
        %457 = vmatprep.subr.mxu0 0.0
        %458 = vmatpush1.msra.mxu0 0.0
        %459 = vmatprep.subr.mxu0 0.0
        %460 = vmatpush1.msra.mxu0 0.0
        %461 = vmatprep.subr.mxu0 0.0
        %462 = vmatpush1.msra.mxu0 0.0
        %463 = vmatprep.subr.mxu0 0.0
        %464 = vmatpush1.msra.mxu0 0.0
        %465 = vmatprep.subr.mxu0 0.0
        %466 = vmatpush1.msra.mxu0 0.0
        %467 = vmatprep.subr.mxu0 0.0
        %468 = vmatpush1.msra.mxu0 0.0
        %469 = vmatprep.subr.mxu0 0.0
        %470 = vmatpush1.msra.mxu0 0.0
        %471 = vmatprep.subr.mxu0 0.0
        %472 = vmatpush1.msra.mxu0 0.0
        %473 = vmatprep.subr.mxu0 0.0
        %474 = vmatpush1.msra.mxu0 0.0
        %475 = vmatprep.subr.mxu0 0.0
        %476 = vmatpush1.msra.mxu0 0.0
        %477 = vmatprep.subr.mxu0 0.0
        %478 = vmatpush1.msra.mxu0 0.0
        %479 = vmatprep.subr.mxu0 0.0
        %480 = vmatpush1.msra.mxu0 0.0
        %481 = vmatprep.mubr.f32.mxu0 %v412
        %482 = vmatmul.mubr.f32.gmra.mrb[0].mxu0 %v386
        %v483 = vpop.f32.mrb[0].mxu0
        %v484 = vadd.f32 0.0, %v483
        %v485 = vpop.f32.mrb[0].mxu0
        %486 = vmatprep.mubr.f32.mxu0 %v415
        %487 = vmatmul.mubr.f32.gmra.mrb[0].mxu0 %v388
        %v488 = vpop.f32.mrb[0].mxu0
        %v489 = vadd.f32 0.0, %v488
        %v490 = vpop.f32.mrb[0].mxu0
        %491 = vdwg.mxu0
        %492 = vmax.xlane.f32.xlu0 %v484
        %v493 = vpop.xlane.xlu0 %492
        %494 = vmax.xlane.f32.xlu0 %v489
        %v495 = vpop.xlane.xlu0 %494
        %vm496 = vcmp.eq.f32.partialorder %v484, %v493
        %vm497 = vcmp.eq.f32.partialorder %v489, %v495
        %v498 = vsel %vm496, 1.0, 0.0
        %v499 = vsel %vm497, 1.0, 0.0
        %v500 = vld [vmem:[%s2] sm:$0xff]
        %v501 = vld [vmem:[%s2 + $0x8] sm:$0xff]
        %v502 = vld [vmem:[%s2 + $0x10] sm:$0xff]
        %v503 = vld [vmem:[%s2 + $0x18] sm:$0xff]
        %v504 = vld [vmem:[%s2 + $0x20] sm:$0xff]
        %v505 = vld [vmem:[%s2 + $0x28] sm:$0xff]
        %v506 = vld [vmem:[%s2 + $0x30] sm:$0xff]
        %v507 = vld [vmem:[%s2 + $0x38] sm:$0xff]
        %v508 = vld [vmem:[%s2 + $0x40] sm:$0xff]
        %v509 = vld [vmem:[%s2 + $0x48] sm:$0xff]
        %v510 = vld [vmem:[%s2 + $0x50] sm:$0xff]
        %v511 = vld [vmem:[%s2 + $0x58] sm:$0xff]
        %v512 = vld [vmem:[%s2 + $0x60] sm:$0xff]
        %v513 = vld [vmem:[%s2 + $0x68] sm:$0xff]
        %v514 = vld [vmem:[%s2 + $0x70] sm:$0xff]
        %v515 = vld [vmem:[%s2 + $0x78] sm:$0xff]
        %v516 = vld [vmem:[%s2 + $0x80] sm:$0xff]
        %v517 = vld [vmem:[%s2 + $0x88] sm:$0xff]
        %v518 = vld [vmem:[%s2 + $0x90] sm:$0xff]
        %v519 = vld [vmem:[%s2 + $0x98] sm:$0xff]
        %v520 = vld [vmem:[%s2 + $0xa0] sm:$0xff]
        %v521 = vld [vmem:[%s2 + $0xa8] sm:$0xff]
        %v522 = vld [vmem:[%s2 + $0xb0] sm:$0xff]
        %v523 = vld [vmem:[%s2 + $0xb8] sm:$0xff]
        %v524 = vld [vmem:[%s2 + $0xc0] sm:$0xff]
        %v525 = vld [vmem:[%s2 + $0xc8] sm:$0xff]
        %v526 = vld [vmem:[%s2 + $0xd0] sm:$0xff]
        %v527 = vld [vmem:[%s2 + $0xd8] sm:$0xff]
        %v528 = vld [vmem:[%s2 + $0xe0] sm:$0xff]
        %v529 = vld [vmem:[%s2 + $0xe8] sm:$0xff]
        %v530 = vld [vmem:[%s2 + $0xf0] sm:$0xff]
        %v531 = vld [vmem:[%s2 + $0xf8] sm:$0xff]
        %532 = vmatprep.subr.mxu0 %v501
        %533 = vmatpush1.msra.mxu0 %v500
        %534 = vmatprep.subr.mxu0 %v503
        %535 = vmatpush1.msra.mxu0 %v502
        %536 = vmatprep.subr.mxu0 %v505
        %537 = vmatpush1.msra.mxu0 %v504
        %538 = vmatprep.subr.mxu0 %v507
        %539 = vmatpush1.msra.mxu0 %v506
        %540 = vmatprep.subr.mxu0 %v509
        %541 = vmatpush1.msra.mxu0 %v508
        %542 = vmatprep.subr.mxu0 %v511
        %543 = vmatpush1.msra.mxu0 %v510
        %544 = vmatprep.subr.mxu0 %v513
        %545 = vmatpush1.msra.mxu0 %v512
        %546 = vmatprep.subr.mxu0 %v515
        %547 = vmatpush1.msra.mxu0 %v514
        %548 = vmatprep.subr.mxu0 %v517
        %549 = vmatpush1.msra.mxu0 %v516
        %550 = vmatprep.subr.mxu0 %v519
        %551 = vmatpush1.msra.mxu0 %v518
        %552 = vmatprep.subr.mxu0 %v521
        %553 = vmatpush1.msra.mxu0 %v520
        %554 = vmatprep.subr.mxu0 %v523
        %555 = vmatpush1.msra.mxu0 %v522
        %556 = vmatprep.subr.mxu0 %v525
        %557 = vmatpush1.msra.mxu0 %v524
        %558 = vmatprep.subr.mxu0 %v527
        %559 = vmatpush1.msra.mxu0 %v526
        %560 = vmatprep.subr.mxu0 %v529
        %561 = vmatpush1.msra.mxu0 %v528
        %562 = vmatprep.subr.mxu0 %v531
        %563 = vmatpush1.msra.mxu0 %v530
        %564 = vmatprep.subr.mxu0 0.0
        %565 = vmatpush1.msra.mxu0 0.0
        %566 = vmatprep.subr.mxu0 0.0
        %567 = vmatpush1.msra.mxu0 0.0
        %568 = vmatprep.subr.mxu0 0.0
        %569 = vmatpush1.msra.mxu0 0.0
        %570 = vmatprep.subr.mxu0 0.0
        %571 = vmatpush1.msra.mxu0 0.0
        %572 = vmatprep.subr.mxu0 0.0
        %573 = vmatpush1.msra.mxu0 0.0
        %574 = vmatprep.subr.mxu0 0.0
        %575 = vmatpush1.msra.mxu0 0.0
        %576 = vmatprep.subr.mxu0 0.0
        %577 = vmatpush1.msra.mxu0 0.0
        %578 = vmatprep.subr.mxu0 0.0
        %579 = vmatpush1.msra.mxu0 0.0
        %580 = vmatprep.subr.mxu0 0.0
        %581 = vmatpush1.msra.mxu0 0.0
        %582 = vmatprep.subr.mxu0 0.0
        %583 = vmatpush1.msra.mxu0 0.0
        %584 = vmatprep.subr.mxu0 0.0
        %585 = vmatpush1.msra.mxu0 0.0
        %586 = vmatprep.subr.mxu0 0.0
        %587 = vmatpush1.msra.mxu0 0.0
        %588 = vmatprep.subr.mxu0 0.0
        %589 = vmatpush1.msra.mxu0 0.0
        %590 = vmatprep.subr.mxu0 0.0
        %591 = vmatpush1.msra.mxu0 0.0
        %592 = vmatprep.subr.mxu0 0.0
        %593 = vmatpush1.msra.mxu0 0.0
        %594 = vmatprep.subr.mxu0 0.0
        %595 = vmatpush1.msra.mxu0 0.0
        %596 = vmatprep.mubr.f32.mxu0 0.0
        %597 = vmatmul.mubr.f32.gmra.mrb[0].mxu0 %v498
        %v598 = vpop.f32.mrb[0].mxu0
        %v599 = vadd.f32 0.0, %v598
        %v600 = vpop.f32.mrb[0].mxu0
        %v601 = vadd.f32 0.0, %v600
        %602 = vmatprep.mubr.f32.mxu0 0.0
        %603 = vmatmul.mubr.f32.gmra.mrb[0].mxu0 %v499
        %v604 = vpop.f32.mrb[0].mxu0
        %v605 = vadd.f32 0.0, %v604
        %v606 = vpop.f32.mrb[0].mxu0
        %v607 = vadd.f32 0.0, %v606
        %608 = vdwg.mxu0
        %v609 = vmul.f32 %v382, %v599
        %v610 = vmul.f32 %v383, %v601
        %v611 = vmul.f32 %v384, %v605
        %v612 = vmul.f32 %v385, %v607
        %v613 = vpack.c.bf16 %v611, %v609
        %v614 = vpack.c.bf16 %v612, %v610
        %v615 = vld [vmem:[%s3] sm:$0xff]
        %v616 = vld [vmem:[%s3 + $0x8] sm:$0xff]
        %v617 = vld [vmem:[%s3 + $0x10] sm:$0xff]
        %v618 = vld [vmem:[%s3 + $0x18] sm:$0xff]
        %v619 = vld [vmem:[%s3 + $0x20] sm:$0xff]
        %v620 = vld [vmem:[%s3 + $0x28] sm:$0xff]
        %v621 = vld [vmem:[%s3 + $0x30] sm:$0xff]
        %v622 = vld [vmem:[%s3 + $0x38] sm:$0xff]
        %v623 = vld [vmem:[%s3 + $0x40] sm:$0xff]
        %v624 = vld [vmem:[%s3 + $0x48] sm:$0xff]
        %v625 = vld [vmem:[%s3 + $0x50] sm:$0xff]
        %v626 = vld [vmem:[%s3 + $0x58] sm:$0xff]
        %v627 = vld [vmem:[%s3 + $0x60] sm:$0xff]
        %v628 = vld [vmem:[%s3 + $0x68] sm:$0xff]
        %v629 = vld [vmem:[%s3 + $0x70] sm:$0xff]
        %v630 = vld [vmem:[%s3 + $0x78] sm:$0xff]
        %v631 = vld [vmem:[%s3 + $0x80] sm:$0xff]
        %v632 = vld [vmem:[%s3 + $0x88] sm:$0xff]
        %v633 = vld [vmem:[%s3 + $0x90] sm:$0xff]
        %v634 = vld [vmem:[%s3 + $0x98] sm:$0xff]
        %v635 = vld [vmem:[%s3 + $0xa0] sm:$0xff]
        %v636 = vld [vmem:[%s3 + $0xa8] sm:$0xff]
        %v637 = vld [vmem:[%s3 + $0xb0] sm:$0xff]
        %v638 = vld [vmem:[%s3 + $0xb8] sm:$0xff]
        %v639 = vld [vmem:[%s3 + $0xc0] sm:$0xff]
        %v640 = vld [vmem:[%s3 + $0xc8] sm:$0xff]
        %v641 = vld [vmem:[%s3 + $0xd0] sm:$0xff]
        %v642 = vld [vmem:[%s3 + $0xd8] sm:$0xff]
        %v643 = vld [vmem:[%s3 + $0xe0] sm:$0xff]
        %v644 = vld [vmem:[%s3 + $0xe8] sm:$0xff]
        %v645 = vld [vmem:[%s3 + $0xf0] sm:$0xff]
        %v646 = vld [vmem:[%s3 + $0xf8] sm:$0xff]
        %v647 = vld [vmem:[%s3 + $0x100] sm:$0xff]
        %v648 = vld [vmem:[%s3 + $0x108] sm:$0xff]
        %v649 = vld [vmem:[%s3 + $0x110] sm:$0xff]
        %v650 = vld [vmem:[%s3 + $0x118] sm:$0xff]
        %v651 = vld [vmem:[%s3 + $0x120] sm:$0xff]
        %v652 = vld [vmem:[%s3 + $0x128] sm:$0xff]
        %v653 = vld [vmem:[%s3 + $0x130] sm:$0xff]
        %v654 = vld [vmem:[%s3 + $0x138] sm:$0xff]
        %v655 = vld [vmem:[%s4] sm:$0xf]
        %v657 = vlaneseq
        %v658 = vshrl.u32 %v657, 7
        %v659 = vsub.s32 0, %v658
        %v660 = vrot.slane %v655, %v659
        %v661 = vlaneseq
        %v662 = vshrl.u32 %v661, 7
        %v663 = vsub.s32 1, %v662
        %v664 = vrot.slane %v655, %v663
        %v665 = vlaneseq
        %v666 = vshrl.u32 %v665, 7
        %v667 = vsub.s32 2, %v666
        %v668 = vrot.slane %v655, %v667
        %v669 = vlaneseq
        %v670 = vshrl.u32 %v669, 7
        %v671 = vsub.s32 3, %v670
        %v672 = vrot.slane %v655, %v671
        %v717 = vunpack.c.l.b16 %v615
        %v718 = vunpack.c.h.b16 %v615
        %v719 = vunpack.c.l.b16 %v616
        %v720 = vunpack.c.h.b16 %v616
        %v721 = vunpack.c.l.b16 %v617
        %v722 = vunpack.c.h.b16 %v617
        %v723 = vunpack.c.l.b16 %v618
        %v724 = vunpack.c.h.b16 %v618
        %v725 = vunpack.c.l.b16 %v619
        %v726 = vunpack.c.h.b16 %v619
        %v727 = vunpack.c.l.b16 %v620
        %v728 = vunpack.c.h.b16 %v620
        %v729 = vunpack.c.l.b16 %v621
        %v730 = vunpack.c.h.b16 %v621
        %v731 = vunpack.c.l.b16 %v622
        %v732 = vunpack.c.h.b16 %v622
        %v733 = vunpack.c.l.b16 %v623
        %v734 = vunpack.c.h.b16 %v623
        %v735 = vunpack.c.l.b16 %v624
        %v736 = vunpack.c.h.b16 %v624
        %v737 = vunpack.c.l.b16 %v625
        %v738 = vunpack.c.h.b16 %v625
        %v739 = vunpack.c.l.b16 %v626
        %v740 = vunpack.c.h.b16 %v626
        %v741 = vunpack.c.l.b16 %v627
        %v742 = vunpack.c.h.b16 %v627
        %v743 = vunpack.c.l.b16 %v628
        %v744 = vunpack.c.h.b16 %v628
        %v745 = vunpack.c.l.b16 %v629
        %v746 = vunpack.c.h.b16 %v629
        %v747 = vunpack.c.l.b16 %v630
        %v748 = vunpack.c.h.b16 %v630
        %v749 = vunpack.c.l.b16 %v631
        %v750 = vunpack.c.h.b16 %v631
        %v751 = vunpack.c.l.b16 %v632
        %v752 = vunpack.c.h.b16 %v632
        %v753 = vunpack.c.l.b16 %v633
        %v754 = vunpack.c.h.b16 %v633
        %v755 = vunpack.c.l.b16 %v634
        %v756 = vunpack.c.h.b16 %v634
        %v757 = vunpack.c.l.b16 %v635
        %v758 = vunpack.c.h.b16 %v635
        %v759 = vunpack.c.l.b16 %v636
        %v760 = vunpack.c.h.b16 %v636
        %v761 = vunpack.c.l.b16 %v637
        %v762 = vunpack.c.h.b16 %v637
        %v763 = vunpack.c.l.b16 %v638
        %v764 = vunpack.c.h.b16 %v638
        %v765 = vunpack.c.l.b16 %v639
        %v766 = vunpack.c.h.b16 %v639
        %v767 = vunpack.c.l.b16 %v640
        %v768 = vunpack.c.h.b16 %v640
        %v769 = vunpack.c.l.b16 %v641
        %v770 = vunpack.c.h.b16 %v641
        %v771 = vunpack.c.l.b16 %v642
        %v772 = vunpack.c.h.b16 %v642
        %v773 = vunpack.c.l.b16 %v643
        %v774 = vunpack.c.h.b16 %v643
        %v775 = vunpack.c.l.b16 %v644
        %v776 = vunpack.c.h.b16 %v644
        %v777 = vunpack.c.l.b16 %v645
        %v778 = vunpack.c.h.b16 %v645
        %v779 = vunpack.c.l.b16 %v646
        %v780 = vunpack.c.h.b16 %v646
        %v781 = vunpack.c.l.b16 %v647
        %v782 = vunpack.c.h.b16 %v647
        %v783 = vunpack.c.l.b16 %v648
        %v784 = vunpack.c.h.b16 %v648
        %v785 = vunpack.c.l.b16 %v649
        %v786 = vunpack.c.h.b16 %v649
        %v787 = vunpack.c.l.b16 %v650
        %v788 = vunpack.c.h.b16 %v650
        %v789 = vunpack.c.l.b16 %v651
        %v790 = vunpack.c.h.b16 %v651
        %v791 = vunpack.c.l.b16 %v652
        %v792 = vunpack.c.h.b16 %v652
        %v793 = vunpack.c.l.b16 %v653
        %v794 = vunpack.c.h.b16 %v653
        %v795 = vunpack.c.l.b16 %v654
        %v796 = vunpack.c.h.b16 %v654
        %v797 = vpack.c.b16 %v721, %v717
        %v798 = vpack.c.b16 %v722, %v718
        %v799 = vpack.c.b16 %v723, %v719
        %v800 = vpack.c.b16 %v724, %v720
        %v801 = vpack.c.b16 %v729, %v725
        %v802 = vpack.c.b16 %v730, %v726
        %v803 = vpack.c.b16 %v731, %v727
        %v804 = vpack.c.b16 %v732, %v728
        %v805 = vpack.c.b16 %v737, %v733
        %v806 = vpack.c.b16 %v738, %v734
        %v807 = vpack.c.b16 %v739, %v735
        %v808 = vpack.c.b16 %v740, %v736
        %v809 = vpack.c.b16 %v745, %v741
        %v810 = vpack.c.b16 %v746, %v742
        %v811 = vpack.c.b16 %v747, %v743
        %v812 = vpack.c.b16 %v748, %v744
        %v813 = vpack.c.b16 %v753, %v749
        %v814 = vpack.c.b16 %v754, %v750
        %v815 = vpack.c.b16 %v755, %v751
        %v816 = vpack.c.b16 %v756, %v752
        %v817 = vpack.c.b16 %v761, %v757
        %v818 = vpack.c.b16 %v762, %v758
        %v819 = vpack.c.b16 %v763, %v759
        %v820 = vpack.c.b16 %v764, %v760
        %v821 = vpack.c.b16 %v769, %v765
        %v822 = vpack.c.b16 %v770, %v766
        %v823 = vpack.c.b16 %v771, %v767
        %v824 = vpack.c.b16 %v772, %v768
        %v825 = vpack.c.b16 %v777, %v773
        %v826 = vpack.c.b16 %v778, %v774
        %v827 = vpack.c.b16 %v779, %v775
        %v828 = vpack.c.b16 %v780, %v776
        %v829 = vpack.c.b16 %v785, %v781
        %v830 = vpack.c.b16 %v786, %v782
        %v831 = vpack.c.b16 %v787, %v783
        %v832 = vpack.c.b16 %v788, %v784
        %v833 = vpack.c.b16 %v793, %v789
        %v834 = vpack.c.b16 %v794, %v790
        %v835 = vpack.c.b16 %v795, %v791
        %v836 = vpack.c.b16 %v796, %v792
        %v878 = vsel %vm410, %v614, 0
        %880 = vmatprep.subr.bf16.mxu0 %v798
        %881 = vmatpush1.bf16.msra.mxu0 %v797
        %882 = vmatprep.subr.bf16.mxu0 %v802
        %883 = vmatpush1.bf16.msra.mxu0 %v801
        %884 = vmatprep.subr.bf16.mxu0 %v806
        %885 = vmatpush1.bf16.msra.mxu0 %v805
        %886 = vmatprep.subr.bf16.mxu0 %v810
        %887 = vmatpush1.bf16.msra.mxu0 %v809
        %888 = vmatprep.subr.bf16.mxu0 %v814
        %889 = vmatpush1.bf16.msra.mxu0 %v813
        %890 = vmatprep.subr.bf16.mxu0 %v818
        %891 = vmatpush1.bf16.msra.mxu0 %v817
        %892 = vmatprep.subr.bf16.mxu0 %v822
        %893 = vmatpush1.bf16.msra.mxu0 %v821
        %894 = vmatprep.subr.bf16.mxu0 %v826
        %895 = vmatpush1.bf16.msra.mxu0 %v825
        %896 = vmatprep.subr.bf16.mxu0 %v830
        %897 = vmatpush1.bf16.msra.mxu0 %v829
        %898 = vmatprep.subr.bf16.mxu0 %v834
        %899 = vmatpush1.bf16.msra.mxu0 %v833
        %900 = vmatprep.subr.bf16.mxu0 0
        %901 = vmatpush1.bf16.msra.mxu0 0
        %902 = vmatprep.subr.bf16.mxu0 0
        %903 = vmatpush1.bf16.msra.mxu0 0
        %904 = vmatprep.subr.bf16.mxu0 0
        %905 = vmatpush1.bf16.msra.mxu0 0
        %906 = vmatprep.subr.bf16.mxu0 0
        %907 = vmatpush1.bf16.msra.mxu0 0
        %908 = vmatprep.subr.bf16.mxu0 0
        %909 = vmatpush1.bf16.msra.mxu0 0
        %910 = vmatprep.subr.bf16.mxu0 0
        %911 = vmatpush1.bf16.msra.mxu0 0
        %912 = vmatprep.mubr.bf16.mxu0 %v878
        %913 = vmatmul.mubr.bf16.gmra.mrb[0].mxu0 %v613
        %v914 = vpop.f32.mrb[0].mxu0
        %v915 = vadd.f32 %v660, %v914
        %v916 = vpop.f32.mrb[0].mxu0
        %v917 = vadd.f32 %v664, %v916
        %v918 = vpop.f32.mrb[0].mxu0
        %v919 = vadd.f32 %v660, %v918
        %v920 = vpop.f32.mrb[0].mxu0
        %v921 = vadd.f32 %v664, %v920
        %922 = vdwg.mxu0
        %923 = vmatprep.subr.bf16.mxu0 %v800
        %924 = vmatpush1.bf16.msra.mxu0 %v799
        %925 = vmatprep.subr.bf16.mxu0 %v804
        %926 = vmatpush1.bf16.msra.mxu0 %v803
        %927 = vmatprep.subr.bf16.mxu0 %v808
        %928 = vmatpush1.bf16.msra.mxu0 %v807
        %929 = vmatprep.subr.bf16.mxu0 %v812
        %930 = vmatpush1.bf16.msra.mxu0 %v811
        %931 = vmatprep.subr.bf16.mxu0 %v816
        %932 = vmatpush1.bf16.msra.mxu0 %v815
        %933 = vmatprep.subr.bf16.mxu0 %v820
        %934 = vmatpush1.bf16.msra.mxu0 %v819
        %935 = vmatprep.subr.bf16.mxu0 %v824
        %936 = vmatpush1.bf16.msra.mxu0 %v823
        %937 = vmatprep.subr.bf16.mxu0 %v828
        %938 = vmatpush1.bf16.msra.mxu0 %v827
        %939 = vmatprep.subr.bf16.mxu0 %v832
        %940 = vmatpush1.bf16.msra.mxu0 %v831
        %941 = vmatprep.subr.bf16.mxu0 %v836
        %942 = vmatpush1.bf16.msra.mxu0 %v835
        %943 = vmatprep.subr.bf16.mxu0 0
        %944 = vmatpush1.bf16.msra.mxu0 0
        %945 = vmatprep.subr.bf16.mxu0 0
        %946 = vmatpush1.bf16.msra.mxu0 0
        %947 = vmatprep.subr.bf16.mxu0 0
        %948 = vmatpush1.bf16.msra.mxu0 0
        %949 = vmatprep.subr.bf16.mxu0 0
        %950 = vmatpush1.bf16.msra.mxu0 0
        %951 = vmatprep.subr.bf16.mxu0 0
        %952 = vmatpush1.bf16.msra.mxu0 0
        %953 = vmatprep.subr.bf16.mxu0 0
        %954 = vmatpush1.bf16.msra.mxu0 0
        %955 = vmatprep.mubr.bf16.mxu0 %v878
        %956 = vmatmul.mubr.bf16.gmra.mrb[0].mxu0 %v613
        %v957 = vpop.f32.mrb[0].mxu0
        %v958 = vadd.f32 %v668, %v957
        %v959 = vpop.f32.mrb[0].mxu0
        %v960 = vadd.f32 %v672, %v959
        %v961 = vpop.f32.mrb[0].mxu0
        %v962 = vadd.f32 %v668, %v961
        %v963 = vpop.f32.mrb[0].mxu0
        %v964 = vadd.f32 %v672, %v963
        %965 = vdwg.mxu0
        %v966 = vmax.f32 %v915, 0.0
        %v967 = vmax.f32 %v917, 0.0
        %v968 = vmax.f32 %v958, 0.0
        %v969 = vmax.f32 %v960, 0.0
        %v970 = vmax.f32 %v919, 0.0
        %v971 = vmax.f32 %v921, 0.0
        %v972 = vmax.f32 %v962, 0.0
        %v973 = vmax.f32 %v964, 0.0
        %v974 = vpack.c.bf16 %v970, %v966
        %v975 = vpack.c.bf16 %v971, %v967
        %v976 = vpack.c.bf16 %v972, %v968
        %v977 = vpack.c.bf16 %v973, %v969
        %v978 = vld [vmem:[#allocation5] sm:$0xff]
        %v979 = vld [vmem:[#allocation5 + $0x8] sm:$0xff]
        %v980 = vld [vmem:[#allocation5 + $0x10] sm:$0xff]
        %v981 = vld [vmem:[#allocation5 + $0x18] sm:$0xff]
        %v982 = vld [vmem:[#allocation5 + $0x20] sm:$0xff]
        %v983 = vld [vmem:[#allocation5 + $0x28] sm:$0xff]
        %v984 = vld [vmem:[#allocation5 + $0x30] sm:$0xff]
        %v985 = vld [vmem:[#allocation5 + $0x38] sm:$0xff]
        %v986 = vld [vmem:[#allocation5 + $0x40] sm:$0xff]
        %v987 = vld [vmem:[#allocation5 + $0x48] sm:$0xff]
        %v988 = vld [vmem:[#allocation5 + $0x50] sm:$0xff]
        %v989 = vld [vmem:[#allocation5 + $0x58] sm:$0xff]
        %v990 = vld [vmem:[#allocation5 + $0x60] sm:$0xff]
        %v991 = vld [vmem:[#allocation5 + $0x68] sm:$0xff]
        %v992 = vld [vmem:[#allocation5 + $0x70] sm:$0xff]
        %v993 = vld [vmem:[#allocation5 + $0x78] sm:$0xff]
        %v994 = vld [vmem:[#allocation5 + $0x80] sm:$0xff]
        %v995 = vld [vmem:[#allocation5 + $0x88] sm:$0xff]
        %v996 = vld [vmem:[#allocation5 + $0x90] sm:$0xff]
        %v997 = vld [vmem:[#allocation5 + $0x98] sm:$0xff]
        %v998 = vld [vmem:[#allocation5 + $0xa0] sm:$0xff]
        %v999 = vld [vmem:[#allocation5 + $0xa8] sm:$0xff]
        %v1000 = vld [vmem:[#allocation5 + $0xb0] sm:$0xff]
        %v1001 = vld [vmem:[#allocation5 + $0xb8] sm:$0xff]
        %v1002 = vld [vmem:[#allocation5 + $0xc0] sm:$0xff]
        %v1003 = vld [vmem:[#allocation5 + $0xc8] sm:$0xff]
        %v1004 = vld [vmem:[#allocation5 + $0xd0] sm:$0xff]
        %v1005 = vld [vmem:[#allocation5 + $0xd8] sm:$0xff]
        %v1006 = vld [vmem:[#allocation5 + $0xe0] sm:$0xff]
        %v1007 = vld [vmem:[#allocation5 + $0xe8] sm:$0xff]
        %v1008 = vld [vmem:[#allocation5 + $0xf0] sm:$0xff]
        %v1009 = vld [vmem:[#allocation5 + $0xf8] sm:$0xff]
        %v1010 = vld [vmem:[#allocation5 + $0x100] sm:$0xff]
        %v1011 = vld [vmem:[#allocation5 + $0x108] sm:$0xff]
        %v1012 = vld [vmem:[#allocation5 + $0x110] sm:$0xff]
        %v1013 = vld [vmem:[#allocation5 + $0x118] sm:$0xff]
        %v1014 = vld [vmem:[#allocation5 + $0x120] sm:$0xff]
        %v1015 = vld [vmem:[#allocation5 + $0x128] sm:$0xff]
        %v1016 = vld [vmem:[#allocation5 + $0x130] sm:$0xff]
        %v1017 = vld [vmem:[#allocation5 + $0x138] sm:$0xff]
        %v1018 = vld [vmem:[#allocation5 + $0x140] sm:$0xff]
        %v1019 = vld [vmem:[#allocation5 + $0x148] sm:$0xff]
        %v1020 = vld [vmem:[#allocation5 + $0x150] sm:$0xff]
        %v1021 = vld [vmem:[#allocation5 + $0x158] sm:$0xff]
        %v1022 = vld [vmem:[#allocation5 + $0x160] sm:$0xff]
        %v1023 = vld [vmem:[#allocation5 + $0x168] sm:$0xff]
        %v1024 = vld [vmem:[#allocation5 + $0x170] sm:$0xff]
        %v1025 = vld [vmem:[#allocation5 + $0x178] sm:$0xff]
        %v1026 = vld [vmem:[#allocation5 + $0x180] sm:$0xff]
        %v1027 = vld [vmem:[#allocation5 + $0x188] sm:$0xff]
        %v1028 = vld [vmem:[#allocation5 + $0x190] sm:$0xff]
        %v1029 = vld [vmem:[#allocation5 + $0x198] sm:$0xff]
        %v1030 = vld [vmem:[#allocation5 + $0x1a0] sm:$0xff]
        %v1031 = vld [vmem:[#allocation5 + $0x1a8] sm:$0xff]
        %v1032 = vld [vmem:[#allocation5 + $0x1b0] sm:$0xff]
        %v1033 = vld [vmem:[#allocation5 + $0x1b8] sm:$0xff]
        %v1034 = vld [vmem:[#allocation5 + $0x1c0] sm:$0xff]
        %v1035 = vld [vmem:[#allocation5 + $0x1c8] sm:$0xff]
        %v1036 = vld [vmem:[#allocation5 + $0x1d0] sm:$0xff]
        %v1037 = vld [vmem:[#allocation5 + $0x1d8] sm:$0xff]
        %v1038 = vld [vmem:[#allocation5 + $0x1e0] sm:$0xff]
        %v1039 = vld [vmem:[#allocation5 + $0x1e8] sm:$0xff]
        %v1040 = vld [vmem:[#allocation5 + $0x1f0] sm:$0xff]
        %v1041 = vld [vmem:[#allocation5 + $0x1f8] sm:$0xff]
        %v1042 = vld [vmem:[#allocation5 + $0x200] sm:$0xff]
        %v1043 = vld [vmem:[#allocation5 + $0x208] sm:$0xff]
        %v1044 = vld [vmem:[#allocation5 + $0x210] sm:$0xff]
        %v1045 = vld [vmem:[#allocation5 + $0x218] sm:$0xff]
        %v1046 = vld [vmem:[#allocation5 + $0x220] sm:$0xff]
        %v1047 = vld [vmem:[#allocation5 + $0x228] sm:$0xff]
        %v1048 = vld [vmem:[#allocation5 + $0x230] sm:$0xff]
        %v1049 = vld [vmem:[#allocation5 + $0x238] sm:$0xff]
        %v1050 = vld [vmem:[#allocation5 + $0x240] sm:$0xff]
        %v1051 = vld [vmem:[#allocation5 + $0x248] sm:$0xff]
        %v1052 = vld [vmem:[#allocation5 + $0x250] sm:$0xff]
        %v1053 = vld [vmem:[#allocation5 + $0x258] sm:$0xff]
        %v1054 = vld [vmem:[#allocation5 + $0x260] sm:$0xff]
        %v1055 = vld [vmem:[#allocation5 + $0x268] sm:$0xff]
        %v1056 = vld [vmem:[#allocation5 + $0x270] sm:$0xff]
        %v1057 = vld [vmem:[#allocation5 + $0x278] sm:$0xff]
        %v1058 = vld [vmem:[#allocation5 + $0x280] sm:$0xff]
        %v1059 = vld [vmem:[#allocation5 + $0x288] sm:$0xff]
        %v1060 = vld [vmem:[#allocation5 + $0x290] sm:$0xff]
        %v1061 = vld [vmem:[#allocation5 + $0x298] sm:$0xff]
        %v1062 = vld [vmem:[#allocation5 + $0x2a0] sm:$0xff]
        %v1063 = vld [vmem:[#allocation5 + $0x2a8] sm:$0xff]
        %v1064 = vld [vmem:[#allocation5 + $0x2b0] sm:$0xff]
        %v1065 = vld [vmem:[#allocation5 + $0x2b8] sm:$0xff]
        %v1066 = vld [vmem:[#allocation5 + $0x2c0] sm:$0xff]
        %v1067 = vld [vmem:[#allocation5 + $0x2c8] sm:$0xff]
        %v1068 = vld [vmem:[#allocation5 + $0x2d0] sm:$0xff]
        %v1069 = vld [vmem:[#allocation5 + $0x2d8] sm:$0xff]
        %v1070 = vld [vmem:[#allocation5 + $0x2e0] sm:$0xff]
        %v1071 = vld [vmem:[#allocation5 + $0x2e8] sm:$0xff]
        %v1072 = vld [vmem:[#allocation5 + $0x2f0] sm:$0xff]
        %v1073 = vld [vmem:[#allocation5 + $0x2f8] sm:$0xff]
        %v1074 = vld [vmem:[#allocation5 + $0x300] sm:$0xff]
        %v1075 = vld [vmem:[#allocation5 + $0x308] sm:$0xff]
        %v1076 = vld [vmem:[#allocation5 + $0x310] sm:$0xff]
        %v1077 = vld [vmem:[#allocation5 + $0x318] sm:$0xff]
        %v1078 = vld [vmem:[#allocation5 + $0x320] sm:$0xff]
        %v1079 = vld [vmem:[#allocation5 + $0x328] sm:$0xff]
        %v1080 = vld [vmem:[#allocation5 + $0x330] sm:$0xff]
        %v1081 = vld [vmem:[#allocation5 + $0x338] sm:$0xff]
        %v1082 = vld [vmem:[#allocation5 + $0x340] sm:$0xff]
        %v1083 = vld [vmem:[#allocation5 + $0x348] sm:$0xff]
        %v1084 = vld [vmem:[#allocation5 + $0x350] sm:$0xff]
        %v1085 = vld [vmem:[#allocation5 + $0x358] sm:$0xff]
        %v1086 = vld [vmem:[#allocation5 + $0x360] sm:$0xff]
        %v1087 = vld [vmem:[#allocation5 + $0x368] sm:$0xff]
        %v1088 = vld [vmem:[#allocation5 + $0x370] sm:$0xff]
        %v1089 = vld [vmem:[#allocation5 + $0x378] sm:$0xff]
        %v1090 = vld [vmem:[#allocation5 + $0x380] sm:$0xff]
        %v1091 = vld [vmem:[#allocation5 + $0x388] sm:$0xff]
        %v1092 = vld [vmem:[#allocation5 + $0x390] sm:$0xff]
        %v1093 = vld [vmem:[#allocation5 + $0x398] sm:$0xff]
        %v1094 = vld [vmem:[#allocation5 + $0x3a0] sm:$0xff]
        %v1095 = vld [vmem:[#allocation5 + $0x3a8] sm:$0xff]
        %v1096 = vld [vmem:[#allocation5 + $0x3b0] sm:$0xff]
        %v1097 = vld [vmem:[#allocation5 + $0x3b8] sm:$0xff]
        %v1098 = vld [vmem:[#allocation5 + $0x3c0] sm:$0xff]
        %v1099 = vld [vmem:[#allocation5 + $0x3c8] sm:$0xff]
        %v1100 = vld [vmem:[#allocation5 + $0x3d0] sm:$0xff]
        %v1101 = vld [vmem:[#allocation5 + $0x3d8] sm:$0xff]
        %v1102 = vld [vmem:[#allocation5 + $0x3e0] sm:$0xff]
        %v1103 = vld [vmem:[#allocation5 + $0x3e8] sm:$0xff]
        %v1104 = vld [vmem:[#allocation5 + $0x3f0] sm:$0xff]
        %v1105 = vld [vmem:[#allocation5 + $0x3f8] sm:$0xff]
        %v1106 = vld [vmem:[#allocation5 + $0x400] sm:$0xff]
        %v1107 = vld [vmem:[#allocation5 + $0x408] sm:$0xff]
        %v1108 = vld [vmem:[#allocation5 + $0x410] sm:$0xff]
        %v1109 = vld [vmem:[#allocation5 + $0x418] sm:$0xff]
        %v1110 = vld [vmem:[#allocation5 + $0x420] sm:$0xff]
        %v1111 = vld [vmem:[#allocation5 + $0x428] sm:$0xff]
        %v1112 = vld [vmem:[#allocation5 + $0x430] sm:$0xff]
        %v1113 = vld [vmem:[#allocation5 + $0x438] sm:$0xff]
        %v1114 = vld [vmem:[#allocation5 + $0x440] sm:$0xff]
        %v1115 = vld [vmem:[#allocation5 + $0x448] sm:$0xff]
        %v1116 = vld [vmem:[#allocation5 + $0x450] sm:$0xff]
        %v1117 = vld [vmem:[#allocation5 + $0x458] sm:$0xff]
        %v1118 = vld [vmem:[#allocation5 + $0x460] sm:$0xff]
        %v1119 = vld [vmem:[#allocation5 + $0x468] sm:$0xff]
        %v1120 = vld [vmem:[#allocation5 + $0x470] sm:$0xff]
        %v1121 = vld [vmem:[#allocation5 + $0x478] sm:$0xff]
        %v1122 = vld [vmem:[#allocation5 + $0x480] sm:$0xff]
        %v1123 = vld [vmem:[#allocation5 + $0x488] sm:$0xff]
        %v1124 = vld [vmem:[#allocation5 + $0x490] sm:$0xff]
        %v1125 = vld [vmem:[#allocation5 + $0x498] sm:$0xff]
        %v1126 = vld [vmem:[#allocation5 + $0x4a0] sm:$0xff]
        %v1127 = vld [vmem:[#allocation5 + $0x4a8] sm:$0xff]
        %v1128 = vld [vmem:[#allocation5 + $0x4b0] sm:$0xff]
        %v1129 = vld [vmem:[#allocation5 + $0x4b8] sm:$0xff]
        %v1130 = vld [vmem:[#allocation5 + $0x4c0] sm:$0xff]
        %v1131 = vld [vmem:[#allocation5 + $0x4c8] sm:$0xff]
        %v1132 = vld [vmem:[#allocation5 + $0x4d0] sm:$0xff]
        %v1133 = vld [vmem:[#allocation5 + $0x4d8] sm:$0xff]
        %v1134 = vld [vmem:[#allocation5 + $0x4e0] sm:$0xff]
        %v1135 = vld [vmem:[#allocation5 + $0x4e8] sm:$0xff]
        %v1136 = vld [vmem:[#allocation5 + $0x4f0] sm:$0xff]
        %v1137 = vld [vmem:[#allocation5 + $0x4f8] sm:$0xff]
        %v1138 = vld [vmem:[#allocation5 + $0x500] sm:$0xff]
        %v1139 = vld [vmem:[#allocation5 + $0x508] sm:$0xff]
        %v1140 = vld [vmem:[#allocation5 + $0x510] sm:$0xff]
        %v1141 = vld [vmem:[#allocation5 + $0x518] sm:$0xff]
        %v1142 = vld [vmem:[#allocation5 + $0x520] sm:$0xff]
        %v1143 = vld [vmem:[#allocation5 + $0x528] sm:$0xff]
        %v1144 = vld [vmem:[#allocation5 + $0x530] sm:$0xff]
        %v1145 = vld [vmem:[#allocation5 + $0x538] sm:$0xff]
        %v1146 = vld [vmem:[#allocation5 + $0x540] sm:$0xff]
        %v1147 = vld [vmem:[#allocation5 + $0x548] sm:$0xff]
        %v1148 = vld [vmem:[#allocation5 + $0x550] sm:$0xff]
        %v1149 = vld [vmem:[#allocation5 + $0x558] sm:$0xff]
        %v1150 = vld [vmem:[#allocation5 + $0x560] sm:$0xff]
        %v1151 = vld [vmem:[#allocation5 + $0x568] sm:$0xff]
        %v1152 = vld [vmem:[#allocation5 + $0x570] sm:$0xff]
        %v1153 = vld [vmem:[#allocation5 + $0x578] sm:$0xff]
        %v1154 = vld [vmem:[#allocation5 + $0x580] sm:$0xff]
        %v1155 = vld [vmem:[#allocation5 + $0x588] sm:$0xff]
        %v1156 = vld [vmem:[#allocation5 + $0x590] sm:$0xff]
        %v1157 = vld [vmem:[#allocation5 + $0x598] sm:$0xff]
        %v1158 = vld [vmem:[#allocation5 + $0x5a0] sm:$0xff]
        %v1159 = vld [vmem:[#allocation5 + $0x5a8] sm:$0xff]
        %v1160 = vld [vmem:[#allocation5 + $0x5b0] sm:$0xff]
        %v1161 = vld [vmem:[#allocation5 + $0x5b8] sm:$0xff]
        %v1162 = vld [vmem:[#allocation5 + $0x5c0] sm:$0xff]
        %v1163 = vld [vmem:[#allocation5 + $0x5c8] sm:$0xff]
        %v1164 = vld [vmem:[#allocation5 + $0x5d0] sm:$0xff]
        %v1165 = vld [vmem:[#allocation5 + $0x5d8] sm:$0xff]
        %v1166 = vld [vmem:[#allocation5 + $0x5e0] sm:$0xff]
        %v1167 = vld [vmem:[#allocation5 + $0x5e8] sm:$0xff]
        %v1168 = vld [vmem:[#allocation5 + $0x5f0] sm:$0xff]
        %v1169 = vld [vmem:[#allocation5 + $0x5f8] sm:$0xff]
        %v1170 = vld [vmem:[#allocation5 + $0x600] sm:$0xff]
        %v1171 = vld [vmem:[#allocation5 + $0x608] sm:$0xff]
        %v1172 = vld [vmem:[#allocation5 + $0x610] sm:$0xff]
        %v1173 = vld [vmem:[#allocation5 + $0x618] sm:$0xff]
        %v1174 = vld [vmem:[#allocation5 + $0x620] sm:$0xff]
        %v1175 = vld [vmem:[#allocation5 + $0x628] sm:$0xff]
        %v1176 = vld [vmem:[#allocation5 + $0x630] sm:$0xff]
        %v1177 = vld [vmem:[#allocation5 + $0x638] sm:$0xff]
        %v1178 = vld [vmem:[#allocation5 + $0x640] sm:$0xff]
        %v1179 = vld [vmem:[#allocation5 + $0x648] sm:$0xff]
        %v1180 = vld [vmem:[#allocation5 + $0x650] sm:$0xff]
        %v1181 = vld [vmem:[#allocation5 + $0x658] sm:$0xff]
        %v1182 = vld [vmem:[#allocation5 + $0x660] sm:$0xff]
        %v1183 = vld [vmem:[#allocation5 + $0x668] sm:$0xff]
        %v1184 = vld [vmem:[#allocation5 + $0x670] sm:$0xff]
        %v1185 = vld [vmem:[#allocation5 + $0x678] sm:$0xff]
        %v1186 = vld [vmem:[#allocation5 + $0x680] sm:$0xff]
        %v1187 = vld [vmem:[#allocation5 + $0x688] sm:$0xff]
        %v1188 = vld [vmem:[#allocation5 + $0x690] sm:$0xff]
        %v1189 = vld [vmem:[#allocation5 + $0x698] sm:$0xff]
        %v1190 = vld [vmem:[#allocation5 + $0x6a0] sm:$0xff]
        %v1191 = vld [vmem:[#allocation5 + $0x6a8] sm:$0xff]
        %v1192 = vld [vmem:[#allocation5 + $0x6b0] sm:$0xff]
        %v1193 = vld [vmem:[#allocation5 + $0x6b8] sm:$0xff]
        %v1194 = vld [vmem:[#allocation5 + $0x6c0] sm:$0xff]
        %v1195 = vld [vmem:[#allocation5 + $0x6c8] sm:$0xff]
        %v1196 = vld [vmem:[#allocation5 + $0x6d0] sm:$0xff]
        %v1197 = vld [vmem:[#allocation5 + $0x6d8] sm:$0xff]
        %v1198 = vld [vmem:[#allocation5 + $0x6e0] sm:$0xff]
        %v1199 = vld [vmem:[#allocation5 + $0x6e8] sm:$0xff]
        %v1200 = vld [vmem:[#allocation5 + $0x6f0] sm:$0xff]
        %v1201 = vld [vmem:[#allocation5 + $0x6f8] sm:$0xff]
        %v1202 = vld [vmem:[#allocation5 + $0x700] sm:$0xff]
        %v1203 = vld [vmem:[#allocation5 + $0x708] sm:$0xff]
        %v1204 = vld [vmem:[#allocation5 + $0x710] sm:$0xff]
        %v1205 = vld [vmem:[#allocation5 + $0x718] sm:$0xff]
        %v1206 = vld [vmem:[#allocation5 + $0x720] sm:$0xff]
        %v1207 = vld [vmem:[#allocation5 + $0x728] sm:$0xff]
        %v1208 = vld [vmem:[#allocation5 + $0x730] sm:$0xff]
        %v1209 = vld [vmem:[#allocation5 + $0x738] sm:$0xff]
        %v1210 = vld [vmem:[#allocation5 + $0x740] sm:$0xff]
        %v1211 = vld [vmem:[#allocation5 + $0x748] sm:$0xff]
        %v1212 = vld [vmem:[#allocation5 + $0x750] sm:$0xff]
        %v1213 = vld [vmem:[#allocation5 + $0x758] sm:$0xff]
        %v1214 = vld [vmem:[#allocation5 + $0x760] sm:$0xff]
        %v1215 = vld [vmem:[#allocation5 + $0x768] sm:$0xff]
        %v1216 = vld [vmem:[#allocation5 + $0x770] sm:$0xff]
        %v1217 = vld [vmem:[#allocation5 + $0x778] sm:$0xff]
        %v1218 = vld [vmem:[#allocation5 + $0x780] sm:$0xff]
        %v1219 = vld [vmem:[#allocation5 + $0x788] sm:$0xff]
        %v1220 = vld [vmem:[#allocation5 + $0x790] sm:$0xff]
        %v1221 = vld [vmem:[#allocation5 + $0x798] sm:$0xff]
        %v1222 = vld [vmem:[#allocation5 + $0x7a0] sm:$0xff]
        %v1223 = vld [vmem:[#allocation5 + $0x7a8] sm:$0xff]
        %v1224 = vld [vmem:[#allocation5 + $0x7b0] sm:$0xff]
        %v1225 = vld [vmem:[#allocation5 + $0x7b8] sm:$0xff]
        %v1226 = vld [vmem:[#allocation5 + $0x7c0] sm:$0xff]
        %v1227 = vld [vmem:[#allocation5 + $0x7c8] sm:$0xff]
        %v1228 = vld [vmem:[#allocation5 + $0x7d0] sm:$0xff]
        %v1229 = vld [vmem:[#allocation5 + $0x7d8] sm:$0xff]
        %v1230 = vld [vmem:[#allocation5 + $0x7e0] sm:$0xff]
        %v1231 = vld [vmem:[#allocation5 + $0x7e8] sm:$0xff]
        %v1232 = vld [vmem:[#allocation5 + $0x7f0] sm:$0xff]
        %v1233 = vld [vmem:[#allocation5 + $0x7f8] sm:$0xff]
        %v1234 = vld [vmem:[%s6] sm:$0xff]
        %v1236 = vlaneseq
        %v1237 = vshrl.u32 %v1236, 7
        %v1238 = vsub.s32 0, %v1237
        %v1239 = vrot.slane %v1234, %v1238
        %v1240 = vlaneseq
        %v1241 = vshrl.u32 %v1240, 7
        %v1242 = vsub.s32 1, %v1241
        %v1243 = vrot.slane %v1234, %v1242
        %v1244 = vlaneseq
        %v1245 = vshrl.u32 %v1244, 7
        %v1246 = vsub.s32 2, %v1245
        %v1247 = vrot.slane %v1234, %v1246
        %v1248 = vlaneseq
        %v1249 = vshrl.u32 %v1248, 7
        %v1250 = vsub.s32 3, %v1249
        %v1251 = vrot.slane %v1234, %v1250
        %v1252 = vlaneseq
        %v1253 = vshrl.u32 %v1252, 7
        %v1254 = vsub.s32 4, %v1253
        %v1255 = vrot.slane %v1234, %v1254
        %v1256 = vlaneseq
        %v1257 = vshrl.u32 %v1256, 7
        %v1258 = vsub.s32 5, %v1257
        %v1259 = vrot.slane %v1234, %v1258
        %v1260 = vlaneseq
        %v1261 = vshrl.u32 %v1260, 7
        %v1262 = vsub.s32 6, %v1261
        %v1263 = vrot.slane %v1234, %v1262
        %v1264 = vlaneseq
        %v1265 = vshrl.u32 %v1264, 7
        %v1266 = vsub.s32 7, %v1265
        %v1267 = vrot.slane %v1234, %v1266
        %v1532 = vunpack.c.l.b16 %v978
        %v1533 = vunpack.c.h.b16 %v978
        %v1534 = vunpack.c.l.b16 %v979
        %v1535 = vunpack.c.h.b16 %v979
        %v1536 = vunpack.c.l.b16 %v980
        %v1537 = vunpack.c.h.b16 %v980
        %v1538 = vunpack.c.l.b16 %v981
        %v1539 = vunpack.c.h.b16 %v981
        %v1540 = vunpack.c.l.b16 %v982
        %v1541 = vunpack.c.h.b16 %v982
        %v1542 = vunpack.c.l.b16 %v983
        %v1543 = vunpack.c.h.b16 %v983
        %v1544 = vunpack.c.l.b16 %v984
        %v1545 = vunpack.c.h.b16 %v984
        %v1546 = vunpack.c.l.b16 %v985
        %v1547 = vunpack.c.h.b16 %v985
        %v1548 = vunpack.c.l.b16 %v986
        %v1549 = vunpack.c.h.b16 %v986
        %v1550 = vunpack.c.l.b16 %v987
        %v1551 = vunpack.c.h.b16 %v987
        %v1552 = vunpack.c.l.b16 %v988
        %v1553 = vunpack.c.h.b16 %v988
        %v1554 = vunpack.c.l.b16 %v989
        %v1555 = vunpack.c.h.b16 %v989
        %v1556 = vunpack.c.l.b16 %v990
        %v1557 = vunpack.c.h.b16 %v990
        %v1558 = vunpack.c.l.b16 %v991
        %v1559 = vunpack.c.h.b16 %v991
        %v1560 = vunpack.c.l.b16 %v992
        %v1561 = vunpack.c.h.b16 %v992
        %v1562 = vunpack.c.l.b16 %v993
        %v1563 = vunpack.c.h.b16 %v993
        %v1564 = vunpack.c.l.b16 %v994
        %v1565 = vunpack.c.h.b16 %v994
        %v1566 = vunpack.c.l.b16 %v995
        %v1567 = vunpack.c.h.b16 %v995
        %v1568 = vunpack.c.l.b16 %v996
        %v1569 = vunpack.c.h.b16 %v996
        %v1570 = vunpack.c.l.b16 %v997
        %v1571 = vunpack.c.h.b16 %v997
        %v1572 = vunpack.c.l.b16 %v998
        %v1573 = vunpack.c.h.b16 %v998
        %v1574 = vunpack.c.l.b16 %v999
        %v1575 = vunpack.c.h.b16 %v999
        %v1576 = vunpack.c.l.b16 %v1000
        %v1577 = vunpack.c.h.b16 %v1000
        %v1578 = vunpack.c.l.b16 %v1001
        %v1579 = vunpack.c.h.b16 %v1001
        %v1580 = vunpack.c.l.b16 %v1002
        %v1581 = vunpack.c.h.b16 %v1002
        %v1582 = vunpack.c.l.b16 %v1003
        %v1583 = vunpack.c.h.b16 %v1003
        %v1584 = vunpack.c.l.b16 %v1004
        %v1585 = vunpack.c.h.b16 %v1004
        %v1586 = vunpack.c.l.b16 %v1005
        %v1587 = vunpack.c.h.b16 %v1005
        %v1588 = vunpack.c.l.b16 %v1006
        %v1589 = vunpack.c.h.b16 %v1006
        %v1590 = vunpack.c.l.b16 %v1007
        %v1591 = vunpack.c.h.b16 %v1007
        %v1592 = vunpack.c.l.b16 %v1008
        %v1593 = vunpack.c.h.b16 %v1008
        %v1594 = vunpack.c.l.b16 %v1009
        %v1595 = vunpack.c.h.b16 %v1009
        %v1596 = vunpack.c.l.b16 %v1010
        %v1597 = vunpack.c.h.b16 %v1010
        %v1598 = vunpack.c.l.b16 %v1011
        %v1599 = vunpack.c.h.b16 %v1011
        %v1600 = vunpack.c.l.b16 %v1012
        %v1601 = vunpack.c.h.b16 %v1012
        %v1602 = vunpack.c.l.b16 %v1013
        %v1603 = vunpack.c.h.b16 %v1013
        %v1604 = vunpack.c.l.b16 %v1014
        %v1605 = vunpack.c.h.b16 %v1014
        %v1606 = vunpack.c.l.b16 %v1015
        %v1607 = vunpack.c.h.b16 %v1015
        %v1608 = vunpack.c.l.b16 %v1016
        %v1609 = vunpack.c.h.b16 %v1016
        %v1610 = vunpack.c.l.b16 %v1017
        %v1611 = vunpack.c.h.b16 %v1017
        %v1612 = vunpack.c.l.b16 %v1018
        %v1613 = vunpack.c.h.b16 %v1018
        %v1614 = vunpack.c.l.b16 %v1019
        %v1615 = vunpack.c.h.b16 %v1019
        %v1616 = vunpack.c.l.b16 %v1020
        %v1617 = vunpack.c.h.b16 %v1020
        %v1618 = vunpack.c.l.b16 %v1021
        %v1619 = vunpack.c.h.b16 %v1021
        %v1620 = vunpack.c.l.b16 %v1022
        %v1621 = vunpack.c.h.b16 %v1022
        %v1622 = vunpack.c.l.b16 %v1023
        %v1623 = vunpack.c.h.b16 %v1023
        %v1624 = vunpack.c.l.b16 %v1024
        %v1625 = vunpack.c.h.b16 %v1024
        %v1626 = vunpack.c.l.b16 %v1025
        %v1627 = vunpack.c.h.b16 %v1025
        %v1628 = vunpack.c.l.b16 %v1026
        %v1629 = vunpack.c.h.b16 %v1026
        %v1630 = vunpack.c.l.b16 %v1027
        %v1631 = vunpack.c.h.b16 %v1027
        %v1632 = vunpack.c.l.b16 %v1028
        %v1633 = vunpack.c.h.b16 %v1028
        %v1634 = vunpack.c.l.b16 %v1029
        %v1635 = vunpack.c.h.b16 %v1029
        %v1636 = vunpack.c.l.b16 %v1030
        %v1637 = vunpack.c.h.b16 %v1030
        %v1638 = vunpack.c.l.b16 %v1031
        %v1639 = vunpack.c.h.b16 %v1031
        %v1640 = vunpack.c.l.b16 %v1032
        %v1641 = vunpack.c.h.b16 %v1032
        %v1642 = vunpack.c.l.b16 %v1033
        %v1643 = vunpack.c.h.b16 %v1033
        %v1644 = vunpack.c.l.b16 %v1034
        %v1645 = vunpack.c.h.b16 %v1034
        %v1646 = vunpack.c.l.b16 %v1035
        %v1647 = vunpack.c.h.b16 %v1035
        %v1648 = vunpack.c.l.b16 %v1036
        %v1649 = vunpack.c.h.b16 %v1036
        %v1650 = vunpack.c.l.b16 %v1037
        %v1651 = vunpack.c.h.b16 %v1037
        %v1652 = vunpack.c.l.b16 %v1038
        %v1653 = vunpack.c.h.b16 %v1038
        %v1654 = vunpack.c.l.b16 %v1039
        %v1655 = vunpack.c.h.b16 %v1039
        %v1656 = vunpack.c.l.b16 %v1040
        %v1657 = vunpack.c.h.b16 %v1040
        %v1658 = vunpack.c.l.b16 %v1041
        %v1659 = vunpack.c.h.b16 %v1041
        %v1660 = vunpack.c.l.b16 %v1042
        %v1661 = vunpack.c.h.b16 %v1042
        %v1662 = vunpack.c.l.b16 %v1043
        %v1663 = vunpack.c.h.b16 %v1043
        %v1664 = vunpack.c.l.b16 %v1044
        %v1665 = vunpack.c.h.b16 %v1044
        %v1666 = vunpack.c.l.b16 %v1045
        %v1667 = vunpack.c.h.b16 %v1045
        %v1668 = vunpack.c.l.b16 %v1046
        %v1669 = vunpack.c.h.b16 %v1046
        %v1670 = vunpack.c.l.b16 %v1047
        %v1671 = vunpack.c.h.b16 %v1047
        %v1672 = vunpack.c.l.b16 %v1048
        %v1673 = vunpack.c.h.b16 %v1048
        %v1674 = vunpack.c.l.b16 %v1049
        %v1675 = vunpack.c.h.b16 %v1049
        %v1676 = vunpack.c.l.b16 %v1050
        %v1677 = vunpack.c.h.b16 %v1050
        %v1678 = vunpack.c.l.b16 %v1051
        %v1679 = vunpack.c.h.b16 %v1051
        %v1680 = vunpack.c.l.b16 %v1052
        %v1681 = vunpack.c.h.b16 %v1052
        %v1682 = vunpack.c.l.b16 %v1053
        %v1683 = vunpack.c.h.b16 %v1053
        %v1684 = vunpack.c.l.b16 %v1054
        %v1685 = vunpack.c.h.b16 %v1054
        %v1686 = vunpack.c.l.b16 %v1055
        %v1687 = vunpack.c.h.b16 %v1055
        %v1688 = vunpack.c.l.b16 %v1056
        %v1689 = vunpack.c.h.b16 %v1056
        %v1690 = vunpack.c.l.b16 %v1057
        %v1691 = vunpack.c.h.b16 %v1057
        %v1692 = vunpack.c.l.b16 %v1058
        %v1693 = vunpack.c.h.b16 %v1058
        %v1694 = vunpack.c.l.b16 %v1059
        %v1695 = vunpack.c.h.b16 %v1059
        %v1696 = vunpack.c.l.b16 %v1060
        %v1697 = vunpack.c.h.b16 %v1060
        %v1698 = vunpack.c.l.b16 %v1061
        %v1699 = vunpack.c.h.b16 %v1061
        %v1700 = vunpack.c.l.b16 %v1062
        %v1701 = vunpack.c.h.b16 %v1062
        %v1702 = vunpack.c.l.b16 %v1063
        %v1703 = vunpack.c.h.b16 %v1063
        %v1704 = vunpack.c.l.b16 %v1064
        %v1705 = vunpack.c.h.b16 %v1064
        %v1706 = vunpack.c.l.b16 %v1065
        %v1707 = vunpack.c.h.b16 %v1065
        %v1708 = vunpack.c.l.b16 %v1066
        %v1709 = vunpack.c.h.b16 %v1066
        %v1710 = vunpack.c.l.b16 %v1067
        %v1711 = vunpack.c.h.b16 %v1067
        %v1712 = vunpack.c.l.b16 %v1068
        %v1713 = vunpack.c.h.b16 %v1068
        %v1714 = vunpack.c.l.b16 %v1069
        %v1715 = vunpack.c.h.b16 %v1069
        %v1716 = vunpack.c.l.b16 %v1070
        %v1717 = vunpack.c.h.b16 %v1070
        %v1718 = vunpack.c.l.b16 %v1071
        %v1719 = vunpack.c.h.b16 %v1071
        %v1720 = vunpack.c.l.b16 %v1072
        %v1721 = vunpack.c.h.b16 %v1072
        %v1722 = vunpack.c.l.b16 %v1073
        %v1723 = vunpack.c.h.b16 %v1073
        %v1724 = vunpack.c.l.b16 %v1074
        %v1725 = vunpack.c.h.b16 %v1074
        %v1726 = vunpack.c.l.b16 %v1075
        %v1727 = vunpack.c.h.b16 %v1075
        %v1728 = vunpack.c.l.b16 %v1076
        %v1729 = vunpack.c.h.b16 %v1076
        %v1730 = vunpack.c.l.b16 %v1077
        %v1731 = vunpack.c.h.b16 %v1077
        %v1732 = vunpack.c.l.b16 %v1078
        %v1733 = vunpack.c.h.b16 %v1078
        %v1734 = vunpack.c.l.b16 %v1079
        %v1735 = vunpack.c.h.b16 %v1079
        %v1736 = vunpack.c.l.b16 %v1080
        %v1737 = vunpack.c.h.b16 %v1080
        %v1738 = vunpack.c.l.b16 %v1081
        %v1739 = vunpack.c.h.b16 %v1081
        %v1740 = vunpack.c.l.b16 %v1082
        %v1741 = vunpack.c.h.b16 %v1082
        %v1742 = vunpack.c.l.b16 %v1083
        %v1743 = vunpack.c.h.b16 %v1083
        %v1744 = vunpack.c.l.b16 %v1084
        %v1745 = vunpack.c.h.b16 %v1084
        %v1746 = vunpack.c.l.b16 %v1085
        %v1747 = vunpack.c.h.b16 %v1085
        %v1748 = vunpack.c.l.b16 %v1086
        %v1749 = vunpack.c.h.b16 %v1086
        %v1750 = vunpack.c.l.b16 %v1087
        %v1751 = vunpack.c.h.b16 %v1087
        %v1752 = vunpack.c.l.b16 %v1088
        %v1753 = vunpack.c.h.b16 %v1088
        %v1754 = vunpack.c.l.b16 %v1089
        %v1755 = vunpack.c.h.b16 %v1089
        %v1756 = vunpack.c.l.b16 %v1090
        %v1757 = vunpack.c.h.b16 %v1090
        %v1758 = vunpack.c.l.b16 %v1091
        %v1759 = vunpack.c.h.b16 %v1091
        %v1760 = vunpack.c.l.b16 %v1092
        %v1761 = vunpack.c.h.b16 %v1092
        %v1762 = vunpack.c.l.b16 %v1093
        %v1763 = vunpack.c.h.b16 %v1093
        %v1764 = vunpack.c.l.b16 %v1094
        %v1765 = vunpack.c.h.b16 %v1094
        %v1766 = vunpack.c.l.b16 %v1095
        %v1767 = vunpack.c.h.b16 %v1095
        %v1768 = vunpack.c.l.b16 %v1096
        %v1769 = vunpack.c.h.b16 %v1096
        %v1770 = vunpack.c.l.b16 %v1097
        %v1771 = vunpack.c.h.b16 %v1097
        %v1772 = vunpack.c.l.b16 %v1098
        %v1773 = vunpack.c.h.b16 %v1098
        %v1774 = vunpack.c.l.b16 %v1099
        %v1775 = vunpack.c.h.b16 %v1099
        %v1776 = vunpack.c.l.b16 %v1100
        %v1777 = vunpack.c.h.b16 %v1100
        %v1778 = vunpack.c.l.b16 %v1101
        %v1779 = vunpack.c.h.b16 %v1101
        %v1780 = vunpack.c.l.b16 %v1102
        %v1781 = vunpack.c.h.b16 %v1102
        %v1782 = vunpack.c.l.b16 %v1103
        %v1783 = vunpack.c.h.b16 %v1103
        %v1784 = vunpack.c.l.b16 %v1104
        %v1785 = vunpack.c.h.b16 %v1104
        %v1786 = vunpack.c.l.b16 %v1105
        %v1787 = vunpack.c.h.b16 %v1105
        %v1788 = vunpack.c.l.b16 %v1106
        %v1789 = vunpack.c.h.b16 %v1106
        %v1790 = vunpack.c.l.b16 %v1107
        %v1791 = vunpack.c.h.b16 %v1107
        %v1792 = vunpack.c.l.b16 %v1108
        %v1793 = vunpack.c.h.b16 %v1108
        %v1794 = vunpack.c.l.b16 %v1109
        %v1795 = vunpack.c.h.b16 %v1109
        %v1796 = vunpack.c.l.b16 %v1110
        %v1797 = vunpack.c.h.b16 %v1110
        %v1798 = vunpack.c.l.b16 %v1111
        %v1799 = vunpack.c.h.b16 %v1111
        %v1800 = vunpack.c.l.b16 %v1112
        %v1801 = vunpack.c.h.b16 %v1112
        %v1802 = vunpack.c.l.b16 %v1113
        %v1803 = vunpack.c.h.b16 %v1113
        %v1804 = vunpack.c.l.b16 %v1114
        %v1805 = vunpack.c.h.b16 %v1114
        %v1806 = vunpack.c.l.b16 %v1115
        %v1807 = vunpack.c.h.b16 %v1115
        %v1808 = vunpack.c.l.b16 %v1116
        %v1809 = vunpack.c.h.b16 %v1116
        %v1810 = vunpack.c.l.b16 %v1117
        %v1811 = vunpack.c.h.b16 %v1117
        %v1812 = vunpack.c.l.b16 %v1118
        %v1813 = vunpack.c.h.b16 %v1118
        %v1814 = vunpack.c.l.b16 %v1119
        %v1815 = vunpack.c.h.b16 %v1119
        %v1816 = vunpack.c.l.b16 %v1120
        %v1817 = vunpack.c.h.b16 %v1120
        %v1818 = vunpack.c.l.b16 %v1121
        %v1819 = vunpack.c.h.b16 %v1121
        %v1820 = vunpack.c.l.b16 %v1122
        %v1821 = vunpack.c.h.b16 %v1122
        %v1822 = vunpack.c.l.b16 %v1123
        %v1823 = vunpack.c.h.b16 %v1123
        %v1824 = vunpack.c.l.b16 %v1124
        %v1825 = vunpack.c.h.b16 %v1124
        %v1826 = vunpack.c.l.b16 %v1125
        %v1827 = vunpack.c.h.b16 %v1125
        %v1828 = vunpack.c.l.b16 %v1126
        %v1829 = vunpack.c.h.b16 %v1126
        %v1830 = vunpack.c.l.b16 %v1127
        %v1831 = vunpack.c.h.b16 %v1127
        %v1832 = vunpack.c.l.b16 %v1128
        %v1833 = vunpack.c.h.b16 %v1128
        %v1834 = vunpack.c.l.b16 %v1129
        %v1835 = vunpack.c.h.b16 %v1129
        %v1836 = vunpack.c.l.b16 %v1130
        %v1837 = vunpack.c.h.b16 %v1130
        %v1838 = vunpack.c.l.b16 %v1131
        %v1839 = vunpack.c.h.b16 %v1131
        %v1840 = vunpack.c.l.b16 %v1132
        %v1841 = vunpack.c.h.b16 %v1132
        %v1842 = vunpack.c.l.b16 %v1133
        %v1843 = vunpack.c.h.b16 %v1133
        %v1844 = vunpack.c.l.b16 %v1134
        %v1845 = vunpack.c.h.b16 %v1134
        %v1846 = vunpack.c.l.b16 %v1135
        %v1847 = vunpack.c.h.b16 %v1135
        %v1848 = vunpack.c.l.b16 %v1136
        %v1849 = vunpack.c.h.b16 %v1136
        %v1850 = vunpack.c.l.b16 %v1137
        %v1851 = vunpack.c.h.b16 %v1137
        %v1852 = vunpack.c.l.b16 %v1138
        %v1853 = vunpack.c.h.b16 %v1138
        %v1854 = vunpack.c.l.b16 %v1139
        %v1855 = vunpack.c.h.b16 %v1139
        %v1856 = vunpack.c.l.b16 %v1140
        %v1857 = vunpack.c.h.b16 %v1140
        %v1858 = vunpack.c.l.b16 %v1141
        %v1859 = vunpack.c.h.b16 %v1141
        %v1860 = vunpack.c.l.b16 %v1142
        %v1861 = vunpack.c.h.b16 %v1142
        %v1862 = vunpack.c.l.b16 %v1143
        %v1863 = vunpack.c.h.b16 %v1143
        %v1864 = vunpack.c.l.b16 %v1144
        %v1865 = vunpack.c.h.b16 %v1144
        %v1866 = vunpack.c.l.b16 %v1145
        %v1867 = vunpack.c.h.b16 %v1145
        %v1868 = vunpack.c.l.b16 %v1146
        %v1869 = vunpack.c.h.b16 %v1146
        %v1870 = vunpack.c.l.b16 %v1147
        %v1871 = vunpack.c.h.b16 %v1147
        %v1872 = vunpack.c.l.b16 %v1148
        %v1873 = vunpack.c.h.b16 %v1148
        %v1874 = vunpack.c.l.b16 %v1149
        %v1875 = vunpack.c.h.b16 %v1149
        %v1876 = vunpack.c.l.b16 %v1150
        %v1877 = vunpack.c.h.b16 %v1150
        %v1878 = vunpack.c.l.b16 %v1151
        %v1879 = vunpack.c.h.b16 %v1151
        %v1880 = vunpack.c.l.b16 %v1152
        %v1881 = vunpack.c.h.b16 %v1152
        %v1882 = vunpack.c.l.b16 %v1153
        %v1883 = vunpack.c.h.b16 %v1153
        %v1884 = vunpack.c.l.b16 %v1154
        %v1885 = vunpack.c.h.b16 %v1154
        %v1886 = vunpack.c.l.b16 %v1155
        %v1887 = vunpack.c.h.b16 %v1155
        %v1888 = vunpack.c.l.b16 %v1156
        %v1889 = vunpack.c.h.b16 %v1156
        %v1890 = vunpack.c.l.b16 %v1157
        %v1891 = vunpack.c.h.b16 %v1157
        %v1892 = vunpack.c.l.b16 %v1158
        %v1893 = vunpack.c.h.b16 %v1158
        %v1894 = vunpack.c.l.b16 %v1159
        %v1895 = vunpack.c.h.b16 %v1159
        %v1896 = vunpack.c.l.b16 %v1160
        %v1897 = vunpack.c.h.b16 %v1160
        %v1898 = vunpack.c.l.b16 %v1161
        %v1899 = vunpack.c.h.b16 %v1161
        %v1900 = vunpack.c.l.b16 %v1162
        %v1901 = vunpack.c.h.b16 %v1162
        %v1902 = vunpack.c.l.b16 %v1163
        %v1903 = vunpack.c.h.b16 %v1163
        %v1904 = vunpack.c.l.b16 %v1164
        %v1905 = vunpack.c.h.b16 %v1164
        %v1906 = vunpack.c.l.b16 %v1165
        %v1907 = vunpack.c.h.b16 %v1165
        %v1908 = vunpack.c.l.b16 %v1166
        %v1909 = vunpack.c.h.b16 %v1166
        %v1910 = vunpack.c.l.b16 %v1167
        %v1911 = vunpack.c.h.b16 %v1167
        %v1912 = vunpack.c.l.b16 %v1168
        %v1913 = vunpack.c.h.b16 %v1168
        %v1914 = vunpack.c.l.b16 %v1169
        %v1915 = vunpack.c.h.b16 %v1169
        %v1916 = vunpack.c.l.b16 %v1170
        %v1917 = vunpack.c.h.b16 %v1170
        %v1918 = vunpack.c.l.b16 %v1171
        %v1919 = vunpack.c.h.b16 %v1171
        %v1920 = vunpack.c.l.b16 %v1172
        %v1921 = vunpack.c.h.b16 %v1172
        %v1922 = vunpack.c.l.b16 %v1173
        %v1923 = vunpack.c.h.b16 %v1173
        %v1924 = vunpack.c.l.b16 %v1174
        %v1925 = vunpack.c.h.b16 %v1174
        %v1926 = vunpack.c.l.b16 %v1175
        %v1927 = vunpack.c.h.b16 %v1175
        %v1928 = vunpack.c.l.b16 %v1176
        %v1929 = vunpack.c.h.b16 %v1176
        %v1930 = vunpack.c.l.b16 %v1177
        %v1931 = vunpack.c.h.b16 %v1177
        %v1932 = vunpack.c.l.b16 %v1178
        %v1933 = vunpack.c.h.b16 %v1178
        %v1934 = vunpack.c.l.b16 %v1179
        %v1935 = vunpack.c.h.b16 %v1179
        %v1936 = vunpack.c.l.b16 %v1180
        %v1937 = vunpack.c.h.b16 %v1180
        %v1938 = vunpack.c.l.b16 %v1181
        %v1939 = vunpack.c.h.b16 %v1181
        %v1940 = vunpack.c.l.b16 %v1182
        %v1941 = vunpack.c.h.b16 %v1182
        %v1942 = vunpack.c.l.b16 %v1183
        %v1943 = vunpack.c.h.b16 %v1183
        %v1944 = vunpack.c.l.b16 %v1184
        %v1945 = vunpack.c.h.b16 %v1184
        %v1946 = vunpack.c.l.b16 %v1185
        %v1947 = vunpack.c.h.b16 %v1185
        %v1948 = vunpack.c.l.b16 %v1186
        %v1949 = vunpack.c.h.b16 %v1186
        %v1950 = vunpack.c.l.b16 %v1187
        %v1951 = vunpack.c.h.b16 %v1187
        %v1952 = vunpack.c.l.b16 %v1188
        %v1953 = vunpack.c.h.b16 %v1188
        %v1954 = vunpack.c.l.b16 %v1189
        %v1955 = vunpack.c.h.b16 %v1189
        %v1956 = vunpack.c.l.b16 %v1190
        %v1957 = vunpack.c.h.b16 %v1190
        %v1958 = vunpack.c.l.b16 %v1191
        %v1959 = vunpack.c.h.b16 %v1191
        %v1960 = vunpack.c.l.b16 %v1192
        %v1961 = vunpack.c.h.b16 %v1192
        %v1962 = vunpack.c.l.b16 %v1193
        %v1963 = vunpack.c.h.b16 %v1193
        %v1964 = vunpack.c.l.b16 %v1194
        %v1965 = vunpack.c.h.b16 %v1194
        %v1966 = vunpack.c.l.b16 %v1195
        %v1967 = vunpack.c.h.b16 %v1195
        %v1968 = vunpack.c.l.b16 %v1196
        %v1969 = vunpack.c.h.b16 %v1196
        %v1970 = vunpack.c.l.b16 %v1197
        %v1971 = vunpack.c.h.b16 %v1197
        %v1972 = vunpack.c.l.b16 %v1198
        %v1973 = vunpack.c.h.b16 %v1198
        %v1974 = vunpack.c.l.b16 %v1199
        %v1975 = vunpack.c.h.b16 %v1199
        %v1976 = vunpack.c.l.b16 %v1200
        %v1977 = vunpack.c.h.b16 %v1200
        %v1978 = vunpack.c.l.b16 %v1201
        %v1979 = vunpack.c.h.b16 %v1201
        %v1980 = vunpack.c.l.b16 %v1202
        %v1981 = vunpack.c.h.b16 %v1202
        %v1982 = vunpack.c.l.b16 %v1203
        %v1983 = vunpack.c.h.b16 %v1203
        %v1984 = vunpack.c.l.b16 %v1204
        %v1985 = vunpack.c.h.b16 %v1204
        %v1986 = vunpack.c.l.b16 %v1205
        %v1987 = vunpack.c.h.b16 %v1205
        %v1988 = vunpack.c.l.b16 %v1206
        %v1989 = vunpack.c.h.b16 %v1206
        %v1990 = vunpack.c.l.b16 %v1207
        %v1991 = vunpack.c.h.b16 %v1207
        %v1992 = vunpack.c.l.b16 %v1208
        %v1993 = vunpack.c.h.b16 %v1208
        %v1994 = vunpack.c.l.b16 %v1209
        %v1995 = vunpack.c.h.b16 %v1209
        %v1996 = vunpack.c.l.b16 %v1210
        %v1997 = vunpack.c.h.b16 %v1210
        %v1998 = vunpack.c.l.b16 %v1211
        %v1999 = vunpack.c.h.b16 %v1211
        %v2000 = vunpack.c.l.b16 %v1212
        %v2001 = vunpack.c.h.b16 %v1212
        %v2002 = vunpack.c.l.b16 %v1213
        %v2003 = vunpack.c.h.b16 %v1213
        %v2004 = vunpack.c.l.b16 %v1214
        %v2005 = vunpack.c.h.b16 %v1214
        %v2006 = vunpack.c.l.b16 %v1215
        %v2007 = vunpack.c.h.b16 %v1215
        %v2008 = vunpack.c.l.b16 %v1216
        %v2009 = vunpack.c.h.b16 %v1216
        %v2010 = vunpack.c.l.b16 %v1217
        %v2011 = vunpack.c.h.b16 %v1217
        %v2012 = vunpack.c.l.b16 %v1218
        %v2013 = vunpack.c.h.b16 %v1218
        %v2014 = vunpack.c.l.b16 %v1219
        %v2015 = vunpack.c.h.b16 %v1219
        %v2016 = vunpack.c.l.b16 %v1220
        %v2017 = vunpack.c.h.b16 %v1220
        %v2018 = vunpack.c.l.b16 %v1221
        %v2019 = vunpack.c.h.b16 %v1221
        %v2020 = vunpack.c.l.b16 %v1222
        %v2021 = vunpack.c.h.b16 %v1222
        %v2022 = vunpack.c.l.b16 %v1223
        %v2023 = vunpack.c.h.b16 %v1223
        %v2024 = vunpack.c.l.b16 %v1224
        %v2025 = vunpack.c.h.b16 %v1224
        %v2026 = vunpack.c.l.b16 %v1225
        %v2027 = vunpack.c.h.b16 %v1225
        %v2028 = vunpack.c.l.b16 %v1226
        %v2029 = vunpack.c.h.b16 %v1226
        %v2030 = vunpack.c.l.b16 %v1227
        %v2031 = vunpack.c.h.b16 %v1227
        %v2032 = vunpack.c.l.b16 %v1228
        %v2033 = vunpack.c.h.b16 %v1228
        %v2034 = vunpack.c.l.b16 %v1229
        %v2035 = vunpack.c.h.b16 %v1229
        %v2036 = vunpack.c.l.b16 %v1230
        %v2037 = vunpack.c.h.b16 %v1230
        %v2038 = vunpack.c.l.b16 %v1231
        %v2039 = vunpack.c.h.b16 %v1231
        %v2040 = vunpack.c.l.b16 %v1232
        %v2041 = vunpack.c.h.b16 %v1232
        %v2042 = vunpack.c.l.b16 %v1233
        %v2043 = vunpack.c.h.b16 %v1233
        %v2044 = vpack.c.b16 %v1540, %v1532
        %v2045 = vpack.c.b16 %v1541, %v1533
        %v2046 = vpack.c.b16 %v1542, %v1534
        %v2047 = vpack.c.b16 %v1543, %v1535
        %v2048 = vpack.c.b16 %v1544, %v1536
        %v2049 = vpack.c.b16 %v1545, %v1537
        %v2050 = vpack.c.b16 %v1546, %v1538
        %v2051 = vpack.c.b16 %v1547, %v1539
        %v2052 = vpack.c.b16 %v1556, %v1548
        %v2053 = vpack.c.b16 %v1557, %v1549
        %v2054 = vpack.c.b16 %v1558, %v1550
        %v2055 = vpack.c.b16 %v1559, %v1551
        %v2056 = vpack.c.b16 %v1560, %v1552
        %v2057 = vpack.c.b16 %v1561, %v1553
        %v2058 = vpack.c.b16 %v1562, %v1554
        %v2059 = vpack.c.b16 %v1563, %v1555
        %v2060 = vpack.c.b16 %v1572, %v1564
        %v2061 = vpack.c.b16 %v1573, %v1565
        %v2062 = vpack.c.b16 %v1574, %v1566
        %v2063 = vpack.c.b16 %v1575, %v1567
        %v2064 = vpack.c.b16 %v1576, %v1568
        %v2065 = vpack.c.b16 %v1577, %v1569
        %v2066 = vpack.c.b16 %v1578, %v1570
        %v2067 = vpack.c.b16 %v1579, %v1571
        %v2068 = vpack.c.b16 %v1588, %v1580
        %v2069 = vpack.c.b16 %v1589, %v1581
        %v2070 = vpack.c.b16 %v1590, %v1582
        %v2071 = vpack.c.b16 %v1591, %v1583
        %v2072 = vpack.c.b16 %v1592, %v1584
        %v2073 = vpack.c.b16 %v1593, %v1585
        %v2074 = vpack.c.b16 %v1594, %v1586
        %v2075 = vpack.c.b16 %v1595, %v1587
        %v2076 = vpack.c.b16 %v1604, %v1596
        %v2077 = vpack.c.b16 %v1605, %v1597
        %v2078 = vpack.c.b16 %v1606, %v1598
        %v2079 = vpack.c.b16 %v1607, %v1599
        %v2080 = vpack.c.b16 %v1608, %v1600
        %v2081 = vpack.c.b16 %v1609, %v1601
        %v2082 = vpack.c.b16 %v1610, %v1602
        %v2083 = vpack.c.b16 %v1611, %v1603
        %v2084 = vpack.c.b16 %v1620, %v1612
        %v2085 = vpack.c.b16 %v1621, %v1613
        %v2086 = vpack.c.b16 %v1622, %v1614
        %v2087 = vpack.c.b16 %v1623, %v1615
        %v2088 = vpack.c.b16 %v1624, %v1616
        %v2089 = vpack.c.b16 %v1625, %v1617
        %v2090 = vpack.c.b16 %v1626, %v1618
        %v2091 = vpack.c.b16 %v1627, %v1619
        %v2092 = vpack.c.b16 %v1636, %v1628
        %v2093 = vpack.c.b16 %v1637, %v1629
        %v2094 = vpack.c.b16 %v1638, %v1630
        %v2095 = vpack.c.b16 %v1639, %v1631
        %v2096 = vpack.c.b16 %v1640, %v1632
        %v2097 = vpack.c.b16 %v1641, %v1633
        %v2098 = vpack.c.b16 %v1642, %v1634
        %v2099 = vpack.c.b16 %v1643, %v1635
        %v2100 = vpack.c.b16 %v1652, %v1644
        %v2101 = vpack.c.b16 %v1653, %v1645
        %v2102 = vpack.c.b16 %v1654, %v1646
        %v2103 = vpack.c.b16 %v1655, %v1647
        %v2104 = vpack.c.b16 %v1656, %v1648
        %v2105 = vpack.c.b16 %v1657, %v1649
        %v2106 = vpack.c.b16 %v1658, %v1650
        %v2107 = vpack.c.b16 %v1659, %v1651
        %v2108 = vpack.c.b16 %v1668, %v1660
        %v2109 = vpack.c.b16 %v1669, %v1661
        %v2110 = vpack.c.b16 %v1670, %v1662
        %v2111 = vpack.c.b16 %v1671, %v1663
        %v2112 = vpack.c.b16 %v1672, %v1664
        %v2113 = vpack.c.b16 %v1673, %v1665
        %v2114 = vpack.c.b16 %v1674, %v1666
        %v2115 = vpack.c.b16 %v1675, %v1667
        %v2116 = vpack.c.b16 %v1684, %v1676
        %v2117 = vpack.c.b16 %v1685, %v1677
        %v2118 = vpack.c.b16 %v1686, %v1678
        %v2119 = vpack.c.b16 %v1687, %v1679
        %v2120 = vpack.c.b16 %v1688, %v1680
        %v2121 = vpack.c.b16 %v1689, %v1681
        %v2122 = vpack.c.b16 %v1690, %v1682
        %v2123 = vpack.c.b16 %v1691, %v1683
        %v2124 = vpack.c.b16 %v1700, %v1692
        %v2125 = vpack.c.b16 %v1701, %v1693
        %v2126 = vpack.c.b16 %v1702, %v1694
        %v2127 = vpack.c.b16 %v1703, %v1695
        %v2128 = vpack.c.b16 %v1704, %v1696
        %v2129 = vpack.c.b16 %v1705, %v1697
        %v2130 = vpack.c.b16 %v1706, %v1698
        %v2131 = vpack.c.b16 %v1707, %v1699
        %v2132 = vpack.c.b16 %v1716, %v1708
        %v2133 = vpack.c.b16 %v1717, %v1709
        %v2134 = vpack.c.b16 %v1718, %v1710
        %v2135 = vpack.c.b16 %v1719, %v1711
        %v2136 = vpack.c.b16 %v1720, %v1712
        %v2137 = vpack.c.b16 %v1721, %v1713
        %v2138 = vpack.c.b16 %v1722, %v1714
        %v2139 = vpack.c.b16 %v1723, %v1715
        %v2140 = vpack.c.b16 %v1732, %v1724
        %v2141 = vpack.c.b16 %v1733, %v1725
        %v2142 = vpack.c.b16 %v1734, %v1726
        %v2143 = vpack.c.b16 %v1735, %v1727
        %v2144 = vpack.c.b16 %v1736, %v1728
        %v2145 = vpack.c.b16 %v1737, %v1729
        %v2146 = vpack.c.b16 %v1738, %v1730
        %v2147 = vpack.c.b16 %v1739, %v1731
        %v2148 = vpack.c.b16 %v1748, %v1740
        %v2149 = vpack.c.b16 %v1749, %v1741
        %v2150 = vpack.c.b16 %v1750, %v1742
        %v2151 = vpack.c.b16 %v1751, %v1743
        %v2152 = vpack.c.b16 %v1752, %v1744
        %v2153 = vpack.c.b16 %v1753, %v1745
        %v2154 = vpack.c.b16 %v1754, %v1746
        %v2155 = vpack.c.b16 %v1755, %v1747
        %v2156 = vpack.c.b16 %v1764, %v1756
        %v2157 = vpack.c.b16 %v1765, %v1757
        %v2158 = vpack.c.b16 %v1766, %v1758
        %v2159 = vpack.c.b16 %v1767, %v1759
        %v2160 = vpack.c.b16 %v1768, %v1760
        %v2161 = vpack.c.b16 %v1769, %v1761
        %v2162 = vpack.c.b16 %v1770, %v1762
        %v2163 = vpack.c.b16 %v1771, %v1763
        %v2164 = vpack.c.b16 %v1780, %v1772
        %v2165 = vpack.c.b16 %v1781, %v1773
        %v2166 = vpack.c.b16 %v1782, %v1774
        %v2167 = vpack.c.b16 %v1783, %v1775
        %v2168 = vpack.c.b16 %v1784, %v1776
        %v2169 = vpack.c.b16 %v1785, %v1777
        %v2170 = vpack.c.b16 %v1786, %v1778
        %v2171 = vpack.c.b16 %v1787, %v1779
        %v2172 = vpack.c.b16 %v1796, %v1788
        %v2173 = vpack.c.b16 %v1797, %v1789
        %v2174 = vpack.c.b16 %v1798, %v1790
        %v2175 = vpack.c.b16 %v1799, %v1791
        %v2176 = vpack.c.b16 %v1800, %v1792
        %v2177 = vpack.c.b16 %v1801, %v1793
        %v2178 = vpack.c.b16 %v1802, %v1794
        %v2179 = vpack.c.b16 %v1803, %v1795
        %v2180 = vpack.c.b16 %v1812, %v1804
        %v2181 = vpack.c.b16 %v1813, %v1805
        %v2182 = vpack.c.b16 %v1814, %v1806
        %v2183 = vpack.c.b16 %v1815, %v1807
        %v2184 = vpack.c.b16 %v1816, %v1808
        %v2185 = vpack.c.b16 %v1817, %v1809
        %v2186 = vpack.c.b16 %v1818, %v1810
        %v2187 = vpack.c.b16 %v1819, %v1811
        %v2188 = vpack.c.b16 %v1828, %v1820
        %v2189 = vpack.c.b16 %v1829, %v1821
        %v2190 = vpack.c.b16 %v1830, %v1822
        %v2191 = vpack.c.b16 %v1831, %v1823
        %v2192 = vpack.c.b16 %v1832, %v1824
        %v2193 = vpack.c.b16 %v1833, %v1825
        %v2194 = vpack.c.b16 %v1834, %v1826
        %v2195 = vpack.c.b16 %v1835, %v1827
        %v2196 = vpack.c.b16 %v1844, %v1836
        %v2197 = vpack.c.b16 %v1845, %v1837
        %v2198 = vpack.c.b16 %v1846, %v1838
        %v2199 = vpack.c.b16 %v1847, %v1839
        %v2200 = vpack.c.b16 %v1848, %v1840
        %v2201 = vpack.c.b16 %v1849, %v1841
        %v2202 = vpack.c.b16 %v1850, %v1842
        %v2203 = vpack.c.b16 %v1851, %v1843
        %v2204 = vpack.c.b16 %v1860, %v1852
        %v2205 = vpack.c.b16 %v1861, %v1853
        %v2206 = vpack.c.b16 %v1862, %v1854
        %v2207 = vpack.c.b16 %v1863, %v1855
        %v2208 = vpack.c.b16 %v1864, %v1856
        %v2209 = vpack.c.b16 %v1865, %v1857
        %v2210 = vpack.c.b16 %v1866, %v1858
        %v2211 = vpack.c.b16 %v1867, %v1859
        %v2212 = vpack.c.b16 %v1876, %v1868
        %v2213 = vpack.c.b16 %v1877, %v1869
        %v2214 = vpack.c.b16 %v1878, %v1870
        %v2215 = vpack.c.b16 %v1879, %v1871
        %v2216 = vpack.c.b16 %v1880, %v1872
        %v2217 = vpack.c.b16 %v1881, %v1873
        %v2218 = vpack.c.b16 %v1882, %v1874
        %v2219 = vpack.c.b16 %v1883, %v1875
        %v2220 = vpack.c.b16 %v1892, %v1884
        %v2221 = vpack.c.b16 %v1893, %v1885
        %v2222 = vpack.c.b16 %v1894, %v1886
        %v2223 = vpack.c.b16 %v1895, %v1887
        %v2224 = vpack.c.b16 %v1896, %v1888
        %v2225 = vpack.c.b16 %v1897, %v1889
        %v2226 = vpack.c.b16 %v1898, %v1890
        %v2227 = vpack.c.b16 %v1899, %v1891
        %v2228 = vpack.c.b16 %v1908, %v1900
        %v2229 = vpack.c.b16 %v1909, %v1901
        %v2230 = vpack.c.b16 %v1910, %v1902
        %v2231 = vpack.c.b16 %v1911, %v1903
        %v2232 = vpack.c.b16 %v1912, %v1904
        %v2233 = vpack.c.b16 %v1913, %v1905
        %v2234 = vpack.c.b16 %v1914, %v1906
        %v2235 = vpack.c.b16 %v1915, %v1907
        %v2236 = vpack.c.b16 %v1924, %v1916
        %v2237 = vpack.c.b16 %v1925, %v1917
        %v2238 = vpack.c.b16 %v1926, %v1918
        %v2239 = vpack.c.b16 %v1927, %v1919
        %v2240 = vpack.c.b16 %v1928, %v1920
        %v2241 = vpack.c.b16 %v1929, %v1921
        %v2242 = vpack.c.b16 %v1930, %v1922
        %v2243 = vpack.c.b16 %v1931, %v1923
        %v2244 = vpack.c.b16 %v1940, %v1932
        %v2245 = vpack.c.b16 %v1941, %v1933
        %v2246 = vpack.c.b16 %v1942, %v1934
        %v2247 = vpack.c.b16 %v1943, %v1935
        %v2248 = vpack.c.b16 %v1944, %v1936
        %v2249 = vpack.c.b16 %v1945, %v1937
        %v2250 = vpack.c.b16 %v1946, %v1938
        %v2251 = vpack.c.b16 %v1947, %v1939
        %v2252 = vpack.c.b16 %v1956, %v1948
        %v2253 = vpack.c.b16 %v1957, %v1949
        %v2254 = vpack.c.b16 %v1958, %v1950
        %v2255 = vpack.c.b16 %v1959, %v1951
        %v2256 = vpack.c.b16 %v1960, %v1952
        %v2257 = vpack.c.b16 %v1961, %v1953
        %v2258 = vpack.c.b16 %v1962, %v1954
        %v2259 = vpack.c.b16 %v1963, %v1955
        %v2260 = vpack.c.b16 %v1972, %v1964
        %v2261 = vpack.c.b16 %v1973, %v1965
        %v2262 = vpack.c.b16 %v1974, %v1966
        %v2263 = vpack.c.b16 %v1975, %v1967
        %v2264 = vpack.c.b16 %v1976, %v1968
        %v2265 = vpack.c.b16 %v1977, %v1969
        %v2266 = vpack.c.b16 %v1978, %v1970
        %v2267 = vpack.c.b16 %v1979, %v1971
        %v2268 = vpack.c.b16 %v1988, %v1980
        %v2269 = vpack.c.b16 %v1989, %v1981
        %v2270 = vpack.c.b16 %v1990, %v1982
        %v2271 = vpack.c.b16 %v1991, %v1983
        %v2272 = vpack.c.b16 %v1992, %v1984
        %v2273 = vpack.c.b16 %v1993, %v1985
        %v2274 = vpack.c.b16 %v1994, %v1986
        %v2275 = vpack.c.b16 %v1995, %v1987
        %v2276 = vpack.c.b16 %v2004, %v1996
        %v2277 = vpack.c.b16 %v2005, %v1997
        %v2278 = vpack.c.b16 %v2006, %v1998
        %v2279 = vpack.c.b16 %v2007, %v1999
        %v2280 = vpack.c.b16 %v2008, %v2000
        %v2281 = vpack.c.b16 %v2009, %v2001
        %v2282 = vpack.c.b16 %v2010, %v2002
        %v2283 = vpack.c.b16 %v2011, %v2003
        %v2284 = vpack.c.b16 %v2020, %v2012
        %v2285 = vpack.c.b16 %v2021, %v2013
        %v2286 = vpack.c.b16 %v2022, %v2014
        %v2287 = vpack.c.b16 %v2023, %v2015
        %v2288 = vpack.c.b16 %v2024, %v2016
        %v2289 = vpack.c.b16 %v2025, %v2017
        %v2290 = vpack.c.b16 %v2026, %v2018
        %v2291 = vpack.c.b16 %v2027, %v2019
        %v2292 = vpack.c.b16 %v2036, %v2028
        %v2293 = vpack.c.b16 %v2037, %v2029
        %v2294 = vpack.c.b16 %v2038, %v2030
        %v2295 = vpack.c.b16 %v2039, %v2031
        %v2296 = vpack.c.b16 %v2040, %v2032
        %v2297 = vpack.c.b16 %v2041, %v2033
        %v2298 = vpack.c.b16 %v2042, %v2034
        %v2299 = vpack.c.b16 %v2043, %v2035
        %2556 = vmatprep.subr.bf16.mxu0 %v2045
        %2557 = vmatpush1.bf16.msra.mxu0 %v2044
        %2558 = vmatprep.subr.bf16.mxu0 %v2053
        %2559 = vmatpush1.bf16.msra.mxu0 %v2052
        %2560 = vmatprep.subr.bf16.mxu0 %v2061
        %2561 = vmatpush1.bf16.msra.mxu0 %v2060
        %2562 = vmatprep.subr.bf16.mxu0 %v2069
        %2563 = vmatpush1.bf16.msra.mxu0 %v2068
        %2564 = vmatprep.subr.bf16.mxu0 %v2077
        %2565 = vmatpush1.bf16.msra.mxu0 %v2076
        %2566 = vmatprep.subr.bf16.mxu0 %v2085
        %2567 = vmatpush1.bf16.msra.mxu0 %v2084
        %2568 = vmatprep.subr.bf16.mxu0 %v2093
        %2569 = vmatpush1.bf16.msra.mxu0 %v2092
        %2570 = vmatprep.subr.bf16.mxu0 %v2101
        %2571 = vmatpush1.bf16.msra.mxu0 %v2100
        %2572 = vmatprep.subr.bf16.mxu0 %v2109
        %2573 = vmatpush1.bf16.msra.mxu0 %v2108
        %2574 = vmatprep.subr.bf16.mxu0 %v2117
        %2575 = vmatpush1.bf16.msra.mxu0 %v2116
        %2576 = vmatprep.subr.bf16.mxu0 %v2125
        %2577 = vmatpush1.bf16.msra.mxu0 %v2124
        %2578 = vmatprep.subr.bf16.mxu0 %v2133
        %2579 = vmatpush1.bf16.msra.mxu0 %v2132
        %2580 = vmatprep.subr.bf16.mxu0 %v2141
        %2581 = vmatpush1.bf16.msra.mxu0 %v2140
        %2582 = vmatprep.subr.bf16.mxu0 %v2149
        %2583 = vmatpush1.bf16.msra.mxu0 %v2148
        %2584 = vmatprep.subr.bf16.mxu0 %v2157
        %2585 = vmatpush1.bf16.msra.mxu0 %v2156
        %2586 = vmatprep.subr.bf16.mxu0 %v2165
        %2587 = vmatpush1.bf16.msra.mxu0 %v2164
        %2588 = vmatprep.mubr.bf16.mxu0 %v975
        %2589 = vmatmul.mubr.bf16.gmra.mrb[0].mxu0 %v974
        %v2590 = vpop.f32.mrb[0].mxu0
        %v2591 = vadd.f32 %v1239, %v2590
        %v2592 = vpop.f32.mrb[0].mxu0
        %v2593 = vadd.f32 %v1243, %v2592
        %v2594 = vpop.f32.mrb[0].mxu0
        %v2595 = vadd.f32 %v1239, %v2594
        %v2596 = vpop.f32.mrb[0].mxu0
        %v2597 = vadd.f32 %v1243, %v2596
        %2598 = vdwg.mxu0
        %2599 = vmatprep.subr.bf16.mxu0 %v2173
        %2600 = vmatpush1.bf16.msra.mxu0 %v2172
        %2601 = vmatprep.subr.bf16.mxu0 %v2181
        %2602 = vmatpush1.bf16.msra.mxu0 %v2180
        %2603 = vmatprep.subr.bf16.mxu0 %v2189
        %2604 = vmatpush1.bf16.msra.mxu0 %v2188
        %2605 = vmatprep.subr.bf16.mxu0 %v2197
        %2606 = vmatpush1.bf16.msra.mxu0 %v2196
        %2607 = vmatprep.subr.bf16.mxu0 %v2205
        %2608 = vmatpush1.bf16.msra.mxu0 %v2204
        %2609 = vmatprep.subr.bf16.mxu0 %v2213
        %2610 = vmatpush1.bf16.msra.mxu0 %v2212
        %2611 = vmatprep.subr.bf16.mxu0 %v2221
        %2612 = vmatpush1.bf16.msra.mxu0 %v2220
        %2613 = vmatprep.subr.bf16.mxu0 %v2229
        %2614 = vmatpush1.bf16.msra.mxu0 %v2228
        %2615 = vmatprep.subr.bf16.mxu0 %v2237
        %2616 = vmatpush1.bf16.msra.mxu0 %v2236
        %2617 = vmatprep.subr.bf16.mxu0 %v2245
        %2618 = vmatpush1.bf16.msra.mxu0 %v2244
        %2619 = vmatprep.subr.bf16.mxu0 %v2253
        %2620 = vmatpush1.bf16.msra.mxu0 %v2252
        %2621 = vmatprep.subr.bf16.mxu0 %v2261
        %2622 = vmatpush1.bf16.msra.mxu0 %v2260
        %2623 = vmatprep.subr.bf16.mxu0 %v2269
        %2624 = vmatpush1.bf16.msra.mxu0 %v2268
        %2625 = vmatprep.subr.bf16.mxu0 %v2277
        %2626 = vmatpush1.bf16.msra.mxu0 %v2276
        %2627 = vmatprep.subr.bf16.mxu0 %v2285
        %2628 = vmatpush1.bf16.msra.mxu0 %v2284
        %2629 = vmatprep.subr.bf16.mxu0 %v2293
        %2630 = vmatpush1.bf16.msra.mxu0 %v2292
        %2631 = vmatprep.mubr.bf16.mxu0 %v977
        %2632 = vmatmul.mubr.bf16.gmra.mrb[0].mxu0 %v976
        %v2633 = vpop.f32.mrb[0].mxu0
        %v2634 = vadd.f32 %v2591, %v2633
        %v2635 = vpop.f32.mrb[0].mxu0
        %v2636 = vadd.f32 %v2593, %v2635
        %v2637 = vpop.f32.mrb[0].mxu0
        %v2638 = vadd.f32 %v2595, %v2637
        %v2639 = vpop.f32.mrb[0].mxu0
        %v2640 = vadd.f32 %v2597, %v2639
        %2641 = vdwg.mxu0
        %2642 = vmatprep.subr.bf16.mxu0 %v2047
        %2643 = vmatpush1.bf16.msra.mxu0 %v2046
        %2644 = vmatprep.subr.bf16.mxu0 %v2055
        %2645 = vmatpush1.bf16.msra.mxu0 %v2054
        %2646 = vmatprep.subr.bf16.mxu0 %v2063
        %2647 = vmatpush1.bf16.msra.mxu0 %v2062
        %2648 = vmatprep.subr.bf16.mxu0 %v2071
        %2649 = vmatpush1.bf16.msra.mxu0 %v2070
        %2650 = vmatprep.subr.bf16.mxu0 %v2079
        %2651 = vmatpush1.bf16.msra.mxu0 %v2078
        %2652 = vmatprep.subr.bf16.mxu0 %v2087
        %2653 = vmatpush1.bf16.msra.mxu0 %v2086
        %2654 = vmatprep.subr.bf16.mxu0 %v2095
        %2655 = vmatpush1.bf16.msra.mxu0 %v2094
        %2656 = vmatprep.subr.bf16.mxu0 %v2103
        %2657 = vmatpush1.bf16.msra.mxu0 %v2102
        %2658 = vmatprep.subr.bf16.mxu0 %v2111
        %2659 = vmatpush1.bf16.msra.mxu0 %v2110
        %2660 = vmatprep.subr.bf16.mxu0 %v2119
        %2661 = vmatpush1.bf16.msra.mxu0 %v2118
        %2662 = vmatprep.subr.bf16.mxu0 %v2127
        %2663 = vmatpush1.bf16.msra.mxu0 %v2126
        %2664 = vmatprep.subr.bf16.mxu0 %v2135
        %2665 = vmatpush1.bf16.msra.mxu0 %v2134
        %2666 = vmatprep.subr.bf16.mxu0 %v2143
        %2667 = vmatpush1.bf16.msra.mxu0 %v2142
        %2668 = vmatprep.subr.bf16.mxu0 %v2151
        %2669 = vmatpush1.bf16.msra.mxu0 %v2150
        %2670 = vmatprep.subr.bf16.mxu0 %v2159
        %2671 = vmatpush1.bf16.msra.mxu0 %v2158
        %2672 = vmatprep.subr.bf16.mxu0 %v2167
        %2673 = vmatpush1.bf16.msra.mxu0 %v2166
        %2674 = vmatprep.mubr.bf16.mxu0 %v975
        %2675 = vmatmul.mubr.bf16.gmra.mrb[0].mxu0 %v974
        %v2676 = vpop.f32.mrb[0].mxu0
        %v2677 = vadd.f32 %v1247, %v2676
        %v2678 = vpop.f32.mrb[0].mxu0
        %v2679 = vadd.f32 %v1251, %v2678
        %v2680 = vpop.f32.mrb[0].mxu0
        %v2681 = vadd.f32 %v1247, %v2680
        %v2682 = vpop.f32.mrb[0].mxu0
        %v2683 = vadd.f32 %v1251, %v2682
        %2684 = vdwg.mxu0
        %2685 = vmatprep.subr.bf16.mxu0 %v2175
        %2686 = vmatpush1.bf16.msra.mxu0 %v2174
        %2687 = vmatprep.subr.bf16.mxu0 %v2183
        %2688 = vmatpush1.bf16.msra.mxu0 %v2182
        %2689 = vmatprep.subr.bf16.mxu0 %v2191
        %2690 = vmatpush1.bf16.msra.mxu0 %v2190
        %2691 = vmatprep.subr.bf16.mxu0 %v2199
        %2692 = vmatpush1.bf16.msra.mxu0 %v2198
        %2693 = vmatprep.subr.bf16.mxu0 %v2207
        %2694 = vmatpush1.bf16.msra.mxu0 %v2206
        %2695 = vmatprep.subr.bf16.mxu0 %v2215
        %2696 = vmatpush1.bf16.msra.mxu0 %v2214
        %2697 = vmatprep.subr.bf16.mxu0 %v2223
        %2698 = vmatpush1.bf16.msra.mxu0 %v2222
        %2699 = vmatprep.subr.bf16.mxu0 %v2231
        %2700 = vmatpush1.bf16.msra.mxu0 %v2230
        %2701 = vmatprep.subr.bf16.mxu0 %v2239
        %2702 = vmatpush1.bf16.msra.mxu0 %v2238
        %2703 = vmatprep.subr.bf16.mxu0 %v2247
        %2704 = vmatpush1.bf16.msra.mxu0 %v2246
        %2705 = vmatprep.subr.bf16.mxu0 %v2255
        %2706 = vmatpush1.bf16.msra.mxu0 %v2254
        %2707 = vmatprep.subr.bf16.mxu0 %v2263
        %2708 = vmatpush1.bf16.msra.mxu0 %v2262
        %2709 = vmatprep.subr.bf16.mxu0 %v2271
        %2710 = vmatpush1.bf16.msra.mxu0 %v2270
        %2711 = vmatprep.subr.bf16.mxu0 %v2279
        %2712 = vmatpush1.bf16.msra.mxu0 %v2278
        %2713 = vmatprep.subr.bf16.mxu0 %v2287
        %2714 = vmatpush1.bf16.msra.mxu0 %v2286
        %2715 = vmatprep.subr.bf16.mxu0 %v2295
        %2716 = vmatpush1.bf16.msra.mxu0 %v2294
        %2717 = vmatprep.mubr.bf16.mxu0 %v977
        %2718 = vmatmul.mubr.bf16.gmra.mrb[0].mxu0 %v976
        %v2719 = vpop.f32.mrb[0].mxu0
        %v2720 = vadd.f32 %v2677, %v2719
        %v2721 = vpop.f32.mrb[0].mxu0
        %v2722 = vadd.f32 %v2679, %v2721
        %v2723 = vpop.f32.mrb[0].mxu0
        %v2724 = vadd.f32 %v2681, %v2723
        %v2725 = vpop.f32.mrb[0].mxu0
        %v2726 = vadd.f32 %v2683, %v2725
        %2727 = vdwg.mxu0
        %2728 = vmatprep.subr.bf16.mxu0 %v2049
        %2729 = vmatpush1.bf16.msra.mxu0 %v2048
        %2730 = vmatprep.subr.bf16.mxu0 %v2057
        %2731 = vmatpush1.bf16.msra.mxu0 %v2056
        %2732 = vmatprep.subr.bf16.mxu0 %v2065
        %2733 = vmatpush1.bf16.msra.mxu0 %v2064
        %2734 = vmatprep.subr.bf16.mxu0 %v2073
        %2735 = vmatpush1.bf16.msra.mxu0 %v2072
        %2736 = vmatprep.subr.bf16.mxu0 %v2081
        %2737 = vmatpush1.bf16.msra.mxu0 %v2080
        %2738 = vmatprep.subr.bf16.mxu0 %v2089
        %2739 = vmatpush1.bf16.msra.mxu0 %v2088
        %2740 = vmatprep.subr.bf16.mxu0 %v2097
        %2741 = vmatpush1.bf16.msra.mxu0 %v2096
        %2742 = vmatprep.subr.bf16.mxu0 %v2105
        %2743 = vmatpush1.bf16.msra.mxu0 %v2104
        %2744 = vmatprep.subr.bf16.mxu0 %v2113
        %2745 = vmatpush1.bf16.msra.mxu0 %v2112
        %2746 = vmatprep.subr.bf16.mxu0 %v2121
        %2747 = vmatpush1.bf16.msra.mxu0 %v2120
        %2748 = vmatprep.subr.bf16.mxu0 %v2129
        %2749 = vmatpush1.bf16.msra.mxu0 %v2128
        %2750 = vmatprep.subr.bf16.mxu0 %v2137
        %2751 = vmatpush1.bf16.msra.mxu0 %v2136
        %2752 = vmatprep.subr.bf16.mxu0 %v2145
        %2753 = vmatpush1.bf16.msra.mxu0 %v2144
        %2754 = vmatprep.subr.bf16.mxu0 %v2153
        %2755 = vmatpush1.bf16.msra.mxu0 %v2152
        %2756 = vmatprep.subr.bf16.mxu0 %v2161
        %2757 = vmatpush1.bf16.msra.mxu0 %v2160
        %2758 = vmatprep.subr.bf16.mxu0 %v2169
        %2759 = vmatpush1.bf16.msra.mxu0 %v2168
        %2760 = vmatprep.mubr.bf16.mxu0 %v975
        %2761 = vmatmul.mubr.bf16.gmra.mrb[0].mxu0 %v974
        %v2762 = vpop.f32.mrb[0].mxu0
        %v2763 = vadd.f32 %v1255, %v2762
        %v2764 = vpop.f32.mrb[0].mxu0
        %v2765 = vadd.f32 %v1259, %v2764
        %v2766 = vpop.f32.mrb[0].mxu0
        %v2767 = vadd.f32 %v1255, %v2766
        %v2768 = vpop.f32.mrb[0].mxu0
        %v2769 = vadd.f32 %v1259, %v2768
        %2770 = vdwg.mxu0
        %2771 = vmatprep.subr.bf16.mxu0 %v2177
        %2772 = vmatpush1.bf16.msra.mxu0 %v2176
        %2773 = vmatprep.subr.bf16.mxu0 %v2185
        %2774 = vmatpush1.bf16.msra.mxu0 %v2184
        %2775 = vmatprep.subr.bf16.mxu0 %v2193
        %2776 = vmatpush1.bf16.msra.mxu0 %v2192
        %2777 = vmatprep.subr.bf16.mxu0 %v2201
        %2778 = vmatpush1.bf16.msra.mxu0 %v2200
        %2779 = vmatprep.subr.bf16.mxu0 %v2209
        %2780 = vmatpush1.bf16.msra.mxu0 %v2208
        %2781 = vmatprep.subr.bf16.mxu0 %v2217
        %2782 = vmatpush1.bf16.msra.mxu0 %v2216
        %2783 = vmatprep.subr.bf16.mxu0 %v2225
        %2784 = vmatpush1.bf16.msra.mxu0 %v2224
        %2785 = vmatprep.subr.bf16.mxu0 %v2233
        %2786 = vmatpush1.bf16.msra.mxu0 %v2232
        %2787 = vmatprep.subr.bf16.mxu0 %v2241
        %2788 = vmatpush1.bf16.msra.mxu0 %v2240
        %2789 = vmatprep.subr.bf16.mxu0 %v2249
        %2790 = vmatpush1.bf16.msra.mxu0 %v2248
        %2791 = vmatprep.subr.bf16.mxu0 %v2257
        %2792 = vmatpush1.bf16.msra.mxu0 %v2256
        %2793 = vmatprep.subr.bf16.mxu0 %v2265
        %2794 = vmatpush1.bf16.msra.mxu0 %v2264
        %2795 = vmatprep.subr.bf16.mxu0 %v2273
        %2796 = vmatpush1.bf16.msra.mxu0 %v2272
        %2797 = vmatprep.subr.bf16.mxu0 %v2281
        %2798 = vmatpush1.bf16.msra.mxu0 %v2280
        %2799 = vmatprep.subr.bf16.mxu0 %v2289
        %2800 = vmatpush1.bf16.msra.mxu0 %v2288
        %2801 = vmatprep.subr.bf16.mxu0 %v2297
        %2802 = vmatpush1.bf16.msra.mxu0 %v2296
        %2803 = vmatprep.mubr.bf16.mxu0 %v977
        %2804 = vmatmul.mubr.bf16.gmra.mrb[0].mxu0 %v976
        %v2805 = vpop.f32.mrb[0].mxu0
        %v2806 = vadd.f32 %v2763, %v2805
        %v2807 = vpop.f32.mrb[0].mxu0
        %v2808 = vadd.f32 %v2765, %v2807
        %v2809 = vpop.f32.mrb[0].mxu0
        %v2810 = vadd.f32 %v2767, %v2809
        %v2811 = vpop.f32.mrb[0].mxu0
        %v2812 = vadd.f32 %v2769, %v2811
        %2813 = vdwg.mxu0
        %2814 = vmatprep.subr.bf16.mxu0 %v2051
        %2815 = vmatpush1.bf16.msra.mxu0 %v2050
        %2816 = vmatprep.subr.bf16.mxu0 %v2059
        %2817 = vmatpush1.bf16.msra.mxu0 %v2058
        %2818 = vmatprep.subr.bf16.mxu0 %v2067
        %2819 = vmatpush1.bf16.msra.mxu0 %v2066
        %2820 = vmatprep.subr.bf16.mxu0 %v2075
        %2821 = vmatpush1.bf16.msra.mxu0 %v2074
        %2822 = vmatprep.subr.bf16.mxu0 %v2083
        %2823 = vmatpush1.bf16.msra.mxu0 %v2082
        %2824 = vmatprep.subr.bf16.mxu0 %v2091
        %2825 = vmatpush1.bf16.msra.mxu0 %v2090
        %2826 = vmatprep.subr.bf16.mxu0 %v2099
        %2827 = vmatpush1.bf16.msra.mxu0 %v2098
        %2828 = vmatprep.subr.bf16.mxu0 %v2107
        %2829 = vmatpush1.bf16.msra.mxu0 %v2106
        %2830 = vmatprep.subr.bf16.mxu0 %v2115
        %2831 = vmatpush1.bf16.msra.mxu0 %v2114
        %2832 = vmatprep.subr.bf16.mxu0 %v2123
        %2833 = vmatpush1.bf16.msra.mxu0 %v2122
        %2834 = vmatprep.subr.bf16.mxu0 %v2131
        %2835 = vmatpush1.bf16.msra.mxu0 %v2130
        %2836 = vmatprep.subr.bf16.mxu0 %v2139
        %2837 = vmatpush1.bf16.msra.mxu0 %v2138
        %2838 = vmatprep.subr.bf16.mxu0 %v2147
        %2839 = vmatpush1.bf16.msra.mxu0 %v2146
        %2840 = vmatprep.subr.bf16.mxu0 %v2155
        %2841 = vmatpush1.bf16.msra.mxu0 %v2154
        %2842 = vmatprep.subr.bf16.mxu0 %v2163
        %2843 = vmatpush1.bf16.msra.mxu0 %v2162
        %2844 = vmatprep.subr.bf16.mxu0 %v2171
        %2845 = vmatpush1.bf16.msra.mxu0 %v2170
        %2846 = vmatprep.mubr.bf16.mxu0 %v975
        %2847 = vmatmul.mubr.bf16.gmra.mrb[0].mxu0 %v974
        %v2848 = vpop.f32.mrb[0].mxu0
        %v2849 = vadd.f32 %v1263, %v2848
        %v2850 = vpop.f32.mrb[0].mxu0
        %v2851 = vadd.f32 %v1267, %v2850
        %v2852 = vpop.f32.mrb[0].mxu0
        %v2853 = vadd.f32 %v1263, %v2852
        %v2854 = vpop.f32.mrb[0].mxu0
        %v2855 = vadd.f32 %v1267, %v2854
        %2856 = vdwg.mxu0
        %2857 = vmatprep.subr.bf16.mxu0 %v2179
        %2858 = vmatpush1.bf16.msra.mxu0 %v2178
        %2859 = vmatprep.subr.bf16.mxu0 %v2187
        %2860 = vmatpush1.bf16.msra.mxu0 %v2186
        %2861 = vmatprep.subr.bf16.mxu0 %v2195
        %2862 = vmatpush1.bf16.msra.mxu0 %v2194
        %2863 = vmatprep.subr.bf16.mxu0 %v2203
        %2864 = vmatpush1.bf16.msra.mxu0 %v2202
        %2865 = vmatprep.subr.bf16.mxu0 %v2211
        %2866 = vmatpush1.bf16.msra.mxu0 %v2210
        %2867 = vmatprep.subr.bf16.mxu0 %v2219
        %2868 = vmatpush1.bf16.msra.mxu0 %v2218
        %2869 = vmatprep.subr.bf16.mxu0 %v2227
        %2870 = vmatpush1.bf16.msra.mxu0 %v2226
        %2871 = vmatprep.subr.bf16.mxu0 %v2235
        %2872 = vmatpush1.bf16.msra.mxu0 %v2234
        %2873 = vmatprep.subr.bf16.mxu0 %v2243
        %2874 = vmatpush1.bf16.msra.mxu0 %v2242
        %2875 = vmatprep.subr.bf16.mxu0 %v2251
        %2876 = vmatpush1.bf16.msra.mxu0 %v2250
        %2877 = vmatprep.subr.bf16.mxu0 %v2259
        %2878 = vmatpush1.bf16.msra.mxu0 %v2258
        %2879 = vmatprep.subr.bf16.mxu0 %v2267
        %2880 = vmatpush1.bf16.msra.mxu0 %v2266
        %2881 = vmatprep.subr.bf16.mxu0 %v2275
        %2882 = vmatpush1.bf16.msra.mxu0 %v2274
        %2883 = vmatprep.subr.bf16.mxu0 %v2283
        %2884 = vmatpush1.bf16.msra.mxu0 %v2282
        %2885 = vmatprep.subr.bf16.mxu0 %v2291
        %2886 = vmatpush1.bf16.msra.mxu0 %v2290
        %2887 = vmatprep.subr.bf16.mxu0 %v2299
        %2888 = vmatpush1.bf16.msra.mxu0 %v2298
        %2889 = vmatprep.mubr.bf16.mxu0 %v977
        %2890 = vmatmul.mubr.bf16.gmra.mrb[0].mxu0 %v976
        %v2891 = vpop.f32.mrb[0].mxu0
        %v2892 = vadd.f32 %v2849, %v2891
        %v2893 = vpop.f32.mrb[0].mxu0
        %v2894 = vadd.f32 %v2851, %v2893
        %v2895 = vpop.f32.mrb[0].mxu0
        %v2896 = vadd.f32 %v2853, %v2895
        %v2897 = vpop.f32.mrb[0].mxu0
        %v2898 = vadd.f32 %v2855, %v2897
        %2899 = vdwg.mxu0
        %v2900 = vmax.f32 %v2634, 0.0
        %v2901 = vmax.f32 %v2636, 0.0
        %v2902 = vmax.f32 %v2720, 0.0
        %v2903 = vmax.f32 %v2722, 0.0
        %v2904 = vmax.f32 %v2806, 0.0
        %v2905 = vmax.f32 %v2808, 0.0
        %v2906 = vmax.f32 %v2892, 0.0
        %v2907 = vmax.f32 %v2894, 0.0
        %v2908 = vmax.f32 %v2638, 0.0
        %v2909 = vmax.f32 %v2640, 0.0
        %v2910 = vmax.f32 %v2724, 0.0
        %v2911 = vmax.f32 %v2726, 0.0
        %v2912 = vmax.f32 %v2810, 0.0
        %v2913 = vmax.f32 %v2812, 0.0
        %v2914 = vmax.f32 %v2896, 0.0
        %v2915 = vmax.f32 %v2898, 0.0
        %v2916 = vpack.c.bf16 %v2908, %v2900
        %v2917 = vpack.c.bf16 %v2909, %v2901
        %v2918 = vpack.c.bf16 %v2910, %v2902
        %v2919 = vpack.c.bf16 %v2911, %v2903
        %v2920 = vpack.c.bf16 %v2912, %v2904
        %v2921 = vpack.c.bf16 %v2913, %v2905
        %v2922 = vpack.c.bf16 %v2914, %v2906
        %v2923 = vpack.c.bf16 %v2915, %v2907
        %v2924 = vld [vmem:[#allocation7] sm:$0xff]
        %v2925 = vld [vmem:[#allocation7 + $0x8] sm:$0xff]
        %v2926 = vld [vmem:[#allocation7 + $0x10] sm:$0xff]
        %v2927 = vld [vmem:[#allocation7 + $0x18] sm:$0xff]
        %v2928 = vld [vmem:[#allocation7 + $0x20] sm:$0xff]
        %v2929 = vld [vmem:[#allocation7 + $0x28] sm:$0xff]
        %v2930 = vld [vmem:[#allocation7 + $0x30] sm:$0xff]
        %v2931 = vld [vmem:[#allocation7 + $0x38] sm:$0xff]
        %v2932 = vld [vmem:[#allocation7 + $0x40] sm:$0xff]
        %v2933 = vld [vmem:[#allocation7 + $0x48] sm:$0xff]
        %v2934 = vld [vmem:[#allocation7 + $0x50] sm:$0xff]
        %v2935 = vld [vmem:[#allocation7 + $0x58] sm:$0xff]
        %v2936 = vld [vmem:[#allocation7 + $0x60] sm:$0xff]
        %v2937 = vld [vmem:[#allocation7 + $0x68] sm:$0xff]
        %v2938 = vld [vmem:[#allocation7 + $0x70] sm:$0xff]
        %v2939 = vld [vmem:[#allocation7 + $0x78] sm:$0xff]
        %v2940 = vld [vmem:[#allocation7 + $0x80] sm:$0xff]
        %v2941 = vld [vmem:[#allocation7 + $0x88] sm:$0xff]
        %v2942 = vld [vmem:[#allocation7 + $0x90] sm:$0xff]
        %v2943 = vld [vmem:[#allocation7 + $0x98] sm:$0xff]
        %v2944 = vld [vmem:[#allocation7 + $0xa0] sm:$0xff]
        %v2945 = vld [vmem:[#allocation7 + $0xa8] sm:$0xff]
        %v2946 = vld [vmem:[#allocation7 + $0xb0] sm:$0xff]
        %v2947 = vld [vmem:[#allocation7 + $0xb8] sm:$0xff]
        %v2948 = vld [vmem:[#allocation7 + $0xc0] sm:$0xff]
        %v2949 = vld [vmem:[#allocation7 + $0xc8] sm:$0xff]
        %v2950 = vld [vmem:[#allocation7 + $0xd0] sm:$0xff]
        %v2951 = vld [vmem:[#allocation7 + $0xd8] sm:$0xff]
        %v2952 = vld [vmem:[#allocation7 + $0xe0] sm:$0xff]
        %v2953 = vld [vmem:[#allocation7 + $0xe8] sm:$0xff]
        %v2954 = vld [vmem:[#allocation7 + $0xf0] sm:$0xff]
        %v2955 = vld [vmem:[#allocation7 + $0xf8] sm:$0xff]
        %v2956 = vld [vmem:[#allocation7 + $0x100] sm:$0xff]
        %v2957 = vld [vmem:[#allocation7 + $0x108] sm:$0xff]
        %v2958 = vld [vmem:[#allocation7 + $0x110] sm:$0xff]
        %v2959 = vld [vmem:[#allocation7 + $0x118] sm:$0xff]
        %v2960 = vld [vmem:[#allocation7 + $0x120] sm:$0xff]
        %v2961 = vld [vmem:[#allocation7 + $0x128] sm:$0xff]
        %v2962 = vld [vmem:[#allocation7 + $0x130] sm:$0xff]
        %v2963 = vld [vmem:[#allocation7 + $0x138] sm:$0xff]
        %v2964 = vld [vmem:[#allocation7 + $0x140] sm:$0xff]
        %v2965 = vld [vmem:[#allocation7 + $0x148] sm:$0xff]
        %v2966 = vld [vmem:[#allocation7 + $0x150] sm:$0xff]
        %v2967 = vld [vmem:[#allocation7 + $0x158] sm:$0xff]
        %v2968 = vld [vmem:[#allocation7 + $0x160] sm:$0xff]
        %v2969 = vld [vmem:[#allocation7 + $0x168] sm:$0xff]
        %v2970 = vld [vmem:[#allocation7 + $0x170] sm:$0xff]
        %v2971 = vld [vmem:[#allocation7 + $0x178] sm:$0xff]
        %v2972 = vld [vmem:[#allocation7 + $0x180] sm:$0xff]
        %v2973 = vld [vmem:[#allocation7 + $0x188] sm:$0xff]
        %v2974 = vld [vmem:[#allocation7 + $0x190] sm:$0xff]
        %v2975 = vld [vmem:[#allocation7 + $0x198] sm:$0xff]
        %v2976 = vld [vmem:[#allocation7 + $0x1a0] sm:$0xff]
        %v2977 = vld [vmem:[#allocation7 + $0x1a8] sm:$0xff]
        %v2978 = vld [vmem:[#allocation7 + $0x1b0] sm:$0xff]
        %v2979 = vld [vmem:[#allocation7 + $0x1b8] sm:$0xff]
        %v2980 = vld [vmem:[#allocation7 + $0x1c0] sm:$0xff]
        %v2981 = vld [vmem:[#allocation7 + $0x1c8] sm:$0xff]
        %v2982 = vld [vmem:[#allocation7 + $0x1d0] sm:$0xff]
        %v2983 = vld [vmem:[#allocation7 + $0x1d8] sm:$0xff]
        %v2984 = vld [vmem:[#allocation7 + $0x1e0] sm:$0xff]
        %v2985 = vld [vmem:[#allocation7 + $0x1e8] sm:$0xff]
        %v2986 = vld [vmem:[#allocation7 + $0x1f0] sm:$0xff]
        %v2987 = vld [vmem:[#allocation7 + $0x1f8] sm:$0xff]
        %v2988 = vld [vmem:[#allocation7 + $0x200] sm:$0xff]
        %v2989 = vld [vmem:[#allocation7 + $0x208] sm:$0xff]
        %v2990 = vld [vmem:[#allocation7 + $0x210] sm:$0xff]
        %v2991 = vld [vmem:[#allocation7 + $0x218] sm:$0xff]
        %v2992 = vld [vmem:[#allocation7 + $0x220] sm:$0xff]
        %v2993 = vld [vmem:[#allocation7 + $0x228] sm:$0xff]
        %v2994 = vld [vmem:[#allocation7 + $0x230] sm:$0xff]
        %v2995 = vld [vmem:[#allocation7 + $0x238] sm:$0xff]
        %v2996 = vld [vmem:[#allocation7 + $0x240] sm:$0xff]
        %v2997 = vld [vmem:[#allocation7 + $0x248] sm:$0xff]
        %v2998 = vld [vmem:[#allocation7 + $0x250] sm:$0xff]
        %v2999 = vld [vmem:[#allocation7 + $0x258] sm:$0xff]
        %v3000 = vld [vmem:[#allocation7 + $0x260] sm:$0xff]
        %v3001 = vld [vmem:[#allocation7 + $0x268] sm:$0xff]
        %v3002 = vld [vmem:[#allocation7 + $0x270] sm:$0xff]
        %v3003 = vld [vmem:[#allocation7 + $0x278] sm:$0xff]
        %v3004 = vld [vmem:[#allocation7 + $0x280] sm:$0xff]
        %v3005 = vld [vmem:[#allocation7 + $0x288] sm:$0xff]
        %v3006 = vld [vmem:[#allocation7 + $0x290] sm:$0xff]
        %v3007 = vld [vmem:[#allocation7 + $0x298] sm:$0xff]
        %v3008 = vld [vmem:[#allocation7 + $0x2a0] sm:$0xff]
        %v3009 = vld [vmem:[#allocation7 + $0x2a8] sm:$0xff]
        %v3010 = vld [vmem:[#allocation7 + $0x2b0] sm:$0xff]
        %v3011 = vld [vmem:[#allocation7 + $0x2b8] sm:$0xff]
        %v3012 = vld [vmem:[#allocation7 + $0x2c0] sm:$0xff]
        %v3013 = vld [vmem:[#allocation7 + $0x2c8] sm:$0xff]
        %v3014 = vld [vmem:[#allocation7 + $0x2d0] sm:$0xff]
        %v3015 = vld [vmem:[#allocation7 + $0x2d8] sm:$0xff]
        %v3016 = vld [vmem:[#allocation7 + $0x2e0] sm:$0xff]
        %v3017 = vld [vmem:[#allocation7 + $0x2e8] sm:$0xff]
        %v3018 = vld [vmem:[#allocation7 + $0x2f0] sm:$0xff]
        %v3019 = vld [vmem:[#allocation7 + $0x2f8] sm:$0xff]
        %v3020 = vld [vmem:[#allocation7 + $0x300] sm:$0xff]
        %v3021 = vld [vmem:[#allocation7 + $0x308] sm:$0xff]
        %v3022 = vld [vmem:[#allocation7 + $0x310] sm:$0xff]
        %v3023 = vld [vmem:[#allocation7 + $0x318] sm:$0xff]
        %v3024 = vld [vmem:[#allocation7 + $0x320] sm:$0xff]
        %v3025 = vld [vmem:[#allocation7 + $0x328] sm:$0xff]
        %v3026 = vld [vmem:[#allocation7 + $0x330] sm:$0xff]
        %v3027 = vld [vmem:[#allocation7 + $0x338] sm:$0xff]
        %v3028 = vld [vmem:[#allocation7 + $0x340] sm:$0xff]
        %v3029 = vld [vmem:[#allocation7 + $0x348] sm:$0xff]
        %v3030 = vld [vmem:[#allocation7 + $0x350] sm:$0xff]
        %v3031 = vld [vmem:[#allocation7 + $0x358] sm:$0xff]
        %v3032 = vld [vmem:[#allocation7 + $0x360] sm:$0xff]
        %v3033 = vld [vmem:[#allocation7 + $0x368] sm:$0xff]
        %v3034 = vld [vmem:[#allocation7 + $0x370] sm:$0xff]
        %v3035 = vld [vmem:[#allocation7 + $0x378] sm:$0xff]
        %v3036 = vld [vmem:[#allocation7 + $0x380] sm:$0xff]
        %v3037 = vld [vmem:[#allocation7 + $0x388] sm:$0xff]
        %v3038 = vld [vmem:[#allocation7 + $0x390] sm:$0xff]
        %v3039 = vld [vmem:[#allocation7 + $0x398] sm:$0xff]
        %v3040 = vld [vmem:[#allocation7 + $0x3a0] sm:$0xff]
        %v3041 = vld [vmem:[#allocation7 + $0x3a8] sm:$0xff]
        %v3042 = vld [vmem:[#allocation7 + $0x3b0] sm:$0xff]
        %v3043 = vld [vmem:[#allocation7 + $0x3b8] sm:$0xff]
        %v3044 = vld [vmem:[#allocation7 + $0x3c0] sm:$0xff]
        %v3045 = vld [vmem:[#allocation7 + $0x3c8] sm:$0xff]
        %v3046 = vld [vmem:[#allocation7 + $0x3d0] sm:$0xff]
        %v3047 = vld [vmem:[#allocation7 + $0x3d8] sm:$0xff]
        %v3048 = vld [vmem:[#allocation7 + $0x3e0] sm:$0xff]
        %v3049 = vld [vmem:[#allocation7 + $0x3e8] sm:$0xff]
        %v3050 = vld [vmem:[#allocation7 + $0x3f0] sm:$0xff]
        %v3051 = vld [vmem:[#allocation7 + $0x3f8] sm:$0xff]
        %v3052 = vld [vmem:[%s8] sm:$0x3]
        %v3054 = vlaneseq
        %v3055 = vshrl.u32 %v3054, 7
        %v3056 = vsub.s32 0, %v3055
        %v3057 = vrot.slane %v3052, %v3056
        %v3058 = vlaneseq
        %v3059 = vshrl.u32 %v3058, 7
        %v3060 = vsub.s32 1, %v3059
        %v3061 = vrot.slane %v3052, %v3060
        %v3192 = vunpack.c.l.b16 %v2924
        %v3193 = vunpack.c.h.b16 %v2924
        %v3194 = vunpack.c.l.b16 %v2925
        %v3195 = vunpack.c.h.b16 %v2925
        %v3196 = vunpack.c.l.b16 %v2926
        %v3197 = vunpack.c.h.b16 %v2926
        %v3198 = vunpack.c.l.b16 %v2927
        %v3199 = vunpack.c.h.b16 %v2927
        %v3200 = vunpack.c.l.b16 %v2928
        %v3201 = vunpack.c.h.b16 %v2928
        %v3202 = vunpack.c.l.b16 %v2929
        %v3203 = vunpack.c.h.b16 %v2929
        %v3204 = vunpack.c.l.b16 %v2930
        %v3205 = vunpack.c.h.b16 %v2930
        %v3206 = vunpack.c.l.b16 %v2931
        %v3207 = vunpack.c.h.b16 %v2931
        %v3208 = vunpack.c.l.b16 %v2932
        %v3209 = vunpack.c.h.b16 %v2932
        %v3210 = vunpack.c.l.b16 %v2933
        %v3211 = vunpack.c.h.b16 %v2933
        %v3212 = vunpack.c.l.b16 %v2934
        %v3213 = vunpack.c.h.b16 %v2934
        %v3214 = vunpack.c.l.b16 %v2935
        %v3215 = vunpack.c.h.b16 %v2935
        %v3216 = vunpack.c.l.b16 %v2936
        %v3217 = vunpack.c.h.b16 %v2936
        %v3218 = vunpack.c.l.b16 %v2937
        %v3219 = vunpack.c.h.b16 %v2937
        %v3220 = vunpack.c.l.b16 %v2938
        %v3221 = vunpack.c.h.b16 %v2938
        %v3222 = vunpack.c.l.b16 %v2939
        %v3223 = vunpack.c.h.b16 %v2939
        %v3224 = vunpack.c.l.b16 %v2940
        %v3225 = vunpack.c.h.b16 %v2940
        %v3226 = vunpack.c.l.b16 %v2941
        %v3227 = vunpack.c.h.b16 %v2941
        %v3228 = vunpack.c.l.b16 %v2942
        %v3229 = vunpack.c.h.b16 %v2942
        %v3230 = vunpack.c.l.b16 %v2943
        %v3231 = vunpack.c.h.b16 %v2943
        %v3232 = vunpack.c.l.b16 %v2944
        %v3233 = vunpack.c.h.b16 %v2944
        %v3234 = vunpack.c.l.b16 %v2945
        %v3235 = vunpack.c.h.b16 %v2945
        %v3236 = vunpack.c.l.b16 %v2946
        %v3237 = vunpack.c.h.b16 %v2946
        %v3238 = vunpack.c.l.b16 %v2947
        %v3239 = vunpack.c.h.b16 %v2947
        %v3240 = vunpack.c.l.b16 %v2948
        %v3241 = vunpack.c.h.b16 %v2948
        %v3242 = vunpack.c.l.b16 %v2949
        %v3243 = vunpack.c.h.b16 %v2949
        %v3244 = vunpack.c.l.b16 %v2950
        %v3245 = vunpack.c.h.b16 %v2950
        %v3246 = vunpack.c.l.b16 %v2951
        %v3247 = vunpack.c.h.b16 %v2951
        %v3248 = vunpack.c.l.b16 %v2952
        %v3249 = vunpack.c.h.b16 %v2952
        %v3250 = vunpack.c.l.b16 %v2953
        %v3251 = vunpack.c.h.b16 %v2953
        %v3252 = vunpack.c.l.b16 %v2954
        %v3253 = vunpack.c.h.b16 %v2954
        %v3254 = vunpack.c.l.b16 %v2955
        %v3255 = vunpack.c.h.b16 %v2955
        %v3256 = vunpack.c.l.b16 %v2956
        %v3257 = vunpack.c.h.b16 %v2956
        %v3258 = vunpack.c.l.b16 %v2957
        %v3259 = vunpack.c.h.b16 %v2957
        %v3260 = vunpack.c.l.b16 %v2958
        %v3261 = vunpack.c.h.b16 %v2958
        %v3262 = vunpack.c.l.b16 %v2959
        %v3263 = vunpack.c.h.b16 %v2959
        %v3264 = vunpack.c.l.b16 %v2960
        %v3265 = vunpack.c.h.b16 %v2960
        %v3266 = vunpack.c.l.b16 %v2961
        %v3267 = vunpack.c.h.b16 %v2961
        %v3268 = vunpack.c.l.b16 %v2962
        %v3269 = vunpack.c.h.b16 %v2962
        %v3270 = vunpack.c.l.b16 %v2963
        %v3271 = vunpack.c.h.b16 %v2963
        %v3272 = vunpack.c.l.b16 %v2964
        %v3273 = vunpack.c.h.b16 %v2964
        %v3274 = vunpack.c.l.b16 %v2965
        %v3275 = vunpack.c.h.b16 %v2965
        %v3276 = vunpack.c.l.b16 %v2966
        %v3277 = vunpack.c.h.b16 %v2966
        %v3278 = vunpack.c.l.b16 %v2967
        %v3279 = vunpack.c.h.b16 %v2967
        %v3280 = vunpack.c.l.b16 %v2968
        %v3281 = vunpack.c.h.b16 %v2968
        %v3282 = vunpack.c.l.b16 %v2969
        %v3283 = vunpack.c.h.b16 %v2969
        %v3284 = vunpack.c.l.b16 %v2970
        %v3285 = vunpack.c.h.b16 %v2970
        %v3286 = vunpack.c.l.b16 %v2971
        %v3287 = vunpack.c.h.b16 %v2971
        %v3288 = vunpack.c.l.b16 %v2972
        %v3289 = vunpack.c.h.b16 %v2972
        %v3290 = vunpack.c.l.b16 %v2973
        %v3291 = vunpack.c.h.b16 %v2973
        %v3292 = vunpack.c.l.b16 %v2974
        %v3293 = vunpack.c.h.b16 %v2974
        %v3294 = vunpack.c.l.b16 %v2975
        %v3295 = vunpack.c.h.b16 %v2975
        %v3296 = vunpack.c.l.b16 %v2976
        %v3297 = vunpack.c.h.b16 %v2976
        %v3298 = vunpack.c.l.b16 %v2977
        %v3299 = vunpack.c.h.b16 %v2977
        %v3300 = vunpack.c.l.b16 %v2978
        %v3301 = vunpack.c.h.b16 %v2978
        %v3302 = vunpack.c.l.b16 %v2979
        %v3303 = vunpack.c.h.b16 %v2979
        %v3304 = vunpack.c.l.b16 %v2980
        %v3305 = vunpack.c.h.b16 %v2980
        %v3306 = vunpack.c.l.b16 %v2981
        %v3307 = vunpack.c.h.b16 %v2981
        %v3308 = vunpack.c.l.b16 %v2982
        %v3309 = vunpack.c.h.b16 %v2982
        %v3310 = vunpack.c.l.b16 %v2983
        %v3311 = vunpack.c.h.b16 %v2983
        %v3312 = vunpack.c.l.b16 %v2984
        %v3313 = vunpack.c.h.b16 %v2984
        %v3314 = vunpack.c.l.b16 %v2985
        %v3315 = vunpack.c.h.b16 %v2985
        %v3316 = vunpack.c.l.b16 %v2986
        %v3317 = vunpack.c.h.b16 %v2986
        %v3318 = vunpack.c.l.b16 %v2987
        %v3319 = vunpack.c.h.b16 %v2987
        %v3320 = vunpack.c.l.b16 %v2988
        %v3321 = vunpack.c.h.b16 %v2988
        %v3322 = vunpack.c.l.b16 %v2989
        %v3323 = vunpack.c.h.b16 %v2989
        %v3324 = vunpack.c.l.b16 %v2990
        %v3325 = vunpack.c.h.b16 %v2990
        %v3326 = vunpack.c.l.b16 %v2991
        %v3327 = vunpack.c.h.b16 %v2991
        %v3328 = vunpack.c.l.b16 %v2992
        %v3329 = vunpack.c.h.b16 %v2992
        %v3330 = vunpack.c.l.b16 %v2993
        %v3331 = vunpack.c.h.b16 %v2993
        %v3332 = vunpack.c.l.b16 %v2994
        %v3333 = vunpack.c.h.b16 %v2994
        %v3334 = vunpack.c.l.b16 %v2995
        %v3335 = vunpack.c.h.b16 %v2995
        %v3336 = vunpack.c.l.b16 %v2996
        %v3337 = vunpack.c.h.b16 %v2996
        %v3338 = vunpack.c.l.b16 %v2997
        %v3339 = vunpack.c.h.b16 %v2997
        %v3340 = vunpack.c.l.b16 %v2998
        %v3341 = vunpack.c.h.b16 %v2998
        %v3342 = vunpack.c.l.b16 %v2999
        %v3343 = vunpack.c.h.b16 %v2999
        %v3344 = vunpack.c.l.b16 %v3000
        %v3345 = vunpack.c.h.b16 %v3000
        %v3346 = vunpack.c.l.b16 %v3001
        %v3347 = vunpack.c.h.b16 %v3001
        %v3348 = vunpack.c.l.b16 %v3002
        %v3349 = vunpack.c.h.b16 %v3002
        %v3350 = vunpack.c.l.b16 %v3003
        %v3351 = vunpack.c.h.b16 %v3003
        %v3352 = vunpack.c.l.b16 %v3004
        %v3353 = vunpack.c.h.b16 %v3004
        %v3354 = vunpack.c.l.b16 %v3005
        %v3355 = vunpack.c.h.b16 %v3005
        %v3356 = vunpack.c.l.b16 %v3006
        %v3357 = vunpack.c.h.b16 %v3006
        %v3358 = vunpack.c.l.b16 %v3007
        %v3359 = vunpack.c.h.b16 %v3007
        %v3360 = vunpack.c.l.b16 %v3008
        %v3361 = vunpack.c.h.b16 %v3008
        %v3362 = vunpack.c.l.b16 %v3009
        %v3363 = vunpack.c.h.b16 %v3009
        %v3364 = vunpack.c.l.b16 %v3010
        %v3365 = vunpack.c.h.b16 %v3010
        %v3366 = vunpack.c.l.b16 %v3011
        %v3367 = vunpack.c.h.b16 %v3011
        %v3368 = vunpack.c.l.b16 %v3012
        %v3369 = vunpack.c.h.b16 %v3012
        %v3370 = vunpack.c.l.b16 %v3013
        %v3371 = vunpack.c.h.b16 %v3013
        %v3372 = vunpack.c.l.b16 %v3014
        %v3373 = vunpack.c.h.b16 %v3014
        %v3374 = vunpack.c.l.b16 %v3015
        %v3375 = vunpack.c.h.b16 %v3015
        %v3376 = vunpack.c.l.b16 %v3016
        %v3377 = vunpack.c.h.b16 %v3016
        %v3378 = vunpack.c.l.b16 %v3017
        %v3379 = vunpack.c.h.b16 %v3017
        %v3380 = vunpack.c.l.b16 %v3018
        %v3381 = vunpack.c.h.b16 %v3018
        %v3382 = vunpack.c.l.b16 %v3019
        %v3383 = vunpack.c.h.b16 %v3019
        %v3384 = vunpack.c.l.b16 %v3020
        %v3385 = vunpack.c.h.b16 %v3020
        %v3386 = vunpack.c.l.b16 %v3021
        %v3387 = vunpack.c.h.b16 %v3021
        %v3388 = vunpack.c.l.b16 %v3022
        %v3389 = vunpack.c.h.b16 %v3022
        %v3390 = vunpack.c.l.b16 %v3023
        %v3391 = vunpack.c.h.b16 %v3023
        %v3392 = vunpack.c.l.b16 %v3024
        %v3393 = vunpack.c.h.b16 %v3024
        %v3394 = vunpack.c.l.b16 %v3025
        %v3395 = vunpack.c.h.b16 %v3025
        %v3396 = vunpack.c.l.b16 %v3026
        %v3397 = vunpack.c.h.b16 %v3026
        %v3398 = vunpack.c.l.b16 %v3027
        %v3399 = vunpack.c.h.b16 %v3027
        %v3400 = vunpack.c.l.b16 %v3028
        %v3401 = vunpack.c.h.b16 %v3028
        %v3402 = vunpack.c.l.b16 %v3029
        %v3403 = vunpack.c.h.b16 %v3029
        %v3404 = vunpack.c.l.b16 %v3030
        %v3405 = vunpack.c.h.b16 %v3030
        %v3406 = vunpack.c.l.b16 %v3031
        %v3407 = vunpack.c.h.b16 %v3031
        %v3408 = vunpack.c.l.b16 %v3032
        %v3409 = vunpack.c.h.b16 %v3032
        %v3410 = vunpack.c.l.b16 %v3033
        %v3411 = vunpack.c.h.b16 %v3033
        %v3412 = vunpack.c.l.b16 %v3034
        %v3413 = vunpack.c.h.b16 %v3034
        %v3414 = vunpack.c.l.b16 %v3035
        %v3415 = vunpack.c.h.b16 %v3035
        %v3416 = vunpack.c.l.b16 %v3036
        %v3417 = vunpack.c.h.b16 %v3036
        %v3418 = vunpack.c.l.b16 %v3037
        %v3419 = vunpack.c.h.b16 %v3037
        %v3420 = vunpack.c.l.b16 %v3038
        %v3421 = vunpack.c.h.b16 %v3038
        %v3422 = vunpack.c.l.b16 %v3039
        %v3423 = vunpack.c.h.b16 %v3039
        %v3424 = vunpack.c.l.b16 %v3040
        %v3425 = vunpack.c.h.b16 %v3040
        %v3426 = vunpack.c.l.b16 %v3041
        %v3427 = vunpack.c.h.b16 %v3041
        %v3428 = vunpack.c.l.b16 %v3042
        %v3429 = vunpack.c.h.b16 %v3042
        %v3430 = vunpack.c.l.b16 %v3043
        %v3431 = vunpack.c.h.b16 %v3043
        %v3432 = vunpack.c.l.b16 %v3044
        %v3433 = vunpack.c.h.b16 %v3044
        %v3434 = vunpack.c.l.b16 %v3045
        %v3435 = vunpack.c.h.b16 %v3045
        %v3436 = vunpack.c.l.b16 %v3046
        %v3437 = vunpack.c.h.b16 %v3046
        %v3438 = vunpack.c.l.b16 %v3047
        %v3439 = vunpack.c.h.b16 %v3047
        %v3440 = vunpack.c.l.b16 %v3048
        %v3441 = vunpack.c.h.b16 %v3048
        %v3442 = vunpack.c.l.b16 %v3049
        %v3443 = vunpack.c.h.b16 %v3049
        %v3444 = vunpack.c.l.b16 %v3050
        %v3445 = vunpack.c.h.b16 %v3050
        %v3446 = vunpack.c.l.b16 %v3051
        %v3447 = vunpack.c.h.b16 %v3051
        %v3448 = vpack.c.b16 %v3194, %v3192
        %v3449 = vpack.c.b16 %v3195, %v3193
        %v3450 = vpack.c.b16 %v3198, %v3196
        %v3451 = vpack.c.b16 %v3199, %v3197
        %v3452 = vpack.c.b16 %v3202, %v3200
        %v3453 = vpack.c.b16 %v3203, %v3201
        %v3454 = vpack.c.b16 %v3206, %v3204
        %v3455 = vpack.c.b16 %v3207, %v3205
        %v3456 = vpack.c.b16 %v3210, %v3208
        %v3457 = vpack.c.b16 %v3211, %v3209
        %v3458 = vpack.c.b16 %v3214, %v3212
        %v3459 = vpack.c.b16 %v3215, %v3213
        %v3460 = vpack.c.b16 %v3218, %v3216
        %v3461 = vpack.c.b16 %v3219, %v3217
        %v3462 = vpack.c.b16 %v3222, %v3220
        %v3463 = vpack.c.b16 %v3223, %v3221
        %v3464 = vpack.c.b16 %v3226, %v3224
        %v3465 = vpack.c.b16 %v3227, %v3225
        %v3466 = vpack.c.b16 %v3230, %v3228
        %v3467 = vpack.c.b16 %v3231, %v3229
        %v3468 = vpack.c.b16 %v3234, %v3232
        %v3469 = vpack.c.b16 %v3235, %v3233
        %v3470 = vpack.c.b16 %v3238, %v3236
        %v3471 = vpack.c.b16 %v3239, %v3237
        %v3472 = vpack.c.b16 %v3242, %v3240
        %v3473 = vpack.c.b16 %v3243, %v3241
        %v3474 = vpack.c.b16 %v3246, %v3244
        %v3475 = vpack.c.b16 %v3247, %v3245
        %v3476 = vpack.c.b16 %v3250, %v3248
        %v3477 = vpack.c.b16 %v3251, %v3249
        %v3478 = vpack.c.b16 %v3254, %v3252
        %v3479 = vpack.c.b16 %v3255, %v3253
        %v3480 = vpack.c.b16 %v3258, %v3256
        %v3481 = vpack.c.b16 %v3259, %v3257
        %v3482 = vpack.c.b16 %v3262, %v3260
        %v3483 = vpack.c.b16 %v3263, %v3261
        %v3484 = vpack.c.b16 %v3266, %v3264
        %v3485 = vpack.c.b16 %v3267, %v3265
        %v3486 = vpack.c.b16 %v3270, %v3268
        %v3487 = vpack.c.b16 %v3271, %v3269
        %v3488 = vpack.c.b16 %v3274, %v3272
        %v3489 = vpack.c.b16 %v3275, %v3273
        %v3490 = vpack.c.b16 %v3278, %v3276
        %v3491 = vpack.c.b16 %v3279, %v3277
        %v3492 = vpack.c.b16 %v3282, %v3280
        %v3493 = vpack.c.b16 %v3283, %v3281
        %v3494 = vpack.c.b16 %v3286, %v3284
        %v3495 = vpack.c.b16 %v3287, %v3285
        %v3496 = vpack.c.b16 %v3290, %v3288
        %v3497 = vpack.c.b16 %v3291, %v3289
        %v3498 = vpack.c.b16 %v3294, %v3292
        %v3499 = vpack.c.b16 %v3295, %v3293
        %v3500 = vpack.c.b16 %v3298, %v3296
        %v3501 = vpack.c.b16 %v3299, %v3297
        %v3502 = vpack.c.b16 %v3302, %v3300
        %v3503 = vpack.c.b16 %v3303, %v3301
        %v3504 = vpack.c.b16 %v3306, %v3304
        %v3505 = vpack.c.b16 %v3307, %v3305
        %v3506 = vpack.c.b16 %v3310, %v3308
        %v3507 = vpack.c.b16 %v3311, %v3309
        %v3508 = vpack.c.b16 %v3314, %v3312
        %v3509 = vpack.c.b16 %v3315, %v3313
        %v3510 = vpack.c.b16 %v3318, %v3316
        %v3511 = vpack.c.b16 %v3319, %v3317
        %v3512 = vpack.c.b16 %v3322, %v3320
        %v3513 = vpack.c.b16 %v3323, %v3321
        %v3514 = vpack.c.b16 %v3326, %v3324
        %v3515 = vpack.c.b16 %v3327, %v3325
        %v3516 = vpack.c.b16 %v3330, %v3328
        %v3517 = vpack.c.b16 %v3331, %v3329
        %v3518 = vpack.c.b16 %v3334, %v3332
        %v3519 = vpack.c.b16 %v3335, %v3333
        %v3520 = vpack.c.b16 %v3338, %v3336
        %v3521 = vpack.c.b16 %v3339, %v3337
        %v3522 = vpack.c.b16 %v3342, %v3340
        %v3523 = vpack.c.b16 %v3343, %v3341
        %v3524 = vpack.c.b16 %v3346, %v3344
        %v3525 = vpack.c.b16 %v3347, %v3345
        %v3526 = vpack.c.b16 %v3350, %v3348
        %v3527 = vpack.c.b16 %v3351, %v3349
        %v3528 = vpack.c.b16 %v3354, %v3352
        %v3529 = vpack.c.b16 %v3355, %v3353
        %v3530 = vpack.c.b16 %v3358, %v3356
        %v3531 = vpack.c.b16 %v3359, %v3357
        %v3532 = vpack.c.b16 %v3362, %v3360
        %v3533 = vpack.c.b16 %v3363, %v3361
        %v3534 = vpack.c.b16 %v3366, %v3364
        %v3535 = vpack.c.b16 %v3367, %v3365
        %v3536 = vpack.c.b16 %v3370, %v3368
        %v3537 = vpack.c.b16 %v3371, %v3369
        %v3538 = vpack.c.b16 %v3374, %v3372
        %v3539 = vpack.c.b16 %v3375, %v3373
        %v3540 = vpack.c.b16 %v3378, %v3376
        %v3541 = vpack.c.b16 %v3379, %v3377
        %v3542 = vpack.c.b16 %v3382, %v3380
        %v3543 = vpack.c.b16 %v3383, %v3381
        %v3544 = vpack.c.b16 %v3386, %v3384
        %v3545 = vpack.c.b16 %v3387, %v3385
        %v3546 = vpack.c.b16 %v3390, %v3388
        %v3547 = vpack.c.b16 %v3391, %v3389
        %v3548 = vpack.c.b16 %v3394, %v3392
        %v3549 = vpack.c.b16 %v3395, %v3393
        %v3550 = vpack.c.b16 %v3398, %v3396
        %v3551 = vpack.c.b16 %v3399, %v3397
        %v3552 = vpack.c.b16 %v3402, %v3400
        %v3553 = vpack.c.b16 %v3403, %v3401
        %v3554 = vpack.c.b16 %v3406, %v3404
        %v3555 = vpack.c.b16 %v3407, %v3405
        %v3556 = vpack.c.b16 %v3410, %v3408
        %v3557 = vpack.c.b16 %v3411, %v3409
        %v3558 = vpack.c.b16 %v3414, %v3412
        %v3559 = vpack.c.b16 %v3415, %v3413
        %v3560 = vpack.c.b16 %v3418, %v3416
        %v3561 = vpack.c.b16 %v3419, %v3417
        %v3562 = vpack.c.b16 %v3422, %v3420
        %v3563 = vpack.c.b16 %v3423, %v3421
        %v3564 = vpack.c.b16 %v3426, %v3424
        %v3565 = vpack.c.b16 %v3427, %v3425
        %v3566 = vpack.c.b16 %v3430, %v3428
        %v3567 = vpack.c.b16 %v3431, %v3429
        %v3568 = vpack.c.b16 %v3434, %v3432
        %v3569 = vpack.c.b16 %v3435, %v3433
        %v3570 = vpack.c.b16 %v3438, %v3436
        %v3571 = vpack.c.b16 %v3439, %v3437
        %v3572 = vpack.c.b16 %v3442, %v3440
        %v3573 = vpack.c.b16 %v3443, %v3441
        %v3574 = vpack.c.b16 %v3446, %v3444
        %v3575 = vpack.c.b16 %v3447, %v3445
        %3704 = vmatprep.subr.bf16.mxu0 %v3449
        %3705 = vmatpush1.bf16.msra.mxu0 %v3448
        %3706 = vmatprep.subr.bf16.mxu0 %v3451
        %3707 = vmatpush1.bf16.msra.mxu0 %v3450
        %3708 = vmatprep.subr.bf16.mxu0 %v3453
        %3709 = vmatpush1.bf16.msra.mxu0 %v3452
        %3710 = vmatprep.subr.bf16.mxu0 %v3455
        %3711 = vmatpush1.bf16.msra.mxu0 %v3454
        %3712 = vmatprep.subr.bf16.mxu0 %v3457
        %3713 = vmatpush1.bf16.msra.mxu0 %v3456
        %3714 = vmatprep.subr.bf16.mxu0 %v3459
        %3715 = vmatpush1.bf16.msra.mxu0 %v3458
        %3716 = vmatprep.subr.bf16.mxu0 %v3461
        %3717 = vmatpush1.bf16.msra.mxu0 %v3460
        %3718 = vmatprep.subr.bf16.mxu0 %v3463
        %3719 = vmatpush1.bf16.msra.mxu0 %v3462
        %3720 = vmatprep.subr.bf16.mxu0 %v3465
        %3721 = vmatpush1.bf16.msra.mxu0 %v3464
        %3722 = vmatprep.subr.bf16.mxu0 %v3467
        %3723 = vmatpush1.bf16.msra.mxu0 %v3466
        %3724 = vmatprep.subr.bf16.mxu0 %v3469
        %3725 = vmatpush1.bf16.msra.mxu0 %v3468
        %3726 = vmatprep.subr.bf16.mxu0 %v3471
        %3727 = vmatpush1.bf16.msra.mxu0 %v3470
        %3728 = vmatprep.subr.bf16.mxu0 %v3473
        %3729 = vmatpush1.bf16.msra.mxu0 %v3472
        %3730 = vmatprep.subr.bf16.mxu0 %v3475
        %3731 = vmatpush1.bf16.msra.mxu0 %v3474
        %3732 = vmatprep.subr.bf16.mxu0 %v3477
        %3733 = vmatpush1.bf16.msra.mxu0 %v3476
        %3734 = vmatprep.subr.bf16.mxu0 %v3479
        %3735 = vmatpush1.bf16.msra.mxu0 %v3478
        %3736 = vmatprep.mubr.bf16.mxu0 %v2917
        %3737 = vmatmul.mubr.bf16.gmra.mrb[0].mxu0 %v2916
        %v3738 = vpop.f32.mrb[0].mxu0
        %v3739 = vadd.f32 %v3057, %v3738
        %v3740 = vpop.f32.mrb[0].mxu0
        %v3741 = vadd.f32 %v3061, %v3740
        %v3742 = vpop.f32.mrb[0].mxu0
        %v3743 = vadd.f32 %v3057, %v3742
        %v3744 = vpop.f32.mrb[0].mxu0
        %v3745 = vadd.f32 %v3061, %v3744
        %3746 = vdwg.mxu0
        %3747 = vmatprep.subr.bf16.mxu0 %v3481
        %3748 = vmatpush1.bf16.msra.mxu0 %v3480
        %3749 = vmatprep.subr.bf16.mxu0 %v3483
        %3750 = vmatpush1.bf16.msra.mxu0 %v3482
        %3751 = vmatprep.subr.bf16.mxu0 %v3485
        %3752 = vmatpush1.bf16.msra.mxu0 %v3484
        %3753 = vmatprep.subr.bf16.mxu0 %v3487
        %3754 = vmatpush1.bf16.msra.mxu0 %v3486
        %3755 = vmatprep.subr.bf16.mxu0 %v3489
        %3756 = vmatpush1.bf16.msra.mxu0 %v3488
        %3757 = vmatprep.subr.bf16.mxu0 %v3491
        %3758 = vmatpush1.bf16.msra.mxu0 %v3490
        %3759 = vmatprep.subr.bf16.mxu0 %v3493
        %3760 = vmatpush1.bf16.msra.mxu0 %v3492
        %3761 = vmatprep.subr.bf16.mxu0 %v3495
        %3762 = vmatpush1.bf16.msra.mxu0 %v3494
        %3763 = vmatprep.subr.bf16.mxu0 %v3497
        %3764 = vmatpush1.bf16.msra.mxu0 %v3496
        %3765 = vmatprep.subr.bf16.mxu0 %v3499
        %3766 = vmatpush1.bf16.msra.mxu0 %v3498
        %3767 = vmatprep.subr.bf16.mxu0 %v3501
        %3768 = vmatpush1.bf16.msra.mxu0 %v3500
        %3769 = vmatprep.subr.bf16.mxu0 %v3503
        %3770 = vmatpush1.bf16.msra.mxu0 %v3502
        %3771 = vmatprep.subr.bf16.mxu0 %v3505
        %3772 = vmatpush1.bf16.msra.mxu0 %v3504
        %3773 = vmatprep.subr.bf16.mxu0 %v3507
        %3774 = vmatpush1.bf16.msra.mxu0 %v3506
        %3775 = vmatprep.subr.bf16.mxu0 %v3509
        %3776 = vmatpush1.bf16.msra.mxu0 %v3508
        %3777 = vmatprep.subr.bf16.mxu0 %v3511
        %3778 = vmatpush1.bf16.msra.mxu0 %v3510
        %3779 = vmatprep.mubr.bf16.mxu0 %v2919
        %3780 = vmatmul.mubr.bf16.gmra.mrb[0].mxu0 %v2918
        %v3781 = vpop.f32.mrb[0].mxu0
        %v3782 = vadd.f32 %v3739, %v3781
        %v3783 = vpop.f32.mrb[0].mxu0
        %v3784 = vadd.f32 %v3741, %v3783
        %v3785 = vpop.f32.mrb[0].mxu0
        %v3786 = vadd.f32 %v3743, %v3785
        %v3787 = vpop.f32.mrb[0].mxu0
        %v3788 = vadd.f32 %v3745, %v3787
        %3789 = vdwg.mxu0
        %3790 = vmatprep.subr.bf16.mxu0 %v3513
        %3791 = vmatpush1.bf16.msra.mxu0 %v3512
        %3792 = vmatprep.subr.bf16.mxu0 %v3515
        %3793 = vmatpush1.bf16.msra.mxu0 %v3514
        %3794 = vmatprep.subr.bf16.mxu0 %v3517
        %3795 = vmatpush1.bf16.msra.mxu0 %v3516
        %3796 = vmatprep.subr.bf16.mxu0 %v3519
        %3797 = vmatpush1.bf16.msra.mxu0 %v3518
        %3798 = vmatprep.subr.bf16.mxu0 %v3521
        %3799 = vmatpush1.bf16.msra.mxu0 %v3520
        %3800 = vmatprep.subr.bf16.mxu0 %v3523
        %3801 = vmatpush1.bf16.msra.mxu0 %v3522
        %3802 = vmatprep.subr.bf16.mxu0 %v3525
        %3803 = vmatpush1.bf16.msra.mxu0 %v3524
        %3804 = vmatprep.subr.bf16.mxu0 %v3527
        %3805 = vmatpush1.bf16.msra.mxu0 %v3526
        %3806 = vmatprep.subr.bf16.mxu0 %v3529
        %3807 = vmatpush1.bf16.msra.mxu0 %v3528
        %3808 = vmatprep.subr.bf16.mxu0 %v3531
        %3809 = vmatpush1.bf16.msra.mxu0 %v3530
        %3810 = vmatprep.subr.bf16.mxu0 %v3533
        %3811 = vmatpush1.bf16.msra.mxu0 %v3532
        %3812 = vmatprep.subr.bf16.mxu0 %v3535
        %3813 = vmatpush1.bf16.msra.mxu0 %v3534
        %3814 = vmatprep.subr.bf16.mxu0 %v3537
        %3815 = vmatpush1.bf16.msra.mxu0 %v3536
        %3816 = vmatprep.subr.bf16.mxu0 %v3539
        %3817 = vmatpush1.bf16.msra.mxu0 %v3538
        %3818 = vmatprep.subr.bf16.mxu0 %v3541
        %3819 = vmatpush1.bf16.msra.mxu0 %v3540
        %3820 = vmatprep.subr.bf16.mxu0 %v3543
        %3821 = vmatpush1.bf16.msra.mxu0 %v3542
        %3822 = vmatprep.mubr.bf16.mxu0 %v2921
        %3823 = vmatmul.mubr.bf16.gmra.mrb[0].mxu0 %v2920
        %v3824 = vpop.f32.mrb[0].mxu0
        %v3825 = vadd.f32 %v3782, %v3824
        %v3826 = vpop.f32.mrb[0].mxu0
        %v3827 = vadd.f32 %v3784, %v3826
        %v3828 = vpop.f32.mrb[0].mxu0
        %v3829 = vadd.f32 %v3786, %v3828
        %v3830 = vpop.f32.mrb[0].mxu0
        %v3831 = vadd.f32 %v3788, %v3830
        %3832 = vdwg.mxu0
        %3833 = vmatprep.subr.bf16.mxu0 %v3545
        %3834 = vmatpush1.bf16.msra.mxu0 %v3544
        %3835 = vmatprep.subr.bf16.mxu0 %v3547
        %3836 = vmatpush1.bf16.msra.mxu0 %v3546
        %3837 = vmatprep.subr.bf16.mxu0 %v3549
        %3838 = vmatpush1.bf16.msra.mxu0 %v3548
        %3839 = vmatprep.subr.bf16.mxu0 %v3551
        %3840 = vmatpush1.bf16.msra.mxu0 %v3550
        %3841 = vmatprep.subr.bf16.mxu0 %v3553
        %3842 = vmatpush1.bf16.msra.mxu0 %v3552
        %3843 = vmatprep.subr.bf16.mxu0 %v3555
        %3844 = vmatpush1.bf16.msra.mxu0 %v3554
        %3845 = vmatprep.subr.bf16.mxu0 %v3557
        %3846 = vmatpush1.bf16.msra.mxu0 %v3556
        %3847 = vmatprep.subr.bf16.mxu0 %v3559
        %3848 = vmatpush1.bf16.msra.mxu0 %v3558
        %3849 = vmatprep.subr.bf16.mxu0 %v3561
        %3850 = vmatpush1.bf16.msra.mxu0 %v3560
        %3851 = vmatprep.subr.bf16.mxu0 %v3563
        %3852 = vmatpush1.bf16.msra.mxu0 %v3562
        %3853 = vmatprep.subr.bf16.mxu0 %v3565
        %3854 = vmatpush1.bf16.msra.mxu0 %v3564
        %3855 = vmatprep.subr.bf16.mxu0 %v3567
        %3856 = vmatpush1.bf16.msra.mxu0 %v3566
        %3857 = vmatprep.subr.bf16.mxu0 %v3569
        %3858 = vmatpush1.bf16.msra.mxu0 %v3568
        %3859 = vmatprep.subr.bf16.mxu0 %v3571
        %3860 = vmatpush1.bf16.msra.mxu0 %v3570
        %3861 = vmatprep.subr.bf16.mxu0 %v3573
        %3862 = vmatpush1.bf16.msra.mxu0 %v3572
        %3863 = vmatprep.subr.bf16.mxu0 %v3575
        %3864 = vmatpush1.bf16.msra.mxu0 %v3574
        %3865 = vmatprep.mubr.bf16.mxu0 %v2923
        %3866 = vmatmul.mubr.bf16.gmra.mrb[0].mxu0 %v2922
        %v3867 = vpop.f32.mrb[0].mxu0
        %v3868 = vadd.f32 %v3825, %v3867
        %v3869 = vpop.f32.mrb[0].mxu0
        %v3870 = vadd.f32 %v3827, %v3869
        %v3871 = vpop.f32.mrb[0].mxu0
        %v3872 = vadd.f32 %v3829, %v3871
        %v3873 = vpop.f32.mrb[0].mxu0
        %v3874 = vadd.f32 %v3831, %v3873
        %3875 = vdwg.mxu0
        %v3876 = vxor.u32 %v3868, 2147483648
        %v3877 = vxor.u32 %v3870, 2147483648
        %v3878 = vxor.u32 %v3872, 2147483648
        %v3879 = vxor.u32 %v3874, 2147483648
        %v3880 = vmul.f32 %v3876, 1.442695
        %v3881 = vpow.pop %v3880
        %v3882 = vmul.f32 %v3877, 1.442695
        %v3883 = vpow.pop %v3882
        %v3884 = vmul.f32 %v3878, 1.442695
        %v3885 = vpow.pop %v3884
        %v3886 = vmul.f32 %v3879, 1.442695
        %v3887 = vpow.pop %v3886
        %v3888 = vadd.f32 %v3881, 1.0
        %v3889 = vadd.f32 %v3883, 1.0
        %v3890 = vadd.f32 %v3885, 1.0
        %v3891 = vadd.f32 %v3887, 1.0
        %v3892 = vrcp.pop %v3888
        %v3893 = vmul.f32 1.0, %v3892
        %v3894 = vrcp.pop %v3889
        %v3895 = vmul.f32 1.0, %v3894
        %v3896 = vrcp.pop %v3890
        %v3897 = vmul.f32 1.0, %v3896
        %v3898 = vrcp.pop %v3891
        %v3899 = vmul.f32 1.0, %v3898
        %3900 = vst [vmem:[%s372] sm:$0xff] %v3893
        %3901 = vst [vmem:[%s372 + $0x8] sm:$0xff] %v3895
        %3902 = vst [vmem:[%s372 + $0x10] sm:$0xff] %v3897
        %3903 = vst [vmem:[%s372 + $0x18] sm:$0xff] %v3899
        %s3904 = sand.u32 %s227, 1
        %s3905 = scalar_lea.sflag [#allocation4], %s3904
        %s3906 = sand.u32 %s227, 1
        %s3907 = smul.addr %s3906, 32
        %s3908 = scalar_lea.vmem [#allocation8], %s3907
        // Predicated region
        $region69: #{tpu_custom_call.1} parent=55 // pred_check
          %p3909 = pneg %p237
        $region70: #{tpu_custom_call.1} parent=55 // pred_check_branch
          %3911 = sbr.rel (%p3909) target = $region72
        $region71: #{tpu_custom_call.1} parent=55 // pred_region
          %s3912 = smul.u32 2, %s25
          %s3914 = ssub.s32 512, 512
          %3915 = vsyncadd %s3905, %s3914
          %s3916 = smul.addr %s3912, 2
          %s3917 = smul.addr %s3916, 128
          %s3918 = scalar_lea.hbm %s9, %s3917
          %s3919 = sshll.u32 %s3908, 4
          %s3920 = int_to_ptr.vmem [resolvable:$true] %s3919
          %3925 = dma.vmem_to_hbm [thread:$0]  %s3920, 512, %s3918, %s3905, 256, 256, 16
        $region72: #{tpu_custom_call.1} parent=55 // pred_fallthru
          _
      $region56: #{tpu_custom_call.1} parent=5 // pred_fallthru
        _
      %p3926 = scmp.le.s32.totalorder 2, %s20
      // Predicated region
      $region73: #{tpu_custom_call.1} parent=5 // pred_check
        %p3927 = pneg %p3926
      $region74: #{tpu_custom_call.1} parent=5 // pred_check_branch
        %3929 = sbr.rel (%p3927) target = $region76
      $region75: #{tpu_custom_call.1} parent=5 // pred_region
        %s3930 = ssub.s32 %s20, 2
        // Predicated region
        $region77: #{tpu_custom_call.1} parent=75 // pred_check
          %p3931 = pneg %p243
        $region78: #{tpu_custom_call.1} parent=75 // pred_check_branch
          %3933 = sbr.rel (%p3931) target = $region80
        $region79: #{tpu_custom_call.1} parent=75 // pred_region
          %s3934 = sand.u32 %s228, 1
          %s3935 = scalar_lea.sflag [#allocation4], %s3934
          %s3936 = sand.u32 %s228, 1
          %s3937 = smul.addr %s3936, 32
          %s3938 = scalar_lea.vmem [#allocation8], %s3937
          %3939 = dma.done %s3935, 512
        $region80: #{tpu_custom_call.1} parent=75 // pred_fallthru
          _
      $region76: #{tpu_custom_call.1} parent=5 // pred_fallthru
        _
    $region6: #{tpu_custom_call.1} parent=1 // loop_footer
      %s24 = sadd.s32 1, %s20
    $region7: #{tpu_custom_call.1} parent=1 // loop_footer_branch
      %19 = sbr.rel target = $region3
    $region8: #{tpu_custom_call.1} parent=1 // loop_exit
      _
    %3940 = vsyncpa [#allocation3], 1
    %s3941 = scalar_lea.sflag [#allocation3], 1
    %3942 = vsyncpa %s3941, 1
    %3943 = vsyncpa [#allocation6], 1
    %3944 = vsyncpa [#allocation4], 1
    %s3945 = scalar_lea.sflag [#allocation4], 1
    %3946 = vsyncpa %s3945, 1

</llo_original>
